<compile_context>
chip_gen: v7x
topology: tpu7x:2x2x1
jax: 0.10.0
libtpu: 0.0.40
codegen_flags: <defaults>
</compile_context>

<pallas_src>
import math
from functools import partial

import jax
import jax.numpy as jnp
from jax.experimental import pallas as pl
from jax.experimental.pallas import tpu as pltpu

# ---- MODEL_CONFIG['AlphaPortfolio'] (synthetic, deterministic) ----
DIM_EMBEDDING = 32
DIM_FEEDFORWARD = 64
NUM_HEADS = 2
NUM_LAYERS = 2
DROPOUT = 0.0          # eval mode -> dropout is identity anyway
LN_EPS = 1e-5


# ---------------- in-kernel helpers (pure jnp, traced inside the kernel) ----------------
def _softmax_last(x):
    m = jnp.max(x, axis=-1, keepdims=True)
    e = jnp.exp(x - m)
    return e / jnp.sum(e, axis=-1, keepdims=True)


def _layer_norm(x, gamma, beta):
    mu = jnp.mean(x, axis=-1, keepdims=True)
    xc = x - mu
    var = jnp.mean(xc * xc, axis=-1, keepdims=True)
    return xc * jax.lax.rsqrt(var + LN_EPS) * gamma + beta


# ---------------- fused forward kernel: one grid step = one batch element ----------------
def alpha_portfolio_kernel(
    x_ref, tok_w_ref, tok_b_ref, pos_ref,
    wqkv_ref, bqkv_ref, wo_ref, bo_ref, g1_ref, be1_ref,
    w1_ref, b1_ref, w2_ref, b2_ref, g2_ref, be2_ref,
    c_wqkv_ref, c_bqkv_ref, c_ww_ref, c_bw_ref,
    o_ref, *, num_heads, num_layers, num_assets, window_size):
    E = tok_w_ref.shape[1]
    H = num_heads
    dh = E // H
    n = window_size
    M = num_assets
    Mn = M * n

    # ---- SREM: token embedding + positional embedding (batched over all M sequences) ----
    x = x_ref[0]                                                   # (M*n, F)
    h = jnp.dot(x, tok_w_ref[...], preferred_element_type=jnp.float32) + tok_b_ref[...]
    h = (h.reshape(M, n, E) + pos_ref[...]).reshape(Mn, E)         # add (n, E) pos emb

    inv_sqrt_dh = 1.0 / math.sqrt(float(dh))

    # ---- SREM: TransformerEncoder layers (post-norm, ReLU FFN; dropout = identity) ----
    for l in range(num_layers):                                    # static unroll over layers
        wqkv = wqkv_ref[l]                                         # (E, 3E)  fused Q|K|V
        bqkv = bqkv_ref[l]                                         # (1, 3E)
        wo = wo_ref[l]                                             # (E, E)
        bo = bo_ref[l]                                             # (1, E)

        qkv = jnp.dot(h, wqkv, preferred_element_type=jnp.float32) + bqkv   # (Mn, 3E)
        qkv3 = qkv.reshape(M, n, 3 * E)

        # Per-head attention, batched over the M sequences in this block.
        # W_o is applied per head-slice, so heads never need a lane-concat.
        attn = None
        for hh in range(H):                                        # static unroll over heads
            qh = qkv3[:, :, hh * dh:(hh + 1) * dh]
            kh = qkv3[:, :, E + hh * dh:E + (hh + 1) * dh]
            vh = qkv3[:, :, 2 * E + hh * dh:2 * E + (hh + 1) * dh]
            s = jnp.einsum('mid,mjd->mij', qh, kh,
                           preferred_element_type=jnp.float32) * inv_sqrt_dh
            p = _softmax_last(s)
            oh = jnp.einsum('mij,mjd->mid', p, vh,
                            preferred_element_type=jnp.float32)    # (M, n, dh)
            contrib = jnp.dot(oh.reshape(Mn, dh), wo[hh * dh:(hh + 1) * dh, :],
                              preferred_element_type=jnp.float32)  # (Mn, E)
            attn = contrib if attn is None else attn + contrib
        attn = attn + bo

        # residual + norm1
        h = _layer_norm(h + attn, g1_ref[l], be1_ref[l])
        # feedforward: relu(x W1 + b1) W2 + b2, residual + norm2
        ff = jnp.maximum(
            jnp.dot(h, w1_ref[l], preferred_element_type=jnp.float32) + b1_ref[l], 0.0)
        ff = jnp.dot(ff, w2_ref[l], preferred_element_type=jnp.float32) + b2_ref[l]
        h = _layer_norm(h + ff, g2_ref[l], be2_ref[l])

    # ---- SREM: mean over window dimension -> per-asset representation ----
    rep = jnp.mean(h.reshape(M, n, E), axis=1)                     # (M, E)

    # ---- CAAN: cross-asset attention + winner score ----
    qkv_c = jnp.dot(rep, c_wqkv_ref[...], preferred_element_type=jnp.float32) + c_bqkv_ref[...]
    qc = qkv_c[:, :E]
    kc = qkv_c[:, E:2 * E]
    vc = qkv_c[:, 2 * E:]
    beta = jnp.einsum('me,ne->mn', qc, kc,
                      preferred_element_type=jnp.float32) / math.sqrt(float(E))
    beta = _softmax_last(beta)
    agg = jnp.dot(beta, vc, preferred_element_type=jnp.float32)    # (M, E)
    scores = jnp.sum(agg * c_ww_ref[...], axis=-1, keepdims=True) + c_bw_ref[...]  # (M, 1)
    o_ref[0] = scores


# ---------------- parameters (synthetic, deterministic) ----------------
def init_params(key, num_features_original, window_size):
    keys = iter(jax.random.split(key, 64))
    E, FF, L = DIM_EMBEDDING, DIM_FEEDFORWARD, NUM_LAYERS

    def nrm(shape, scale=0.05):
        return scale * jax.random.normal(next(keys), shape, dtype=jnp.float32)

    return {
        'tok_w': nrm((num_features_original, E)),
        'tok_b': nrm((1, E)),
        'pos': nrm((window_size, E)),
        # per-layer weights stacked along a leading layer axis (statically indexed in-kernel)
        'wqkv': nrm((L, E, 3 * E)),          # fused Wq|Wk|Wv
        'bqkv': nrm((L, 1, 3 * E)),
        'wo': nrm((L, E, E)),
        'bo': nrm((L, 1, E)),
        'ln1_g': jnp.ones((L, 1, E), jnp.float32),
        'ln1_b': jnp.zeros((L, 1, E), jnp.float32),
        'w1': nrm((L, E, FF)),
        'b1': nrm((L, 1, FF)),
        'w2': nrm((L, FF, E)),
        'b2': nrm((L, 1, E)),
        'ln2_g': jnp.ones((L, 1, E), jnp.float32),
        'ln2_b': jnp.zeros((L, 1, E), jnp.float32),
        # CAAN (fused q|k|v; winner head stored row-major (1, E))
        'caan_wqkv': nrm((E, 3 * E)),
        'caan_bqkv': nrm((1, 3 * E)),
        'caan_ww': nrm((1, E)),
        'caan_bw': nrm((1, 1)),
    }


# ---------------- full forward: single fused pallas_call ----------------
def alpha_portfolio_forward(x, params, *, window_size, num_features_original):
    B, M, Faug = x.shape
    assert Faug == window_size * num_features_original
    E, FF, L, H = DIM_EMBEDDING, DIM_FEEDFORWARD, NUM_LAYERS, NUM_HEADS
    n, F = window_size, num_features_original
    Mn = M * n

    # (b, m, w*f) -> (b, m*w, f): pure row-major reinterpretation, done once in XLA-land.
    xs = x.reshape(B, Mn, F)

    weights = [
        params['tok_w'], params['tok_b'], params['pos'],
        params['wqkv'], params['bqkv'], params['wo'], params['bo'],
        params['ln1_g'], params['ln1_b'],
        params['w1'], params['b1'], params['w2'], params['b2'],
        params['ln2_g'], params['ln2_b'],
        params['caan_wqkv'], params['caan_bqkv'], params['caan_ww'], params['caan_bw'],
    ]

    in_specs = [pl.BlockSpec((1, Mn, F), lambda b: (b, 0, 0))]
    # weights: full-array blocks, constant index map -> fetched once, not per grid step
    in_specs += [pl.BlockSpec(w.shape, lambda b, _nd=w.ndim: (0,) * _nd) for w in weights]

    # advisory cost estimate for the XLA scheduler
    flops = 2 * B * Mn * F * E
    per_layer = (2 * B * Mn * E * 3 * E          # fused qkv projection
                 + 4 * B * M * n * n * E         # attention score + weighted sum
                 + 2 * B * Mn * E * E            # output projection
                 + 4 * B * Mn * E * FF)          # FFN
    flops += L * per_layer
    flops += 2 * B * M * E * 3 * E + 4 * B * M * M * E + 2 * B * M * E   # CAAN
    transcendentals = B * M * (L * H * n * n + M)                        # exp() calls
    bytes_accessed = 4 * (xs.size + sum(w.size for w in weights) + B * M)

    out = pl.pallas_call(
        partial(alpha_portfolio_kernel, num_heads=H, num_layers=L,
                num_assets=M, window_size=n),
        out_shape=jax.ShapeDtypeStruct((B, M, 1), jnp.float32),
        grid=(B,),
        in_specs=in_specs,
        out_specs=pl.BlockSpec((1, M, 1), lambda b: (b, 0, 0)),
        compiler_params=pltpu.CompilerParams(dimension_semantics=("parallel",)),
        cost_estimate=pl.CostEstimate(flops=flops,
                                      transcendentals=transcendentals,
                                      bytes_accessed=bytes_accessed),
    )(xs, *weights)
    # TODO(synk): final scores store is (M, 1)-shaped (8 floats total here); pad the lane dim
    # to 128 only if num_assets grows large enough for store bandwidth to matter.
    return out[:, :, 0]                                             # (B, M)


if __name__ == "__main__":
    B, M = 2, 4
    window_size, num_features_original = 8, 4
    num_features_augmented = window_size * num_features_original    # 32

    params = init_params(jax.random.PRNGKey(1), num_features_original, window_size)
    x = jax.random.normal(jax.random.PRNGKey(0),
                          (B, M, num_features_augmented), dtype=jnp.float32)

    fwd = jax.jit(partial(alpha_portfolio_forward,
                          window_size=window_size,
                          num_features_original=num_features_original))
    scores = fwd(x, params)
    jax.block_until_ready(scores)
    assert scores.shape == (B, M) and scores.dtype == jnp.float32
    print("KERNEL_OK")
</pallas_src>

<mosaic_0001>
module attributes {stable_mosaic.version = 11 : i64} {
  func.func @alpha_portfolio_kernel(%arg0: i32, %arg1: memref<1x32x4xf32, #tpu.memory_space<vmem>>, %arg2: memref<4x32xf32, #tpu.memory_space<vmem>>, %arg3: memref<1x32xf32, #tpu.memory_space<vmem>>, %arg4: memref<8x32xf32, #tpu.memory_space<vmem>>, %arg5: memref<2x32x96xf32, #tpu.memory_space<vmem>>, %arg6: memref<2x1x96xf32, #tpu.memory_space<vmem>>, %arg7: memref<2x32x32xf32, #tpu.memory_space<vmem>>, %arg8: memref<2x1x32xf32, #tpu.memory_space<vmem>>, %arg9: memref<2x1x32xf32, #tpu.memory_space<vmem>>, %arg10: memref<2x1x32xf32, #tpu.memory_space<vmem>>, %arg11: memref<2x32x64xf32, #tpu.memory_space<vmem>>, %arg12: memref<2x1x64xf32, #tpu.memory_space<vmem>>, %arg13: memref<2x64x32xf32, #tpu.memory_space<vmem>>, %arg14: memref<2x1x32xf32, #tpu.memory_space<vmem>>, %arg15: memref<2x1x32xf32, #tpu.memory_space<vmem>>, %arg16: memref<2x1x32xf32, #tpu.memory_space<vmem>>, %arg17: memref<32x96xf32, #tpu.memory_space<vmem>>, %arg18: memref<1x96xf32, #tpu.memory_space<vmem>>, %arg19: memref<1x32xf32, #tpu.memory_space<vmem>>, %arg20: memref<1x1xf32, #tpu.memory_space<vmem>>, %arg21: memref<1x4x1xf32, #tpu.memory_space<vmem>>) attributes {dimension_semantics = [#tpu.dimension_semantics<parallel>], iteration_bounds = array<i64: 2>, scalar_prefetch = 0 : i64, scratch_operands = 0 : i64, tpu.core_type = #tpu.core_type<tc>, window_params = [{transform_indices = @transform_0, window_bounds = array<i64: 1, 32, 4>}, {pipeline_mode = #tpu.pipeline_mode<synchronous>, transform_indices = @transform_1, window_bounds = array<i64: 4, 32>}, {pipeline_mode = #tpu.pipeline_mode<synchronous>, transform_indices = @transform_2, window_bounds = array<i64: 1, 32>}, {pipeline_mode = #tpu.pipeline_mode<synchronous>, transform_indices = @transform_3, window_bounds = array<i64: 8, 32>}, {pipeline_mode = #tpu.pipeline_mode<synchronous>, transform_indices = @transform_4, window_bounds = array<i64: 2, 32, 96>}, {pipeline_mode = #tpu.pipeline_mode<synchronous>, transform_indices = @transform_5, window_bounds = array<i64: 2, 1, 96>}, {pipeline_mode = #tpu.pipeline_mode<synchronous>, transform_indices = @transform_6, window_bounds = array<i64: 2, 32, 32>}, {pipeline_mode = #tpu.pipeline_mode<synchronous>, transform_indices = @transform_7, window_bounds = array<i64: 2, 1, 32>}, {pipeline_mode = #tpu.pipeline_mode<synchronous>, transform_indices = @transform_8, window_bounds = array<i64: 2, 1, 32>}, {pipeline_mode = #tpu.pipeline_mode<synchronous>, transform_indices = @transform_9, window_bounds = array<i64: 2, 1, 32>}, {pipeline_mode = #tpu.pipeline_mode<synchronous>, transform_indices = @transform_10, window_bounds = array<i64: 2, 32, 64>}, {pipeline_mode = #tpu.pipeline_mode<synchronous>, transform_indices = @transform_11, window_bounds = array<i64: 2, 1, 64>}, {pipeline_mode = #tpu.pipeline_mode<synchronous>, transform_indices = @transform_12, window_bounds = array<i64: 2, 64, 32>}, {pipeline_mode = #tpu.pipeline_mode<synchronous>, transform_indices = @transform_13, window_bounds = array<i64: 2, 1, 32>}, {pipeline_mode = #tpu.pipeline_mode<synchronous>, transform_indices = @transform_14, window_bounds = array<i64: 2, 1, 32>}, {pipeline_mode = #tpu.pipeline_mode<synchronous>, transform_indices = @transform_15, window_bounds = array<i64: 2, 1, 32>}, {pipeline_mode = #tpu.pipeline_mode<synchronous>, transform_indices = @transform_16, window_bounds = array<i64: 32, 96>}, {pipeline_mode = #tpu.pipeline_mode<synchronous>, transform_indices = @transform_17, window_bounds = array<i64: 1, 96>}, {pipeline_mode = #tpu.pipeline_mode<synchronous>, transform_indices = @transform_18, window_bounds = array<i64: 1, 32>}, {pipeline_mode = #tpu.pipeline_mode<synchronous>, transform_indices = @transform_19, window_bounds = array<i64: 1, 1>}, {transform_indices = @transform_20, window_bounds = array<i64: 1, 4, 1>}]} {
    %c0 = arith.constant 0 : index
    %c0_0 = arith.constant 0 : index
    %c0_1 = arith.constant 0 : index
    %0 = vector.load %arg1[%c0, %c0_0, %c0_1] : memref<1x32x4xf32, #tpu.memory_space<vmem>>, vector<1x32x4xf32>
    %1 = vector.shape_cast %0 : vector<1x32x4xf32> to vector<32x4xf32>
    %c0_2 = arith.constant 0 : index
    %c0_3 = arith.constant 0 : index
    %2 = vector.load %arg2[%c0_2, %c0_3] : memref<4x32xf32, #tpu.memory_space<vmem>>, vector<4x32xf32>
    %cst = arith.constant dense<0.000000e+00> : vector<32x32xf32>
    %3 = tpu.matmul %1, %2, %cst {dimension_numbers = #tpu.dot_dimension_numbers<[1], [0], [0], [1], [0, 0, 1, 1], [], []>} : vector<32x4xf32>, vector<4x32xf32>, vector<32x32xf32> -> vector<32x32xf32>
    %c0_4 = arith.constant 0 : index
    %c0_5 = arith.constant 0 : index
    %4 = vector.load %arg3[%c0_4, %c0_5] : memref<1x32xf32, #tpu.memory_space<vmem>>, vector<1x32xf32>
    %5 = vector.broadcast %4 : vector<1x32xf32> to vector<32x32xf32>
    %6 = arith.addf %3, %5 : vector<32x32xf32>
    %7 = vector.shape_cast %6 : vector<32x32xf32> to vector<4x8x32xf32>
    %c0_6 = arith.constant 0 : index
    %c0_7 = arith.constant 0 : index
    %8 = vector.load %arg4[%c0_6, %c0_7] : memref<8x32xf32, #tpu.memory_space<vmem>>, vector<8x32xf32>
    %9 = vector.shape_cast %8 : vector<8x32xf32> to vector<1x8x32xf32>
    %10 = vector.broadcast %9 : vector<1x8x32xf32> to vector<4x8x32xf32>
    %11 = arith.addf %7, %10 : vector<4x8x32xf32>
    %12 = vector.shape_cast %11 : vector<4x8x32xf32> to vector<32x32xf32>
    %c0_8 = arith.constant 0 : index
    %c0_9 = arith.constant 0 : index
    %c0_10 = arith.constant 0 : index
    %13 = vector.load %arg5[%c0_8, %c0_9, %c0_10] : memref<2x32x96xf32, #tpu.memory_space<vmem>>, vector<1x32x96xf32>
    %14 = vector.shape_cast %13 : vector<1x32x96xf32> to vector<32x96xf32>
    %c0_11 = arith.constant 0 : index
    %c0_12 = arith.constant 0 : index
    %c0_13 = arith.constant 0 : index
    %15 = vector.load %arg6[%c0_11, %c0_12, %c0_13] : memref<2x1x96xf32, #tpu.memory_space<vmem>>, vector<1x1x96xf32>
    %16 = vector.shape_cast %15 : vector<1x1x96xf32> to vector<1x96xf32>
    %c0_14 = arith.constant 0 : index
    %c0_15 = arith.constant 0 : index
    %c0_16 = arith.constant 0 : index
    %17 = vector.load %arg7[%c0_14, %c0_15, %c0_16] : memref<2x32x32xf32, #tpu.memory_space<vmem>>, vector<1x32x32xf32>
    %18 = vector.shape_cast %17 : vector<1x32x32xf32> to vector<32x32xf32>
    %c0_17 = arith.constant 0 : index
    %c0_18 = arith.constant 0 : index
    %c0_19 = arith.constant 0 : index
    %19 = vector.load %arg8[%c0_17, %c0_18, %c0_19] : memref<2x1x32xf32, #tpu.memory_space<vmem>>, vector<1x1x32xf32>
    %20 = vector.shape_cast %19 : vector<1x1x32xf32> to vector<1x32xf32>
    %cst_20 = arith.constant dense<0.000000e+00> : vector<32x96xf32>
    %21 = tpu.matmul %12, %14, %cst_20 {dimension_numbers = #tpu.dot_dimension_numbers<[1], [0], [0], [1], [0, 0, 1, 1], [], []>} : vector<32x32xf32>, vector<32x96xf32>, vector<32x96xf32> -> vector<32x96xf32>
    %22 = vector.broadcast %16 : vector<1x96xf32> to vector<32x96xf32>
    %23 = arith.addf %21, %22 : vector<32x96xf32>
    %24 = vector.shape_cast %23 : vector<32x96xf32> to vector<4x8x96xf32>
    %25 = vector.extract_strided_slice %24 {offsets = [0, 0, 0], sizes = [4, 8, 16], strides = [1, 1, 1]} : vector<4x8x96xf32> to vector<4x8x16xf32>
    %26 = vector.extract_strided_slice %24 {offsets = [0, 0, 32], sizes = [4, 8, 16], strides = [1, 1, 1]} : vector<4x8x96xf32> to vector<4x8x16xf32>
    %27 = vector.extract_strided_slice %24 {offsets = [0, 0, 64], sizes = [4, 8, 16], strides = [1, 1, 1]} : vector<4x8x96xf32> to vector<4x8x16xf32>
    "tpu.trace_start"() <{level = 10 : i32, message = "mid,mjd->mij"}> : () -> ()
    %cst_21 = arith.constant dense<0.000000e+00> : vector<4x8x8xf32>
    %28 = tpu.matmul %25, %26, %cst_21 {dimension_numbers = #tpu.dot_dimension_numbers<[2], [2], [1], [1], [0, 0, 0, 1, 1, 1], [0], [0]>} : vector<4x8x16xf32>, vector<4x8x16xf32>, vector<4x8x8xf32> -> vector<4x8x8xf32>
    "tpu.trace_stop"() : () -> ()
    %cst_22 = arith.constant 2.500000e-01 : f32
    %29 = vector.broadcast %cst_22 : f32 to vector<4x8x8xf32>
    %30 = arith.mulf %28, %29 : vector<4x8x8xf32>
    %cst_23 = arith.constant dense<0xFF800000> : vector<4x8xf32>
    %31 = vector.multi_reduction <maximumf>, %30, %cst_23 [2] : vector<4x8x8xf32> to vector<4x8xf32>
    %32 = vector.shape_cast %31 : vector<4x8xf32> to vector<4x8x1xf32>
    %33 = vector.broadcast %32 : vector<4x8x1xf32> to vector<4x8x8xf32>
    %34 = arith.subf %30, %33 : vector<4x8x8xf32>
    %35 = math.exp %34 : vector<4x8x8xf32>
    %cst_24 = arith.constant dense<0.000000e+00> : vector<4x8xf32>
    %36 = vector.multi_reduction <add>, %35, %cst_24 [2] : vector<4x8x8xf32> to vector<4x8xf32>
    %37 = vector.shape_cast %36 : vector<4x8xf32> to vector<4x8x1xf32>
    %38 = vector.broadcast %37 : vector<4x8x1xf32> to vector<4x8x8xf32>
    %39 = arith.divf %35, %38 : vector<4x8x8xf32>
    "tpu.trace_start"() <{level = 10 : i32, message = "mij,mjd->mid"}> : () -> ()
    %cst_25 = arith.constant dense<0.000000e+00> : vector<4x8x16xf32>
    %40 = tpu.matmul %39, %27, %cst_25 {dimension_numbers = #tpu.dot_dimension_numbers<[2], [1], [1], [2], [0, 0, 0, 1, 1, 2], [0], [0]>} : vector<4x8x8xf32>, vector<4x8x16xf32>, vector<4x8x16xf32> -> vector<4x8x16xf32>
    "tpu.trace_stop"() : () -> ()
    %41 = vector.shape_cast %40 : vector<4x8x16xf32> to vector<32x16xf32>
    %42 = vector.extract_strided_slice %18 {offsets = [0, 0], sizes = [16, 32], strides = [1, 1]} : vector<32x32xf32> to vector<16x32xf32>
    %cst_26 = arith.constant dense<0.000000e+00> : vector<32x32xf32>
    %43 = tpu.matmul %41, %42, %cst_26 {dimension_numbers = #tpu.dot_dimension_numbers<[1], [0], [0], [1], [0, 0, 1, 1], [], []>} : vector<32x16xf32>, vector<16x32xf32>, vector<32x32xf32> -> vector<32x32xf32>
    %44 = vector.extract_strided_slice %24 {offsets = [0, 0, 16], sizes = [4, 8, 16], strides = [1, 1, 1]} : vector<4x8x96xf32> to vector<4x8x16xf32>
    %45 = vector.extract_strided_slice %24 {offsets = [0, 0, 48], sizes = [4, 8, 16], strides = [1, 1, 1]} : vector<4x8x96xf32> to vector<4x8x16xf32>
    %46 = vector.extract_strided_slice %24 {offsets = [0, 0, 80], sizes = [4, 8, 16], strides = [1, 1, 1]} : vector<4x8x96xf32> to vector<4x8x16xf32>
    "tpu.trace_start"() <{level = 10 : i32, message = "mid,mjd->mij"}> : () -> ()
    %cst_27 = arith.constant dense<0.000000e+00> : vector<4x8x8xf32>
    %47 = tpu.matmul %44, %45, %cst_27 {dimension_numbers = #tpu.dot_dimension_numbers<[2], [2], [1], [1], [0, 0, 0, 1, 1, 1], [0], [0]>} : vector<4x8x16xf32>, vector<4x8x16xf32>, vector<4x8x8xf32> -> vector<4x8x8xf32>
    "tpu.trace_stop"() : () -> ()
    %cst_28 = arith.constant 2.500000e-01 : f32
    %48 = vector.broadcast %cst_28 : f32 to vector<4x8x8xf32>
    %49 = arith.mulf %47, %48 : vector<4x8x8xf32>
    %cst_29 = arith.constant dense<0xFF800000> : vector<4x8xf32>
    %50 = vector.multi_reduction <maximumf>, %49, %cst_29 [2] : vector<4x8x8xf32> to vector<4x8xf32>
    %51 = vector.shape_cast %50 : vector<4x8xf32> to vector<4x8x1xf32>
    %52 = vector.broadcast %51 : vector<4x8x1xf32> to vector<4x8x8xf32>
    %53 = arith.subf %49, %52 : vector<4x8x8xf32>
    %54 = math.exp %53 : vector<4x8x8xf32>
    %cst_30 = arith.constant dense<0.000000e+00> : vector<4x8xf32>
    %55 = vector.multi_reduction <add>, %54, %cst_30 [2] : vector<4x8x8xf32> to vector<4x8xf32>
    %56 = vector.shape_cast %55 : vector<4x8xf32> to vector<4x8x1xf32>
    %57 = vector.broadcast %56 : vector<4x8x1xf32> to vector<4x8x8xf32>
    %58 = arith.divf %54, %57 : vector<4x8x8xf32>
    "tpu.trace_start"() <{level = 10 : i32, message = "mij,mjd->mid"}> : () -> ()
    %cst_31 = arith.constant dense<0.000000e+00> : vector<4x8x16xf32>
    %59 = tpu.matmul %58, %46, %cst_31 {dimension_numbers = #tpu.dot_dimension_numbers<[2], [1], [1], [2], [0, 0, 0, 1, 1, 2], [0], [0]>} : vector<4x8x8xf32>, vector<4x8x16xf32>, vector<4x8x16xf32> -> vector<4x8x16xf32>
    "tpu.trace_stop"() : () -> ()
    %60 = vector.shape_cast %59 : vector<4x8x16xf32> to vector<32x16xf32>
    %61 = vector.extract_strided_slice %18 {offsets = [16, 0], sizes = [16, 32], strides = [1, 1]} : vector<32x32xf32> to vector<16x32xf32>
    %cst_32 = arith.constant dense<0.000000e+00> : vector<32x32xf32>
    %62 = tpu.matmul %60, %61, %cst_32 {dimension_numbers = #tpu.dot_dimension_numbers<[1], [0], [0], [1], [0, 0, 1, 1], [], []>} : vector<32x16xf32>, vector<16x32xf32>, vector<32x32xf32> -> vector<32x32xf32>
    %63 = arith.addf %43, %62 : vector<32x32xf32>
    %64 = vector.broadcast %20 : vector<1x32xf32> to vector<32x32xf32>
    %65 = arith.addf %63, %64 : vector<32x32xf32>
    %66 = arith.addf %12, %65 : vector<32x32xf32>
    %c0_33 = arith.constant 0 : index
    %c0_34 = arith.constant 0 : index
    %c0_35 = arith.constant 0 : index
    %67 = vector.load %arg9[%c0_33, %c0_34, %c0_35] : memref<2x1x32xf32, #tpu.memory_space<vmem>>, vector<1x1x32xf32>
    %68 = vector.shape_cast %67 : vector<1x1x32xf32> to vector<1x32xf32>
    %c0_36 = arith.constant 0 : index
    %c0_37 = arith.constant 0 : index
    %c0_38 = arith.constant 0 : index
    %69 = vector.load %arg10[%c0_36, %c0_37, %c0_38] : memref<2x1x32xf32, #tpu.memory_space<vmem>>, vector<1x1x32xf32>
    %70 = vector.shape_cast %69 : vector<1x1x32xf32> to vector<1x32xf32>
    %cst_39 = arith.constant dense<0.000000e+00> : vector<32xf32>
    %71 = vector.multi_reduction <add>, %66, %cst_39 [1] : vector<32x32xf32> to vector<32xf32>
    %72 = vector.shape_cast %71 : vector<32xf32> to vector<32x1xf32>
    %cst_40 = arith.constant 3.200000e+01 : f32
    %73 = vector.broadcast %cst_40 : f32 to vector<32x1xf32>
    %74 = arith.divf %72, %73 : vector<32x1xf32>
    %75 = vector.broadcast %74 : vector<32x1xf32> to vector<32x32xf32>
    %76 = arith.subf %66, %75 : vector<32x32xf32>
    %77 = arith.mulf %76, %76 : vector<32x32xf32>
    %cst_41 = arith.constant dense<0.000000e+00> : vector<32xf32>
    %78 = vector.multi_reduction <add>, %77, %cst_41 [1] : vector<32x32xf32> to vector<32xf32>
    %79 = vector.shape_cast %78 : vector<32xf32> to vector<32x1xf32>
    %cst_42 = arith.constant 3.200000e+01 : f32
    %80 = vector.broadcast %cst_42 : f32 to vector<32x1xf32>
    %81 = arith.divf %79, %80 : vector<32x1xf32>
    %cst_43 = arith.constant 9.99999974E-6 : f32
    %82 = vector.broadcast %cst_43 : f32 to vector<32x1xf32>
    %83 = arith.addf %81, %82 : vector<32x1xf32>
    %84 = math.rsqrt %83 : vector<32x1xf32>
    %85 = vector.broadcast %84 : vector<32x1xf32> to vector<32x32xf32>
    %86 = arith.mulf %76, %85 : vector<32x32xf32>
    %87 = vector.broadcast %68 : vector<1x32xf32> to vector<32x32xf32>
    %88 = arith.mulf %86, %87 : vector<32x32xf32>
    %89 = vector.broadcast %70 : vector<1x32xf32> to vector<32x32xf32>
    %90 = arith.addf %88, %89 : vector<32x32xf32>
    %c0_44 = arith.constant 0 : index
    %c0_45 = arith.constant 0 : index
    %c0_46 = arith.constant 0 : index
    %91 = vector.load %arg11[%c0_44, %c0_45, %c0_46] : memref<2x32x64xf32, #tpu.memory_space<vmem>>, vector<1x32x64xf32>
    %92 = vector.shape_cast %91 : vector<1x32x64xf32> to vector<32x64xf32>
    %cst_47 = arith.constant dense<0.000000e+00> : vector<32x64xf32>
    %93 = tpu.matmul %90, %92, %cst_47 {dimension_numbers = #tpu.dot_dimension_numbers<[1], [0], [0], [1], [0, 0, 1, 1], [], []>} : vector<32x32xf32>, vector<32x64xf32>, vector<32x64xf32> -> vector<32x64xf32>
    %c0_48 = arith.constant 0 : index
    %c0_49 = arith.constant 0 : index
    %c0_50 = arith.constant 0 : index
    %94 = vector.load %arg12[%c0_48, %c0_49, %c0_50] : memref<2x1x64xf32, #tpu.memory_space<vmem>>, vector<1x1x64xf32>
    %95 = vector.shape_cast %94 : vector<1x1x64xf32> to vector<1x64xf32>
    %96 = vector.broadcast %95 : vector<1x64xf32> to vector<32x64xf32>
    %97 = arith.addf %93, %96 : vector<32x64xf32>
    %cst_51 = arith.constant 0.000000e+00 : f32
    %98 = vector.broadcast %cst_51 : f32 to vector<32x64xf32>
    %99 = arith.maximumf %97, %98 : vector<32x64xf32>
    %c0_52 = arith.constant 0 : index
    %c0_53 = arith.constant 0 : index
    %c0_54 = arith.constant 0 : index
    %100 = vector.load %arg13[%c0_52, %c0_53, %c0_54] : memref<2x64x32xf32, #tpu.memory_space<vmem>>, vector<1x64x32xf32>
    %101 = vector.shape_cast %100 : vector<1x64x32xf32> to vector<64x32xf32>
    %cst_55 = arith.constant dense<0.000000e+00> : vector<32x32xf32>
    %102 = tpu.matmul %99, %101, %cst_55 {dimension_numbers = #tpu.dot_dimension_numbers<[1], [0], [0], [1], [0, 0, 1, 1], [], []>} : vector<32x64xf32>, vector<64x32xf32>, vector<32x32xf32> -> vector<32x32xf32>
    %c0_56 = arith.constant 0 : index
    %c0_57 = arith.constant 0 : index
    %c0_58 = arith.constant 0 : index
    %103 = vector.load %arg14[%c0_56, %c0_57, %c0_58] : memref<2x1x32xf32, #tpu.memory_space<vmem>>, vector<1x1x32xf32>
    %104 = vector.shape_cast %103 : vector<1x1x32xf32> to vector<1x32xf32>
    %105 = vector.broadcast %104 : vector<1x32xf32> to vector<32x32xf32>
    %106 = arith.addf %102, %105 : vector<32x32xf32>
    %107 = arith.addf %90, %106 : vector<32x32xf32>
    %c0_59 = arith.constant 0 : index
    %c0_60 = arith.constant 0 : index
    %c0_61 = arith.constant 0 : index
    %108 = vector.load %arg15[%c0_59, %c0_60, %c0_61] : memref<2x1x32xf32, #tpu.memory_space<vmem>>, vector<1x1x32xf32>
    %109 = vector.shape_cast %108 : vector<1x1x32xf32> to vector<1x32xf32>
    %c0_62 = arith.constant 0 : index
    %c0_63 = arith.constant 0 : index
    %c0_64 = arith.constant 0 : index
    %110 = vector.load %arg16[%c0_62, %c0_63, %c0_64] : memref<2x1x32xf32, #tpu.memory_space<vmem>>, vector<1x1x32xf32>
    %111 = vector.shape_cast %110 : vector<1x1x32xf32> to vector<1x32xf32>
    %cst_65 = arith.constant dense<0.000000e+00> : vector<32xf32>
    %112 = vector.multi_reduction <add>, %107, %cst_65 [1] : vector<32x32xf32> to vector<32xf32>
    %113 = vector.shape_cast %112 : vector<32xf32> to vector<32x1xf32>
    %cst_66 = arith.constant 3.200000e+01 : f32
    %114 = vector.broadcast %cst_66 : f32 to vector<32x1xf32>
    %115 = arith.divf %113, %114 : vector<32x1xf32>
    %116 = vector.broadcast %115 : vector<32x1xf32> to vector<32x32xf32>
    %117 = arith.subf %107, %116 : vector<32x32xf32>
    %118 = arith.mulf %117, %117 : vector<32x32xf32>
    %cst_67 = arith.constant dense<0.000000e+00> : vector<32xf32>
    %119 = vector.multi_reduction <add>, %118, %cst_67 [1] : vector<32x32xf32> to vector<32xf32>
    %120 = vector.shape_cast %119 : vector<32xf32> to vector<32x1xf32>
    %cst_68 = arith.constant 3.200000e+01 : f32
    %121 = vector.broadcast %cst_68 : f32 to vector<32x1xf32>
    %122 = arith.divf %120, %121 : vector<32x1xf32>
    %cst_69 = arith.constant 9.99999974E-6 : f32
    %123 = vector.broadcast %cst_69 : f32 to vector<32x1xf32>
    %124 = arith.addf %122, %123 : vector<32x1xf32>
    %125 = math.rsqrt %124 : vector<32x1xf32>
    %126 = vector.broadcast %125 : vector<32x1xf32> to vector<32x32xf32>
    %127 = arith.mulf %117, %126 : vector<32x32xf32>
    %128 = vector.broadcast %109 : vector<1x32xf32> to vector<32x32xf32>
    %129 = arith.mulf %127, %128 : vector<32x32xf32>
    %130 = vector.broadcast %111 : vector<1x32xf32> to vector<32x32xf32>
    %131 = arith.addf %129, %130 : vector<32x32xf32>
    %c1 = arith.constant 1 : index
    %c0_70 = arith.constant 0 : index
    %c0_71 = arith.constant 0 : index
    %132 = vector.load %arg5[%c1, %c0_70, %c0_71] : memref<2x32x96xf32, #tpu.memory_space<vmem>>, vector<1x32x96xf32>
    %133 = vector.shape_cast %132 : vector<1x32x96xf32> to vector<32x96xf32>
    %c1_72 = arith.constant 1 : index
    %c0_73 = arith.constant 0 : index
    %c0_74 = arith.constant 0 : index
    %134 = vector.load %arg6[%c1_72, %c0_73, %c0_74] : memref<2x1x96xf32, #tpu.memory_space<vmem>>, vector<1x1x96xf32>
    %135 = vector.shape_cast %134 : vector<1x1x96xf32> to vector<1x96xf32>
    %c1_75 = arith.constant 1 : index
    %c0_76 = arith.constant 0 : index
    %c0_77 = arith.constant 0 : index
    %136 = vector.load %arg7[%c1_75, %c0_76, %c0_77] : memref<2x32x32xf32, #tpu.memory_space<vmem>>, vector<1x32x32xf32>
    %137 = vector.shape_cast %136 : vector<1x32x32xf32> to vector<32x32xf32>
    %c1_78 = arith.constant 1 : index
    %c0_79 = arith.constant 0 : index
    %c0_80 = arith.constant 0 : index
    %138 = vector.load %arg8[%c1_78, %c0_79, %c0_80] : memref<2x1x32xf32, #tpu.memory_space<vmem>>, vector<1x1x32xf32>
    %139 = vector.shape_cast %138 : vector<1x1x32xf32> to vector<1x32xf32>
    %cst_81 = arith.constant dense<0.000000e+00> : vector<32x96xf32>
    %140 = tpu.matmul %131, %133, %cst_81 {dimension_numbers = #tpu.dot_dimension_numbers<[1], [0], [0], [1], [0, 0, 1, 1], [], []>} : vector<32x32xf32>, vector<32x96xf32>, vector<32x96xf32> -> vector<32x96xf32>
    %141 = vector.broadcast %135 : vector<1x96xf32> to vector<32x96xf32>
    %142 = arith.addf %140, %141 : vector<32x96xf32>
    %143 = vector.shape_cast %142 : vector<32x96xf32> to vector<4x8x96xf32>
    %144 = vector.extract_strided_slice %143 {offsets = [0, 0, 0], sizes = [4, 8, 16], strides = [1, 1, 1]} : vector<4x8x96xf32> to vector<4x8x16xf32>
    %145 = vector.extract_strided_slice %143 {offsets = [0, 0, 32], sizes = [4, 8, 16], strides = [1, 1, 1]} : vector<4x8x96xf32> to vector<4x8x16xf32>
    %146 = vector.extract_strided_slice %143 {offsets = [0, 0, 64], sizes = [4, 8, 16], strides = [1, 1, 1]} : vector<4x8x96xf32> to vector<4x8x16xf32>
    "tpu.trace_start"() <{level = 10 : i32, message = "mid,mjd->mij"}> : () -> ()
    %cst_82 = arith.constant dense<0.000000e+00> : vector<4x8x8xf32>
    %147 = tpu.matmul %144, %145, %cst_82 {dimension_numbers = #tpu.dot_dimension_numbers<[2], [2], [1], [1], [0, 0, 0, 1, 1, 1], [0], [0]>} : vector<4x8x16xf32>, vector<4x8x16xf32>, vector<4x8x8xf32> -> vector<4x8x8xf32>
    "tpu.trace_stop"() : () -> ()
    %cst_83 = arith.constant 2.500000e-01 : f32
    %148 = vector.broadcast %cst_83 : f32 to vector<4x8x8xf32>
    %149 = arith.mulf %147, %148 : vector<4x8x8xf32>
    %cst_84 = arith.constant dense<0xFF800000> : vector<4x8xf32>
    %150 = vector.multi_reduction <maximumf>, %149, %cst_84 [2] : vector<4x8x8xf32> to vector<4x8xf32>
    %151 = vector.shape_cast %150 : vector<4x8xf32> to vector<4x8x1xf32>
    %152 = vector.broadcast %151 : vector<4x8x1xf32> to vector<4x8x8xf32>
    %153 = arith.subf %149, %152 : vector<4x8x8xf32>
    %154 = math.exp %153 : vector<4x8x8xf32>
    %cst_85 = arith.constant dense<0.000000e+00> : vector<4x8xf32>
    %155 = vector.multi_reduction <add>, %154, %cst_85 [2] : vector<4x8x8xf32> to vector<4x8xf32>
    %156 = vector.shape_cast %155 : vector<4x8xf32> to vector<4x8x1xf32>
    %157 = vector.broadcast %156 : vector<4x8x1xf32> to vector<4x8x8xf32>
    %158 = arith.divf %154, %157 : vector<4x8x8xf32>
    "tpu.trace_start"() <{level = 10 : i32, message = "mij,mjd->mid"}> : () -> ()
    %cst_86 = arith.constant dense<0.000000e+00> : vector<4x8x16xf32>
    %159 = tpu.matmul %158, %146, %cst_86 {dimension_numbers = #tpu.dot_dimension_numbers<[2], [1], [1], [2], [0, 0, 0, 1, 1, 2], [0], [0]>} : vector<4x8x8xf32>, vector<4x8x16xf32>, vector<4x8x16xf32> -> vector<4x8x16xf32>
    "tpu.trace_stop"() : () -> ()
    %160 = vector.shape_cast %159 : vector<4x8x16xf32> to vector<32x16xf32>
    %161 = vector.extract_strided_slice %137 {offsets = [0, 0], sizes = [16, 32], strides = [1, 1]} : vector<32x32xf32> to vector<16x32xf32>
    %cst_87 = arith.constant dense<0.000000e+00> : vector<32x32xf32>
    %162 = tpu.matmul %160, %161, %cst_87 {dimension_numbers = #tpu.dot_dimension_numbers<[1], [0], [0], [1], [0, 0, 1, 1], [], []>} : vector<32x16xf32>, vector<16x32xf32>, vector<32x32xf32> -> vector<32x32xf32>
    %163 = vector.extract_strided_slice %143 {offsets = [0, 0, 16], sizes = [4, 8, 16], strides = [1, 1, 1]} : vector<4x8x96xf32> to vector<4x8x16xf32>
    %164 = vector.extract_strided_slice %143 {offsets = [0, 0, 48], sizes = [4, 8, 16], strides = [1, 1, 1]} : vector<4x8x96xf32> to vector<4x8x16xf32>
    %165 = vector.extract_strided_slice %143 {offsets = [0, 0, 80], sizes = [4, 8, 16], strides = [1, 1, 1]} : vector<4x8x96xf32> to vector<4x8x16xf32>
    "tpu.trace_start"() <{level = 10 : i32, message = "mid,mjd->mij"}> : () -> ()
    %cst_88 = arith.constant dense<0.000000e+00> : vector<4x8x8xf32>
    %166 = tpu.matmul %163, %164, %cst_88 {dimension_numbers = #tpu.dot_dimension_numbers<[2], [2], [1], [1], [0, 0, 0, 1, 1, 1], [0], [0]>} : vector<4x8x16xf32>, vector<4x8x16xf32>, vector<4x8x8xf32> -> vector<4x8x8xf32>
    "tpu.trace_stop"() : () -> ()
    %cst_89 = arith.constant 2.500000e-01 : f32
    %167 = vector.broadcast %cst_89 : f32 to vector<4x8x8xf32>
    %168 = arith.mulf %166, %167 : vector<4x8x8xf32>
    %cst_90 = arith.constant dense<0xFF800000> : vector<4x8xf32>
    %169 = vector.multi_reduction <maximumf>, %168, %cst_90 [2] : vector<4x8x8xf32> to vector<4x8xf32>
    %170 = vector.shape_cast %169 : vector<4x8xf32> to vector<4x8x1xf32>
    %171 = vector.broadcast %170 : vector<4x8x1xf32> to vector<4x8x8xf32>
    %172 = arith.subf %168, %171 : vector<4x8x8xf32>
    %173 = math.exp %172 : vector<4x8x8xf32>
    %cst_91 = arith.constant dense<0.000000e+00> : vector<4x8xf32>
    %174 = vector.multi_reduction <add>, %173, %cst_91 [2] : vector<4x8x8xf32> to vector<4x8xf32>
    %175 = vector.shape_cast %174 : vector<4x8xf32> to vector<4x8x1xf32>
    %176 = vector.broadcast %175 : vector<4x8x1xf32> to vector<4x8x8xf32>
    %177 = arith.divf %173, %176 : vector<4x8x8xf32>
    "tpu.trace_start"() <{level = 10 : i32, message = "mij,mjd->mid"}> : () -> ()
    %cst_92 = arith.constant dense<0.000000e+00> : vector<4x8x16xf32>
    %178 = tpu.matmul %177, %165, %cst_92 {dimension_numbers = #tpu.dot_dimension_numbers<[2], [1], [1], [2], [0, 0, 0, 1, 1, 2], [0], [0]>} : vector<4x8x8xf32>, vector<4x8x16xf32>, vector<4x8x16xf32> -> vector<4x8x16xf32>
    "tpu.trace_stop"() : () -> ()
    %179 = vector.shape_cast %178 : vector<4x8x16xf32> to vector<32x16xf32>
    %180 = vector.extract_strided_slice %137 {offsets = [16, 0], sizes = [16, 32], strides = [1, 1]} : vector<32x32xf32> to vector<16x32xf32>
    %cst_93 = arith.constant dense<0.000000e+00> : vector<32x32xf32>
    %181 = tpu.matmul %179, %180, %cst_93 {dimension_numbers = #tpu.dot_dimension_numbers<[1], [0], [0], [1], [0, 0, 1, 1], [], []>} : vector<32x16xf32>, vector<16x32xf32>, vector<32x32xf32> -> vector<32x32xf32>
    %182 = arith.addf %162, %181 : vector<32x32xf32>
    %183 = vector.broadcast %139 : vector<1x32xf32> to vector<32x32xf32>
    %184 = arith.addf %182, %183 : vector<32x32xf32>
    %185 = arith.addf %131, %184 : vector<32x32xf32>
    %c1_94 = arith.constant 1 : index
    %c0_95 = arith.constant 0 : index
    %c0_96 = arith.constant 0 : index
    %186 = vector.load %arg9[%c1_94, %c0_95, %c0_96] : memref<2x1x32xf32, #tpu.memory_space<vmem>>, vector<1x1x32xf32>
    %187 = vector.shape_cast %186 : vector<1x1x32xf32> to vector<1x32xf32>
    %c1_97 = arith.constant 1 : index
    %c0_98 = arith.constant 0 : index
    %c0_99 = arith.constant 0 : index
    %188 = vector.load %arg10[%c1_97, %c0_98, %c0_99] : memref<2x1x32xf32, #tpu.memory_space<vmem>>, vector<1x1x32xf32>
    %189 = vector.shape_cast %188 : vector<1x1x32xf32> to vector<1x32xf32>
    %cst_100 = arith.constant dense<0.000000e+00> : vector<32xf32>
    %190 = vector.multi_reduction <add>, %185, %cst_100 [1] : vector<32x32xf32> to vector<32xf32>
    %191 = vector.shape_cast %190 : vector<32xf32> to vector<32x1xf32>
    %cst_101 = arith.constant 3.200000e+01 : f32
    %192 = vector.broadcast %cst_101 : f32 to vector<32x1xf32>
    %193 = arith.divf %191, %192 : vector<32x1xf32>
    %194 = vector.broadcast %193 : vector<32x1xf32> to vector<32x32xf32>
    %195 = arith.subf %185, %194 : vector<32x32xf32>
    %196 = arith.mulf %195, %195 : vector<32x32xf32>
    %cst_102 = arith.constant dense<0.000000e+00> : vector<32xf32>
    %197 = vector.multi_reduction <add>, %196, %cst_102 [1] : vector<32x32xf32> to vector<32xf32>
    %198 = vector.shape_cast %197 : vector<32xf32> to vector<32x1xf32>
    %cst_103 = arith.constant 3.200000e+01 : f32
    %199 = vector.broadcast %cst_103 : f32 to vector<32x1xf32>
    %200 = arith.divf %198, %199 : vector<32x1xf32>
    %cst_104 = arith.constant 9.99999974E-6 : f32
    %201 = vector.broadcast %cst_104 : f32 to vector<32x1xf32>
    %202 = arith.addf %200, %201 : vector<32x1xf32>
    %203 = math.rsqrt %202 : vector<32x1xf32>
    %204 = vector.broadcast %203 : vector<32x1xf32> to vector<32x32xf32>
    %205 = arith.mulf %195, %204 : vector<32x32xf32>
    %206 = vector.broadcast %187 : vector<1x32xf32> to vector<32x32xf32>
    %207 = arith.mulf %205, %206 : vector<32x32xf32>
    %208 = vector.broadcast %189 : vector<1x32xf32> to vector<32x32xf32>
    %209 = arith.addf %207, %208 : vector<32x32xf32>
    %c1_105 = arith.constant 1 : index
    %c0_106 = arith.constant 0 : index
    %c0_107 = arith.constant 0 : index
    %210 = vector.load %arg11[%c1_105, %c0_106, %c0_107] : memref<2x32x64xf32, #tpu.memory_space<vmem>>, vector<1x32x64xf32>
    %211 = vector.shape_cast %210 : vector<1x32x64xf32> to vector<32x64xf32>
    %cst_108 = arith.constant dense<0.000000e+00> : vector<32x64xf32>
    %212 = tpu.matmul %209, %211, %cst_108 {dimension_numbers = #tpu.dot_dimension_numbers<[1], [0], [0], [1], [0, 0, 1, 1], [], []>} : vector<32x32xf32>, vector<32x64xf32>, vector<32x64xf32> -> vector<32x64xf32>
    %c1_109 = arith.constant 1 : index
    %c0_110 = arith.constant 0 : index
    %c0_111 = arith.constant 0 : index
    %213 = vector.load %arg12[%c1_109, %c0_110, %c0_111] : memref<2x1x64xf32, #tpu.memory_space<vmem>>, vector<1x1x64xf32>
    %214 = vector.shape_cast %213 : vector<1x1x64xf32> to vector<1x64xf32>
    %215 = vector.broadcast %214 : vector<1x64xf32> to vector<32x64xf32>
    %216 = arith.addf %212, %215 : vector<32x64xf32>
    %cst_112 = arith.constant 0.000000e+00 : f32
    %217 = vector.broadcast %cst_112 : f32 to vector<32x64xf32>
    %218 = arith.maximumf %216, %217 : vector<32x64xf32>
    %c1_113 = arith.constant 1 : index
    %c0_114 = arith.constant 0 : index
    %c0_115 = arith.constant 0 : index
    %219 = vector.load %arg13[%c1_113, %c0_114, %c0_115] : memref<2x64x32xf32, #tpu.memory_space<vmem>>, vector<1x64x32xf32>
    %220 = vector.shape_cast %219 : vector<1x64x32xf32> to vector<64x32xf32>
    %cst_116 = arith.constant dense<0.000000e+00> : vector<32x32xf32>
    %221 = tpu.matmul %218, %220, %cst_116 {dimension_numbers = #tpu.dot_dimension_numbers<[1], [0], [0], [1], [0, 0, 1, 1], [], []>} : vector<32x64xf32>, vector<64x32xf32>, vector<32x32xf32> -> vector<32x32xf32>
    %c1_117 = arith.constant 1 : index
    %c0_118 = arith.constant 0 : index
    %c0_119 = arith.constant 0 : index
    %222 = vector.load %arg14[%c1_117, %c0_118, %c0_119] : memref<2x1x32xf32, #tpu.memory_space<vmem>>, vector<1x1x32xf32>
    %223 = vector.shape_cast %222 : vector<1x1x32xf32> to vector<1x32xf32>
    %224 = vector.broadcast %223 : vector<1x32xf32> to vector<32x32xf32>
    %225 = arith.addf %221, %224 : vector<32x32xf32>
    %226 = arith.addf %209, %225 : vector<32x32xf32>
    %c1_120 = arith.constant 1 : index
    %c0_121 = arith.constant 0 : index
    %c0_122 = arith.constant 0 : index
    %227 = vector.load %arg15[%c1_120, %c0_121, %c0_122] : memref<2x1x32xf32, #tpu.memory_space<vmem>>, vector<1x1x32xf32>
    %228 = vector.shape_cast %227 : vector<1x1x32xf32> to vector<1x32xf32>
    %c1_123 = arith.constant 1 : index
    %c0_124 = arith.constant 0 : index
    %c0_125 = arith.constant 0 : index
    %229 = vector.load %arg16[%c1_123, %c0_124, %c0_125] : memref<2x1x32xf32, #tpu.memory_space<vmem>>, vector<1x1x32xf32>
    %230 = vector.shape_cast %229 : vector<1x1x32xf32> to vector<1x32xf32>
    %cst_126 = arith.constant dense<0.000000e+00> : vector<32xf32>
    %231 = vector.multi_reduction <add>, %226, %cst_126 [1] : vector<32x32xf32> to vector<32xf32>
    %232 = vector.shape_cast %231 : vector<32xf32> to vector<32x1xf32>
    %cst_127 = arith.constant 3.200000e+01 : f32
    %233 = vector.broadcast %cst_127 : f32 to vector<32x1xf32>
    %234 = arith.divf %232, %233 : vector<32x1xf32>
    %235 = vector.broadcast %234 : vector<32x1xf32> to vector<32x32xf32>
    %236 = arith.subf %226, %235 : vector<32x32xf32>
    %237 = arith.mulf %236, %236 : vector<32x32xf32>
    %cst_128 = arith.constant dense<0.000000e+00> : vector<32xf32>
    %238 = vector.multi_reduction <add>, %237, %cst_128 [1] : vector<32x32xf32> to vector<32xf32>
    %239 = vector.shape_cast %238 : vector<32xf32> to vector<32x1xf32>
    %cst_129 = arith.constant 3.200000e+01 : f32
    %240 = vector.broadcast %cst_129 : f32 to vector<32x1xf32>
    %241 = arith.divf %239, %240 : vector<32x1xf32>
    %cst_130 = arith.constant 9.99999974E-6 : f32
    %242 = vector.broadcast %cst_130 : f32 to vector<32x1xf32>
    %243 = arith.addf %241, %242 : vector<32x1xf32>
    %244 = math.rsqrt %243 : vector<32x1xf32>
    %245 = vector.broadcast %244 : vector<32x1xf32> to vector<32x32xf32>
    %246 = arith.mulf %236, %245 : vector<32x32xf32>
    %247 = vector.broadcast %228 : vector<1x32xf32> to vector<32x32xf32>
    %248 = arith.mulf %246, %247 : vector<32x32xf32>
    %249 = vector.broadcast %230 : vector<1x32xf32> to vector<32x32xf32>
    %250 = arith.addf %248, %249 : vector<32x32xf32>
    %251 = vector.shape_cast %250 : vector<32x32xf32> to vector<4x8x32xf32>
    %cst_131 = arith.constant dense<0.000000e+00> : vector<4x32xf32>
    %252 = vector.multi_reduction <add>, %251, %cst_131 [1] : vector<4x8x32xf32> to vector<4x32xf32>
    %cst_132 = arith.constant 8.000000e+00 : f32
    %253 = vector.broadcast %cst_132 : f32 to vector<4x32xf32>
    %254 = arith.divf %252, %253 : vector<4x32xf32>
    %c0_133 = arith.constant 0 : index
    %c0_134 = arith.constant 0 : index
    %255 = vector.load %arg17[%c0_133, %c0_134] : memref<32x96xf32, #tpu.memory_space<vmem>>, vector<32x96xf32>
    %cst_135 = arith.constant dense<0.000000e+00> : vector<4x96xf32>
    %256 = tpu.matmul %254, %255, %cst_135 {dimension_numbers = #tpu.dot_dimension_numbers<[1], [0], [0], [1], [0, 0, 1, 1], [], []>} : vector<4x32xf32>, vector<32x96xf32>, vector<4x96xf32> -> vector<4x96xf32>
    %c0_136 = arith.constant 0 : index
    %c0_137 = arith.constant 0 : index
    %257 = vector.load %arg18[%c0_136, %c0_137] : memref<1x96xf32, #tpu.memory_space<vmem>>, vector<1x96xf32>
    %258 = vector.broadcast %257 : vector<1x96xf32> to vector<4x96xf32>
    %259 = arith.addf %256, %258 : vector<4x96xf32>
    %260 = vector.extract_strided_slice %259 {offsets = [0, 0], sizes = [4, 32], strides = [1, 1]} : vector<4x96xf32> to vector<4x32xf32>
    %261 = vector.extract_strided_slice %259 {offsets = [0, 32], sizes = [4, 32], strides = [1, 1]} : vector<4x96xf32> to vector<4x32xf32>
    %262 = vector.extract_strided_slice %259 {offsets = [0, 64], sizes = [4, 32], strides = [1, 1]} : vector<4x96xf32> to vector<4x32xf32>
    "tpu.trace_start"() <{level = 10 : i32, message = "me,ne->mn"}> : () -> ()
    %cst_138 = arith.constant dense<0.000000e+00> : vector<4x4xf32>
    %263 = tpu.matmul %260, %261, %cst_138 {dimension_numbers = #tpu.dot_dimension_numbers<[1], [1], [0], [0], [0, 0, 1, 0], [], []>} : vector<4x32xf32>, vector<4x32xf32>, vector<4x4xf32> -> vector<4x4xf32>
    "tpu.trace_stop"() : () -> ()
    %cst_139 = arith.constant 5.65685415 : f32
    %264 = vector.broadcast %cst_139 : f32 to vector<4x4xf32>
    %265 = arith.divf %263, %264 : vector<4x4xf32>
    %cst_140 = arith.constant dense<0xFF800000> : vector<4xf32>
    %266 = vector.multi_reduction <maximumf>, %265, %cst_140 [1] : vector<4x4xf32> to vector<4xf32>
    %267 = vector.shape_cast %266 : vector<4xf32> to vector<4x1xf32>
    %268 = vector.broadcast %267 : vector<4x1xf32> to vector<4x4xf32>
    %269 = arith.subf %265, %268 : vector<4x4xf32>
    %270 = math.exp %269 : vector<4x4xf32>
    %cst_141 = arith.constant dense<0.000000e+00> : vector<4xf32>
    %271 = vector.multi_reduction <add>, %270, %cst_141 [1] : vector<4x4xf32> to vector<4xf32>
    %272 = vector.shape_cast %271 : vector<4xf32> to vector<4x1xf32>
    %273 = vector.broadcast %272 : vector<4x1xf32> to vector<4x4xf32>
    %274 = arith.divf %270, %273 : vector<4x4xf32>
    %cst_142 = arith.constant dense<0.000000e+00> : vector<4x32xf32>
    %275 = tpu.matmul %274, %262, %cst_142 {dimension_numbers = #tpu.dot_dimension_numbers<[1], [0], [0], [1], [0, 0, 1, 1], [], []>} : vector<4x4xf32>, vector<4x32xf32>, vector<4x32xf32> -> vector<4x32xf32>
    %c0_143 = arith.constant 0 : index
    %c0_144 = arith.constant 0 : index
    %276 = vector.load %arg19[%c0_143, %c0_144] : memref<1x32xf32, #tpu.memory_space<vmem>>, vector<1x32xf32>
    %277 = vector.broadcast %276 : vector<1x32xf32> to vector<4x32xf32>
    %278 = arith.mulf %275, %277 : vector<4x32xf32>
    %cst_145 = arith.constant dense<0.000000e+00> : vector<4xf32>
    %279 = vector.multi_reduction <add>, %278, %cst_145 [1] : vector<4x32xf32> to vector<4xf32>
    %280 = vector.shape_cast %279 : vector<4xf32> to vector<4x1xf32>
    %c0_146 = arith.constant 0 : index
    %c0_147 = arith.constant 0 : index
    %281 = vector.load %arg20[%c0_146, %c0_147] : memref<1x1xf32, #tpu.memory_space<vmem>>, vector<1x1xf32>
    %282 = vector.broadcast %281 : vector<1x1xf32> to vector<4x1xf32>
    %283 = arith.addf %280, %282 : vector<4x1xf32>
    %c0_148 = arith.constant 0 : index
    %c0_149 = arith.constant 0 : index
    %c0_150 = arith.constant 0 : index
    %284 = vector.load %arg21[%c0_148, %c0_149, %c0_150] : memref<1x4x1xf32, #tpu.memory_space<vmem>>, vector<1x4x1xf32>
    %285 = vector.shape_cast %284 : vector<1x4x1xf32> to vector<4x1xf32>
    %286 = vector.shape_cast %283 : vector<4x1xf32> to vector<1x4x1xf32>
    tpu.vector_store %arg21[%c0_148, %c0_149, %c0_150], %286 {strides = array<i32>} : memref<1x4x1xf32, #tpu.memory_space<vmem>>, vector<1x4x1xf32>,
    return
  }
  func.func @transform_0(%arg0: i32) -> (i32, i32, i32) {
    %c0_i32 = arith.constant 0 : i32
    %c0_i32_0 = arith.constant 0 : i32
    %c0_i32_1 = arith.constant 0 : i32
    return %arg0, %c0_i32, %c0_i32_0 : i32, i32, i32
  }
  func.func @transform_1(%arg0: i32) -> (i32, i32) {
    %c0_i32 = arith.constant 0 : i32
    %c0_i32_0 = arith.constant 0 : i32
    %c0_i32_1 = arith.constant 0 : i32
    return %c0_i32, %c0_i32_0 : i32, i32
  }
  func.func @transform_2(%arg0: i32) -> (i32, i32) {
    %c0_i32 = arith.constant 0 : i32
    %c0_i32_0 = arith.constant 0 : i32
    %c0_i32_1 = arith.constant 0 : i32
    return %c0_i32, %c0_i32_0 : i32, i32
  }
  func.func @transform_3(%arg0: i32) -> (i32, i32) {
    %c0_i32 = arith.constant 0 : i32
    %c0_i32_0 = arith.constant 0 : i32
    %c0_i32_1 = arith.constant 0 : i32
    return %c0_i32, %c0_i32_0 : i32, i32
  }
  func.func @transform_4(%arg0: i32) -> (i32, i32, i32) {
    %c0_i32 = arith.constant 0 : i32
    %c0_i32_0 = arith.constant 0 : i32
    %c0_i32_1 = arith.constant 0 : i32
    %c0_i32_2 = arith.constant 0 : i32
    return %c0_i32, %c0_i32_0, %c0_i32_1 : i32, i32, i32
  }
  func.func @transform_5(%arg0: i32) -> (i32, i32, i32) {
    %c0_i32 = arith.constant 0 : i32
    %c0_i32_0 = arith.constant 0 : i32
    %c0_i32_1 = arith.constant 0 : i32
    %c0_i32_2 = arith.constant 0 : i32
    return %c0_i32, %c0_i32_0, %c0_i32_1 : i32, i32, i32
  }
  func.func @transform_6(%arg0: i32) -> (i32, i32, i32) {
    %c0_i32 = arith.constant 0 : i32
    %c0_i32_0 = arith.constant 0 : i32
    %c0_i32_1 = arith.constant 0 : i32
    %c0_i32_2 = arith.constant 0 : i32
    return %c0_i32, %c0_i32_0, %c0_i32_1 : i32, i32, i32
  }
  func.func @transform_7(%arg0: i32) -> (i32, i32, i32) {
    %c0_i32 = arith.constant 0 : i32
    %c0_i32_0 = arith.constant 0 : i32
    %c0_i32_1 = arith.constant 0 : i32
    %c0_i32_2 = arith.constant 0 : i32
    return %c0_i32, %c0_i32_0, %c0_i32_1 : i32, i32, i32
  }
  func.func @transform_8(%arg0: i32) -> (i32, i32, i32) {
    %c0_i32 = arith.constant 0 : i32
    %c0_i32_0 = arith.constant 0 : i32
    %c0_i32_1 = arith.constant 0 : i32
    %c0_i32_2 = arith.constant 0 : i32
    return %c0_i32, %c0_i32_0, %c0_i32_1 : i32, i32, i32
  }
  func.func @transform_9(%arg0: i32) -> (i32, i32, i32) {
    %c0_i32 = arith.constant 0 : i32
    %c0_i32_0 = arith.constant 0 : i32
    %c0_i32_1 = arith.constant 0 : i32
    %c0_i32_2 = arith.constant 0 : i32
    return %c0_i32, %c0_i32_0, %c0_i32_1 : i32, i32, i32
  }
  func.func @transform_10(%arg0: i32) -> (i32, i32, i32) {
    %c0_i32 = arith.constant 0 : i32
    %c0_i32_0 = arith.constant 0 : i32
    %c0_i32_1 = arith.constant 0 : i32
    %c0_i32_2 = arith.constant 0 : i32
    return %c0_i32, %c0_i32_0, %c0_i32_1 : i32, i32, i32
  }
  func.func @transform_11(%arg0: i32) -> (i32, i32, i32) {
    %c0_i32 = arith.constant 0 : i32
    %c0_i32_0 = arith.constant 0 : i32
    %c0_i32_1 = arith.constant 0 : i32
    %c0_i32_2 = arith.constant 0 : i32
    return %c0_i32, %c0_i32_0, %c0_i32_1 : i32, i32, i32
  }
  func.func @transform_12(%arg0: i32) -> (i32, i32, i32) {
    %c0_i32 = arith.constant 0 : i32
    %c0_i32_0 = arith.constant 0 : i32
    %c0_i32_1 = arith.constant 0 : i32
    %c0_i32_2 = arith.constant 0 : i32
    return %c0_i32, %c0_i32_0, %c0_i32_1 : i32, i32, i32
  }
  func.func @transform_13(%arg0: i32) -> (i32, i32, i32) {
    %c0_i32 = arith.constant 0 : i32
    %c0_i32_0 = arith.constant 0 : i32
    %c0_i32_1 = arith.constant 0 : i32
    %c0_i32_2 = arith.constant 0 : i32
    return %c0_i32, %c0_i32_0, %c0_i32_1 : i32, i32, i32
  }
  func.func @transform_14(%arg0: i32) -> (i32, i32, i32) {
    %c0_i32 = arith.constant 0 : i32
    %c0_i32_0 = arith.constant 0 : i32
    %c0_i32_1 = arith.constant 0 : i32
    %c0_i32_2 = arith.constant 0 : i32
    return %c0_i32, %c0_i32_0, %c0_i32_1 : i32, i32, i32
  }
  func.func @transform_15(%arg0: i32) -> (i32, i32, i32) {
    %c0_i32 = arith.constant 0 : i32
    %c0_i32_0 = arith.constant 0 : i32
    %c0_i32_1 = arith.constant 0 : i32
    %c0_i32_2 = arith.constant 0 : i32
    return %c0_i32, %c0_i32_0, %c0_i32_1 : i32, i32, i32
  }
  func.func @transform_16(%arg0: i32) -> (i32, i32) {
    %c0_i32 = arith.constant 0 : i32
    %c0_i32_0 = arith.constant 0 : i32
    %c0_i32_1 = arith.constant 0 : i32
    return %c0_i32, %c0_i32_0 : i32, i32
  }
  func.func @transform_17(%arg0: i32) -> (i32, i32) {
    %c0_i32 = arith.constant 0 : i32
    %c0_i32_0 = arith.constant 0 : i32
    %c0_i32_1 = arith.constant 0 : i32
    return %c0_i32, %c0_i32_0 : i32, i32
  }
  func.func @transform_18(%arg0: i32) -> (i32, i32) {
    %c0_i32 = arith.constant 0 : i32
    %c0_i32_0 = arith.constant 0 : i32
    %c0_i32_1 = arith.constant 0 : i32
    return %c0_i32, %c0_i32_0 : i32, i32
  }
  func.func @transform_19(%arg0: i32) -> (i32, i32) {
    %c0_i32 = arith.constant 0 : i32
    %c0_i32_0 = arith.constant 0 : i32
    %c0_i32_1 = arith.constant 0 : i32
    return %c0_i32, %c0_i32_0 : i32, i32
  }
  func.func @transform_20(%arg0: i32) -> (i32, i32, i32) {
    %c0_i32 = arith.constant 0 : i32
    %c0_i32_0 = arith.constant 0 : i32
    %c0_i32_1 = arith.constant 0 : i32
    return %arg0, %c0_i32, %c0_i32_0 : i32, i32, i32
  }
}

</mosaic_0001>

<llo_original>
// kernel: alpha_portfolio_forward.1
$region0: #{alpha_portfolio_forward.1}
  #allocation0 [shape = 'u32[]', space=smem, size = 0x4, offset = 0x4, fixed_abs, tag = 'smem constant byte address 0x4 - core index']
  #allocation1 [shape = 'u32[144,128]{1,0:T(1,128)}', space=vmem, size = 0x12000, scoped, tag = 'internal scratch']
  #allocation2 [shape = 'f32[1,1]{1,0:T(1,128)S(1)}', space=vmem, size = 0x200, scoped, tag = 'scoped memory for alpha_portfolio_forward.1']
  %s0 = inlined_call_operand.vmem [shape: f32[2,32,4], index: 0, kind: input, shape index: {}]
  %s1 = inlined_call_operand.vmem [shape: f32[4,32], index: 1, kind: input, shape index: {}]
  %s2 = inlined_call_operand.vmem [shape: f32[1,32], index: 2, kind: input, shape index: {}]
  %s3 = inlined_call_operand.vmem [shape: f32[8,32], index: 3, kind: input, shape index: {}]
  %s4 = inlined_call_operand.vmem [shape: f32[2,32,96], index: 4, kind: input, shape index: {}]
  %s5 = inlined_call_operand.vmem [shape: f32[2,1,96], index: 5, kind: input, shape index: {}]
  %s6 = inlined_call_operand.vmem [shape: f32[2,32,32], index: 6, kind: input, shape index: {}]
  %s7 = inlined_call_operand.vmem [shape: f32[2,1,32], index: 7, kind: input, shape index: {}]
  %s8 = inlined_call_operand.vmem [shape: f32[2,1,32], index: 8, kind: input, shape index: {}]
  %s9 = inlined_call_operand.vmem [shape: f32[2,1,32], index: 9, kind: input, shape index: {}]
  %s10 = inlined_call_operand.vmem [shape: f32[2,32,64], index: 10, kind: input, shape index: {}]
  %s11 = inlined_call_operand.vmem [shape: f32[2,1,64], index: 11, kind: input, shape index: {}]
  %s12 = inlined_call_operand.vmem [shape: f32[2,64,32], index: 12, kind: input, shape index: {}]
  %s13 = inlined_call_operand.vmem [shape: f32[2,1,32], index: 13, kind: input, shape index: {}]
  %s14 = inlined_call_operand.vmem [shape: f32[2,1,32], index: 14, kind: input, shape index: {}]
  %s15 = inlined_call_operand.vmem [shape: f32[2,1,32], index: 15, kind: input, shape index: {}]
  %s16 = inlined_call_operand.vmem [shape: f32[32,96], index: 16, kind: input, shape index: {}]
  %s17 = inlined_call_operand.vmem [shape: f32[1,96], index: 17, kind: input, shape index: {}]
  %s18 = inlined_call_operand.vmem [shape: f32[1,32], index: 18, kind: input, shape index: {}]
  %s19 = inlined_call_operand.<no memory space> [shape: f32[1,1], index: 19, kind: input, shape index: {}]
  %s20 = inlined_call_operand.vmem [shape: f32[2,4,1], index: 20, kind: output, shape index: {}]
  %s21 = sld [smem:[#allocation0]]
  $region113: #{alpha_portfolio_forward.1} parent=0
    _
  %s23 = ssub.s32 1, %s21
  %s24 = scalar_select 0, %s23, %s21
  %v25 = vstv %s19
  %26 = vst [vmem:[#allocation2] sm:$0x1] %v25
  loop: start=0, step=1, limit=4
  $region2: #{alpha_portfolio_forward.1} parent=0 // loop_pre_header
    _
  $region3: #{alpha_portfolio_forward.1} parent=0 // loop_header
    %s28 = sphi 0, %s32
    %p29 = scmp.ge.s32.totalorder %s28, 4
    %s38 = sphi 0, %s40
    %s41 = sphi 0, %s38
    %s42 = sphi 0, %s41
    %s58 = sphi 0, %s42
    %s62 = sphi 0, %s62
    %s64 = sphi 0, %s62
    %s65 = sphi 0, %s64
    %s79 = sphi 0, %s65
    %s83 = sphi 0, %s83
    %s85 = sphi 0, %s83
    %s86 = sphi 0, %s85
    %s100 = sphi 0, %s86
    %s104 = sphi 0, %s104
    %s106 = sphi 0, %s104
    %s107 = sphi 0, %s106
    %s121 = sphi 0, %s107
    %s125 = sphi 0, %s125
    %s127 = sphi 0, %s125
    %s128 = sphi 0, %s127
    %s142 = sphi 0, %s128
    %s146 = sphi 0, %s146
    %s148 = sphi 0, %s146
    %s149 = sphi 0, %s148
    %s163 = sphi 0, %s149
    %s167 = sphi 0, %s167
    %s169 = sphi 0, %s167
    %s170 = sphi 0, %s169
    %s184 = sphi 0, %s170
    %s188 = sphi 0, %s188
    %s190 = sphi 0, %s188
    %s191 = sphi 0, %s190
    %s205 = sphi 0, %s191
    %s209 = sphi 0, %s209
    %s211 = sphi 0, %s209
    %s212 = sphi 0, %s211
    %s226 = sphi 0, %s212
    %s230 = sphi 0, %s230
    %s232 = sphi 0, %s230
    %s233 = sphi 0, %s232
    %s247 = sphi 0, %s233
    %s251 = sphi 0, %s251
    %s253 = sphi 0, %s251
    %s254 = sphi 0, %s253
    %s268 = sphi 0, %s254
    %s272 = sphi 0, %s272
    %s274 = sphi 0, %s272
    %s275 = sphi 0, %s274
    %s289 = sphi 0, %s275
    %s293 = sphi 0, %s293
    %s295 = sphi 0, %s293
    %s296 = sphi 0, %s295
    %s310 = sphi 0, %s296
    %s314 = sphi 0, %s314
    %s316 = sphi 0, %s314
    %s317 = sphi 0, %s316
    %s331 = sphi 0, %s317
    %s335 = sphi 0, %s335
    %s337 = sphi 0, %s335
    %s338 = sphi 0, %s337
    %s352 = sphi 0, %s338
    %s356 = sphi 0, %s356
    %s358 = sphi 0, %s356
    %s359 = sphi 0, %s358
    %s373 = sphi 0, %s359
    %s377 = sphi 0, %s377
    %s379 = sphi 0, %s377
    %s380 = sphi 0, %s379
    %s394 = sphi 0, %s380
    %s398 = sphi 0, %s398
    %s400 = sphi 0, %s398
    %s401 = sphi 0, %s400
    %s415 = sphi 0, %s401
    %s419 = sphi 0, %s419
    %s421 = sphi 0, %s419
    %s422 = sphi 0, %s421
    %s436 = sphi 0, %s422
    %s440 = sphi 0, %s440
    %s442 = sphi 0, %s440
    %s443 = sphi 0, %s442
    %s457 = sphi 0, %s443
    %s463 = sphi 0, %s465
    %s466 = sphi 0, %s463
    %s467 = sphi 0, %s466
    %s483 = sphi 0, %s467
  $region4: #{alpha_portfolio_forward.1} parent=0 // loop_header_branch
    %31 = sbr.rel (%p29) target = $region8
  $region5: #{alpha_portfolio_forward.1} parent=0 // loop_body
    %s33 = ssub.s32 %s28, 1
    %s34 = ssub.s32 %s28, 2
    %s35 = sadd.s32 %s28, 1
    %s36 = ssub.s32 %s28, %s35
    %p37 = scmp.eq.s32.totalorder %s36, 0
    %s39 = sadd.s32 %s38, 1
    %s40 = scalar_select %p37, %s38, %s39
    %p43 = pneg %p37
    %p44 = scmp.eq.s32.totalorder %s28, 1
    %p45 = por %p43, %p44
    %p46 = scmp.ne.s32.totalorder %s38, %s41
    %p47 = scmp.eq.s32.totalorder %s28, 0
    %p48 = por %p46, %p47
    %p49 = scmp.ne.s32.totalorder %s38, %s41
    %p50 = scmp.eq.s32.totalorder %s33, 1
    %p51 = por %p49, %p50
    %p52 = scmp.ne.s32.totalorder %s41, %s42
    %p53 = scmp.eq.s32.totalorder %s33, 0
    %p54 = por %p52, %p53
    %p55 = scmp.ne.s32.totalorder %s41, %s42
    %p56 = scmp.eq.s32.totalorder %s34, 1
    %p57 = por %p55, %p56
    %p59 = scmp.ne.s32.totalorder %s42, %s58
    %p60 = scmp.eq.s32.totalorder %s34, 0
    %p61 = por %p59, %p60
    %s63 = sadd.s32 %s62, 1
    %p66 = scmp.eq.s32.totalorder %s28, 1
    %p67 = scmp.ne.s32.totalorder %s62, %s64
    %p68 = scmp.eq.s32.totalorder %s28, 0
    %p69 = por %p67, %p68
    %p70 = scmp.ne.s32.totalorder %s62, %s64
    %p71 = scmp.eq.s32.totalorder %s33, 1
    %p72 = por %p70, %p71
    %p73 = scmp.ne.s32.totalorder %s64, %s65
    %p74 = scmp.eq.s32.totalorder %s33, 0
    %p75 = por %p73, %p74
    %p76 = scmp.ne.s32.totalorder %s64, %s65
    %p77 = scmp.eq.s32.totalorder %s34, 1
    %p78 = por %p76, %p77
    %p80 = scmp.ne.s32.totalorder %s65, %s79
    %p81 = scmp.eq.s32.totalorder %s34, 0
    %p82 = por %p80, %p81
    %s84 = sadd.s32 %s83, 1
    %p87 = scmp.eq.s32.totalorder %s28, 1
    %p88 = scmp.ne.s32.totalorder %s83, %s85
    %p89 = scmp.eq.s32.totalorder %s28, 0
    %p90 = por %p88, %p89
    %p91 = scmp.ne.s32.totalorder %s83, %s85
    %p92 = scmp.eq.s32.totalorder %s33, 1
    %p93 = por %p91, %p92
    %p94 = scmp.ne.s32.totalorder %s85, %s86
    %p95 = scmp.eq.s32.totalorder %s33, 0
    %p96 = por %p94, %p95
    %p97 = scmp.ne.s32.totalorder %s85, %s86
    %p98 = scmp.eq.s32.totalorder %s34, 1
    %p99 = por %p97, %p98
    %p101 = scmp.ne.s32.totalorder %s86, %s100
    %p102 = scmp.eq.s32.totalorder %s34, 0
    %p103 = por %p101, %p102
    %s105 = sadd.s32 %s104, 1
    %p108 = scmp.eq.s32.totalorder %s28, 1
    %p109 = scmp.ne.s32.totalorder %s104, %s106
    %p110 = scmp.eq.s32.totalorder %s28, 0
    %p111 = por %p109, %p110
    %p112 = scmp.ne.s32.totalorder %s104, %s106
    %p113 = scmp.eq.s32.totalorder %s33, 1
    %p114 = por %p112, %p113
    %p115 = scmp.ne.s32.totalorder %s106, %s107
    %p116 = scmp.eq.s32.totalorder %s33, 0
    %p117 = por %p115, %p116
    %p118 = scmp.ne.s32.totalorder %s106, %s107
    %p119 = scmp.eq.s32.totalorder %s34, 1
    %p120 = por %p118, %p119
    %p122 = scmp.ne.s32.totalorder %s107, %s121
    %p123 = scmp.eq.s32.totalorder %s34, 0
    %p124 = por %p122, %p123
    %s126 = sadd.s32 %s125, 1
    %p129 = scmp.eq.s32.totalorder %s28, 1
    %p130 = scmp.ne.s32.totalorder %s125, %s127
    %p131 = scmp.eq.s32.totalorder %s28, 0
    %p132 = por %p130, %p131
    %p133 = scmp.ne.s32.totalorder %s125, %s127
    %p134 = scmp.eq.s32.totalorder %s33, 1
    %p135 = por %p133, %p134
    %p136 = scmp.ne.s32.totalorder %s127, %s128
    %p137 = scmp.eq.s32.totalorder %s33, 0
    %p138 = por %p136, %p137
    %p139 = scmp.ne.s32.totalorder %s127, %s128
    %p140 = scmp.eq.s32.totalorder %s34, 1
    %p141 = por %p139, %p140
    %p143 = scmp.ne.s32.totalorder %s128, %s142
    %p144 = scmp.eq.s32.totalorder %s34, 0
    %p145 = por %p143, %p144
    %s147 = sadd.s32 %s146, 1
    %p150 = scmp.eq.s32.totalorder %s28, 1
    %p151 = scmp.ne.s32.totalorder %s146, %s148
    %p152 = scmp.eq.s32.totalorder %s28, 0
    %p153 = por %p151, %p152
    %p154 = scmp.ne.s32.totalorder %s146, %s148
    %p155 = scmp.eq.s32.totalorder %s33, 1
    %p156 = por %p154, %p155
    %p157 = scmp.ne.s32.totalorder %s148, %s149
    %p158 = scmp.eq.s32.totalorder %s33, 0
    %p159 = por %p157, %p158
    %p160 = scmp.ne.s32.totalorder %s148, %s149
    %p161 = scmp.eq.s32.totalorder %s34, 1
    %p162 = por %p160, %p161
    %p164 = scmp.ne.s32.totalorder %s149, %s163
    %p165 = scmp.eq.s32.totalorder %s34, 0
    %p166 = por %p164, %p165
    %s168 = sadd.s32 %s167, 1
    %p171 = scmp.eq.s32.totalorder %s28, 1
    %p172 = scmp.ne.s32.totalorder %s167, %s169
    %p173 = scmp.eq.s32.totalorder %s28, 0
    %p174 = por %p172, %p173
    %p175 = scmp.ne.s32.totalorder %s167, %s169
    %p176 = scmp.eq.s32.totalorder %s33, 1
    %p177 = por %p175, %p176
    %p178 = scmp.ne.s32.totalorder %s169, %s170
    %p179 = scmp.eq.s32.totalorder %s33, 0
    %p180 = por %p178, %p179
    %p181 = scmp.ne.s32.totalorder %s169, %s170
    %p182 = scmp.eq.s32.totalorder %s34, 1
    %p183 = por %p181, %p182
    %p185 = scmp.ne.s32.totalorder %s170, %s184
    %p186 = scmp.eq.s32.totalorder %s34, 0
    %p187 = por %p185, %p186
    %s189 = sadd.s32 %s188, 1
    %p192 = scmp.eq.s32.totalorder %s28, 1
    %p193 = scmp.ne.s32.totalorder %s188, %s190
    %p194 = scmp.eq.s32.totalorder %s28, 0
    %p195 = por %p193, %p194
    %p196 = scmp.ne.s32.totalorder %s188, %s190
    %p197 = scmp.eq.s32.totalorder %s33, 1
    %p198 = por %p196, %p197
    %p199 = scmp.ne.s32.totalorder %s190, %s191
    %p200 = scmp.eq.s32.totalorder %s33, 0
    %p201 = por %p199, %p200
    %p202 = scmp.ne.s32.totalorder %s190, %s191
    %p203 = scmp.eq.s32.totalorder %s34, 1
    %p204 = por %p202, %p203
    %p206 = scmp.ne.s32.totalorder %s191, %s205
    %p207 = scmp.eq.s32.totalorder %s34, 0
    %p208 = por %p206, %p207
    %s210 = sadd.s32 %s209, 1
    %p213 = scmp.eq.s32.totalorder %s28, 1
    %p214 = scmp.ne.s32.totalorder %s209, %s211
    %p215 = scmp.eq.s32.totalorder %s28, 0
    %p216 = por %p214, %p215
    %p217 = scmp.ne.s32.totalorder %s209, %s211
    %p218 = scmp.eq.s32.totalorder %s33, 1
    %p219 = por %p217, %p218
    %p220 = scmp.ne.s32.totalorder %s211, %s212
    %p221 = scmp.eq.s32.totalorder %s33, 0
    %p222 = por %p220, %p221
    %p223 = scmp.ne.s32.totalorder %s211, %s212
    %p224 = scmp.eq.s32.totalorder %s34, 1
    %p225 = por %p223, %p224
    %p227 = scmp.ne.s32.totalorder %s212, %s226
    %p228 = scmp.eq.s32.totalorder %s34, 0
    %p229 = por %p227, %p228
    %s231 = sadd.s32 %s230, 1
    %p234 = scmp.eq.s32.totalorder %s28, 1
    %p235 = scmp.ne.s32.totalorder %s230, %s232
    %p236 = scmp.eq.s32.totalorder %s28, 0
    %p237 = por %p235, %p236
    %p238 = scmp.ne.s32.totalorder %s230, %s232
    %p239 = scmp.eq.s32.totalorder %s33, 1
    %p240 = por %p238, %p239
    %p241 = scmp.ne.s32.totalorder %s232, %s233
    %p242 = scmp.eq.s32.totalorder %s33, 0
    %p243 = por %p241, %p242
    %p244 = scmp.ne.s32.totalorder %s232, %s233
    %p245 = scmp.eq.s32.totalorder %s34, 1
    %p246 = por %p244, %p245
    %p248 = scmp.ne.s32.totalorder %s233, %s247
    %p249 = scmp.eq.s32.totalorder %s34, 0
    %p250 = por %p248, %p249
    %s252 = sadd.s32 %s251, 1
    %p255 = scmp.eq.s32.totalorder %s28, 1
    %p256 = scmp.ne.s32.totalorder %s251, %s253
    %p257 = scmp.eq.s32.totalorder %s28, 0
    %p258 = por %p256, %p257
    %p259 = scmp.ne.s32.totalorder %s251, %s253
    %p260 = scmp.eq.s32.totalorder %s33, 1
    %p261 = por %p259, %p260
    %p262 = scmp.ne.s32.totalorder %s253, %s254
    %p263 = scmp.eq.s32.totalorder %s33, 0
    %p264 = por %p262, %p263
    %p265 = scmp.ne.s32.totalorder %s253, %s254
    %p266 = scmp.eq.s32.totalorder %s34, 1
    %p267 = por %p265, %p266
    %p269 = scmp.ne.s32.totalorder %s254, %s268
    %p270 = scmp.eq.s32.totalorder %s34, 0
    %p271 = por %p269, %p270
    %s273 = sadd.s32 %s272, 1
    %p276 = scmp.eq.s32.totalorder %s28, 1
    %p277 = scmp.ne.s32.totalorder %s272, %s274
    %p278 = scmp.eq.s32.totalorder %s28, 0
    %p279 = por %p277, %p278
    %p280 = scmp.ne.s32.totalorder %s272, %s274
    %p281 = scmp.eq.s32.totalorder %s33, 1
    %p282 = por %p280, %p281
    %p283 = scmp.ne.s32.totalorder %s274, %s275
    %p284 = scmp.eq.s32.totalorder %s33, 0
    %p285 = por %p283, %p284
    %p286 = scmp.ne.s32.totalorder %s274, %s275
    %p287 = scmp.eq.s32.totalorder %s34, 1
    %p288 = por %p286, %p287
    %p290 = scmp.ne.s32.totalorder %s275, %s289
    %p291 = scmp.eq.s32.totalorder %s34, 0
    %p292 = por %p290, %p291
    %s294 = sadd.s32 %s293, 1
    %p297 = scmp.eq.s32.totalorder %s28, 1
    %p298 = scmp.ne.s32.totalorder %s293, %s295
    %p299 = scmp.eq.s32.totalorder %s28, 0
    %p300 = por %p298, %p299
    %p301 = scmp.ne.s32.totalorder %s293, %s295
    %p302 = scmp.eq.s32.totalorder %s33, 1
    %p303 = por %p301, %p302
    %p304 = scmp.ne.s32.totalorder %s295, %s296
    %p305 = scmp.eq.s32.totalorder %s33, 0
    %p306 = por %p304, %p305
    %p307 = scmp.ne.s32.totalorder %s295, %s296
    %p308 = scmp.eq.s32.totalorder %s34, 1
    %p309 = por %p307, %p308
    %p311 = scmp.ne.s32.totalorder %s296, %s310
    %p312 = scmp.eq.s32.totalorder %s34, 0
    %p313 = por %p311, %p312
    %s315 = sadd.s32 %s314, 1
    %p318 = scmp.eq.s32.totalorder %s28, 1
    %p319 = scmp.ne.s32.totalorder %s314, %s316
    %p320 = scmp.eq.s32.totalorder %s28, 0
    %p321 = por %p319, %p320
    %p322 = scmp.ne.s32.totalorder %s314, %s316
    %p323 = scmp.eq.s32.totalorder %s33, 1
    %p324 = por %p322, %p323
    %p325 = scmp.ne.s32.totalorder %s316, %s317
    %p326 = scmp.eq.s32.totalorder %s33, 0
    %p327 = por %p325, %p326
    %p328 = scmp.ne.s32.totalorder %s316, %s317
    %p329 = scmp.eq.s32.totalorder %s34, 1
    %p330 = por %p328, %p329
    %p332 = scmp.ne.s32.totalorder %s317, %s331
    %p333 = scmp.eq.s32.totalorder %s34, 0
    %p334 = por %p332, %p333
    %s336 = sadd.s32 %s335, 1
    %p339 = scmp.eq.s32.totalorder %s28, 1
    %p340 = scmp.ne.s32.totalorder %s335, %s337
    %p341 = scmp.eq.s32.totalorder %s28, 0
    %p342 = por %p340, %p341
    %p343 = scmp.ne.s32.totalorder %s335, %s337
    %p344 = scmp.eq.s32.totalorder %s33, 1
    %p345 = por %p343, %p344
    %p346 = scmp.ne.s32.totalorder %s337, %s338
    %p347 = scmp.eq.s32.totalorder %s33, 0
    %p348 = por %p346, %p347
    %p349 = scmp.ne.s32.totalorder %s337, %s338
    %p350 = scmp.eq.s32.totalorder %s34, 1
    %p351 = por %p349, %p350
    %p353 = scmp.ne.s32.totalorder %s338, %s352
    %p354 = scmp.eq.s32.totalorder %s34, 0
    %p355 = por %p353, %p354
    %s357 = sadd.s32 %s356, 1
    %p360 = scmp.eq.s32.totalorder %s28, 1
    %p361 = scmp.ne.s32.totalorder %s356, %s358
    %p362 = scmp.eq.s32.totalorder %s28, 0
    %p363 = por %p361, %p362
    %p364 = scmp.ne.s32.totalorder %s356, %s358
    %p365 = scmp.eq.s32.totalorder %s33, 1
    %p366 = por %p364, %p365
    %p367 = scmp.ne.s32.totalorder %s358, %s359
    %p368 = scmp.eq.s32.totalorder %s33, 0
    %p369 = por %p367, %p368
    %p370 = scmp.ne.s32.totalorder %s358, %s359
    %p371 = scmp.eq.s32.totalorder %s34, 1
    %p372 = por %p370, %p371
    %p374 = scmp.ne.s32.totalorder %s359, %s373
    %p375 = scmp.eq.s32.totalorder %s34, 0
    %p376 = por %p374, %p375
    %s378 = sadd.s32 %s377, 1
    %p381 = scmp.eq.s32.totalorder %s28, 1
    %p382 = scmp.ne.s32.totalorder %s377, %s379
    %p383 = scmp.eq.s32.totalorder %s28, 0
    %p384 = por %p382, %p383
    %p385 = scmp.ne.s32.totalorder %s377, %s379
    %p386 = scmp.eq.s32.totalorder %s33, 1
    %p387 = por %p385, %p386
    %p388 = scmp.ne.s32.totalorder %s379, %s380
    %p389 = scmp.eq.s32.totalorder %s33, 0
    %p390 = por %p388, %p389
    %p391 = scmp.ne.s32.totalorder %s379, %s380
    %p392 = scmp.eq.s32.totalorder %s34, 1
    %p393 = por %p391, %p392
    %p395 = scmp.ne.s32.totalorder %s380, %s394
    %p396 = scmp.eq.s32.totalorder %s34, 0
    %p397 = por %p395, %p396
    %s399 = sadd.s32 %s398, 1
    %p402 = scmp.eq.s32.totalorder %s28, 1
    %p403 = scmp.ne.s32.totalorder %s398, %s400
    %p404 = scmp.eq.s32.totalorder %s28, 0
    %p405 = por %p403, %p404
    %p406 = scmp.ne.s32.totalorder %s398, %s400
    %p407 = scmp.eq.s32.totalorder %s33, 1
    %p408 = por %p406, %p407
    %p409 = scmp.ne.s32.totalorder %s400, %s401
    %p410 = scmp.eq.s32.totalorder %s33, 0
    %p411 = por %p409, %p410
    %p412 = scmp.ne.s32.totalorder %s400, %s401
    %p413 = scmp.eq.s32.totalorder %s34, 1
    %p414 = por %p412, %p413
    %p416 = scmp.ne.s32.totalorder %s401, %s415
    %p417 = scmp.eq.s32.totalorder %s34, 0
    %p418 = por %p416, %p417
    %s420 = sadd.s32 %s419, 1
    %p423 = scmp.eq.s32.totalorder %s28, 1
    %p424 = scmp.ne.s32.totalorder %s419, %s421
    %p425 = scmp.eq.s32.totalorder %s28, 0
    %p426 = por %p424, %p425
    %p427 = scmp.ne.s32.totalorder %s419, %s421
    %p428 = scmp.eq.s32.totalorder %s33, 1
    %p429 = por %p427, %p428
    %p430 = scmp.ne.s32.totalorder %s421, %s422
    %p431 = scmp.eq.s32.totalorder %s33, 0
    %p432 = por %p430, %p431
    %p433 = scmp.ne.s32.totalorder %s421, %s422
    %p434 = scmp.eq.s32.totalorder %s34, 1
    %p435 = por %p433, %p434
    %p437 = scmp.ne.s32.totalorder %s422, %s436
    %p438 = scmp.eq.s32.totalorder %s34, 0
    %p439 = por %p437, %p438
    %s441 = sadd.s32 %s440, 1
    %p444 = scmp.eq.s32.totalorder %s28, 1
    %p445 = scmp.ne.s32.totalorder %s440, %s442
    %p446 = scmp.eq.s32.totalorder %s28, 0
    %p447 = por %p445, %p446
    %p448 = scmp.ne.s32.totalorder %s440, %s442
    %p449 = scmp.eq.s32.totalorder %s33, 1
    %p450 = por %p448, %p449
    %p451 = scmp.ne.s32.totalorder %s442, %s443
    %p452 = scmp.eq.s32.totalorder %s33, 0
    %p453 = por %p451, %p452
    %p454 = scmp.ne.s32.totalorder %s442, %s443
    %p455 = scmp.eq.s32.totalorder %s34, 1
    %p456 = por %p454, %p455
    %p458 = scmp.ne.s32.totalorder %s443, %s457
    %p459 = scmp.eq.s32.totalorder %s34, 0
    %p460 = por %p458, %p459
    %s461 = ssub.s32 %s28, %s35
    %p462 = scmp.eq.s32.totalorder %s461, 0
    %s464 = sadd.s32 %s463, 1
    %s465 = scalar_select %p462, %s463, %s464
    %p468 = pneg %p462
    %p469 = scmp.eq.s32.totalorder %s28, 1
    %p470 = por %p468, %p469
    %p471 = scmp.ne.s32.totalorder %s463, %s466
    %p472 = scmp.eq.s32.totalorder %s28, 0
    %p473 = por %p471, %p472
    %p474 = scmp.ne.s32.totalorder %s463, %s466
    %p475 = scmp.eq.s32.totalorder %s33, 1
    %p476 = por %p474, %p475
    %p477 = scmp.ne.s32.totalorder %s466, %s467
    %p478 = scmp.eq.s32.totalorder %s33, 0
    %p479 = por %p477, %p478
    %p480 = scmp.ne.s32.totalorder %s466, %s467
    %p481 = scmp.eq.s32.totalorder %s34, 1
    %p482 = por %p480, %p481
    %p484 = scmp.ne.s32.totalorder %s467, %s483
    %p485 = scmp.eq.s32.totalorder %s34, 0
    %p486 = por %p484, %p485
    %p487 = scmp.le.s32.totalorder 1, %s28
    %p488 = scmp.lt.s32.totalorder %s28, 3
    %p489 = pnand %p487, %p488
    %p490 = pneg %p489
    // Predicated region
    $region9: #{alpha_portfolio_forward.1} parent=5 // pred_check
      _
    $region10: #{alpha_portfolio_forward.1} parent=5 // pred_check_branch
      %492 = sbr.rel (%p489) target = $region12
    $region11: #{alpha_portfolio_forward.1} parent=5 // pred_region
      %s493 = ssub.s32 %s28, 1
      // Predicated region
      $region13: #{alpha_portfolio_forward.1} parent=11 // pred_check
        %p494 = pneg %p75
      $region14: #{alpha_portfolio_forward.1} parent=11 // pred_check_branch
        %496 = sbr.rel (%p494) target = $region16
      $region15: #{alpha_portfolio_forward.1} parent=11 // pred_region
        _
      $region16: #{alpha_portfolio_forward.1} parent=11 // pred_fallthru
        _
      // Predicated region
      $region17: #{alpha_portfolio_forward.1} parent=11 // pred_check
        %p497 = pneg %p96
      $region18: #{alpha_portfolio_forward.1} parent=11 // pred_check_branch
        %499 = sbr.rel (%p497) target = $region20
      $region19: #{alpha_portfolio_forward.1} parent=11 // pred_region
        _
      $region20: #{alpha_portfolio_forward.1} parent=11 // pred_fallthru
        _
      // Predicated region
      $region21: #{alpha_portfolio_forward.1} parent=11 // pred_check
        %p500 = pneg %p117
      $region22: #{alpha_portfolio_forward.1} parent=11 // pred_check_branch
        %502 = sbr.rel (%p500) target = $region24
      $region23: #{alpha_portfolio_forward.1} parent=11 // pred_region
        _
      $region24: #{alpha_portfolio_forward.1} parent=11 // pred_fallthru
        _
      // Predicated region
      $region25: #{alpha_portfolio_forward.1} parent=11 // pred_check
        %p503 = pneg %p138
      $region26: #{alpha_portfolio_forward.1} parent=11 // pred_check_branch
        %505 = sbr.rel (%p503) target = $region28
      $region27: #{alpha_portfolio_forward.1} parent=11 // pred_region
        _
      $region28: #{alpha_portfolio_forward.1} parent=11 // pred_fallthru
        _
      // Predicated region
      $region29: #{alpha_portfolio_forward.1} parent=11 // pred_check
        %p506 = pneg %p159
      $region30: #{alpha_portfolio_forward.1} parent=11 // pred_check_branch
        %508 = sbr.rel (%p506) target = $region32
      $region31: #{alpha_portfolio_forward.1} parent=11 // pred_region
        _
      $region32: #{alpha_portfolio_forward.1} parent=11 // pred_fallthru
        _
      // Predicated region
      $region33: #{alpha_portfolio_forward.1} parent=11 // pred_check
        %p509 = pneg %p180
      $region34: #{alpha_portfolio_forward.1} parent=11 // pred_check_branch
        %511 = sbr.rel (%p509) target = $region36
      $region35: #{alpha_portfolio_forward.1} parent=11 // pred_region
        _
      $region36: #{alpha_portfolio_forward.1} parent=11 // pred_fallthru
        _
      // Predicated region
      $region37: #{alpha_portfolio_forward.1} parent=11 // pred_check
        %p512 = pneg %p201
      $region38: #{alpha_portfolio_forward.1} parent=11 // pred_check_branch
        %514 = sbr.rel (%p512) target = $region40
      $region39: #{alpha_portfolio_forward.1} parent=11 // pred_region
        _
      $region40: #{alpha_portfolio_forward.1} parent=11 // pred_fallthru
        _
      // Predicated region
      $region41: #{alpha_portfolio_forward.1} parent=11 // pred_check
        %p515 = pneg %p222
      $region42: #{alpha_portfolio_forward.1} parent=11 // pred_check_branch
        %517 = sbr.rel (%p515) target = $region44
      $region43: #{alpha_portfolio_forward.1} parent=11 // pred_region
        _
      $region44: #{alpha_portfolio_forward.1} parent=11 // pred_fallthru
        _
      // Predicated region
      $region45: #{alpha_portfolio_forward.1} parent=11 // pred_check
        %p518 = pneg %p243
      $region46: #{alpha_portfolio_forward.1} parent=11 // pred_check_branch
        %520 = sbr.rel (%p518) target = $region48
      $region47: #{alpha_portfolio_forward.1} parent=11 // pred_region
        _
      $region48: #{alpha_portfolio_forward.1} parent=11 // pred_fallthru
        _
      // Predicated region
      $region49: #{alpha_portfolio_forward.1} parent=11 // pred_check
        %p521 = pneg %p264
      $region50: #{alpha_portfolio_forward.1} parent=11 // pred_check_branch
        %523 = sbr.rel (%p521) target = $region52
      $region51: #{alpha_portfolio_forward.1} parent=11 // pred_region
        _
      $region52: #{alpha_portfolio_forward.1} parent=11 // pred_fallthru
        _
      // Predicated region
      $region53: #{alpha_portfolio_forward.1} parent=11 // pred_check
        %p524 = pneg %p285
      $region54: #{alpha_portfolio_forward.1} parent=11 // pred_check_branch
        %526 = sbr.rel (%p524) target = $region56
      $region55: #{alpha_portfolio_forward.1} parent=11 // pred_region
        _
      $region56: #{alpha_portfolio_forward.1} parent=11 // pred_fallthru
        _
      // Predicated region
      $region57: #{alpha_portfolio_forward.1} parent=11 // pred_check
        %p527 = pneg %p306
      $region58: #{alpha_portfolio_forward.1} parent=11 // pred_check_branch
        %529 = sbr.rel (%p527) target = $region60
      $region59: #{alpha_portfolio_forward.1} parent=11 // pred_region
        _
      $region60: #{alpha_portfolio_forward.1} parent=11 // pred_fallthru
        _
      // Predicated region
      $region61: #{alpha_portfolio_forward.1} parent=11 // pred_check
        %p530 = pneg %p327
      $region62: #{alpha_portfolio_forward.1} parent=11 // pred_check_branch
        %532 = sbr.rel (%p530) target = $region64
      $region63: #{alpha_portfolio_forward.1} parent=11 // pred_region
        _
      $region64: #{alpha_portfolio_forward.1} parent=11 // pred_fallthru
        _
      // Predicated region
      $region65: #{alpha_portfolio_forward.1} parent=11 // pred_check
        %p533 = pneg %p348
      $region66: #{alpha_portfolio_forward.1} parent=11 // pred_check_branch
        %535 = sbr.rel (%p533) target = $region68
      $region67: #{alpha_portfolio_forward.1} parent=11 // pred_region
        _
      $region68: #{alpha_portfolio_forward.1} parent=11 // pred_fallthru
        _
      // Predicated region
      $region69: #{alpha_portfolio_forward.1} parent=11 // pred_check
        %p536 = pneg %p369
      $region70: #{alpha_portfolio_forward.1} parent=11 // pred_check_branch
        %538 = sbr.rel (%p536) target = $region72
      $region71: #{alpha_portfolio_forward.1} parent=11 // pred_region
        _
      $region72: #{alpha_portfolio_forward.1} parent=11 // pred_fallthru
        _
      // Predicated region
      $region73: #{alpha_portfolio_forward.1} parent=11 // pred_check
        %p539 = pneg %p390
      $region74: #{alpha_portfolio_forward.1} parent=11 // pred_check_branch
        %541 = sbr.rel (%p539) target = $region76
      $region75: #{alpha_portfolio_forward.1} parent=11 // pred_region
        _
      $region76: #{alpha_portfolio_forward.1} parent=11 // pred_fallthru
        _
      // Predicated region
      $region77: #{alpha_portfolio_forward.1} parent=11 // pred_check
        %p542 = pneg %p411
      $region78: #{alpha_portfolio_forward.1} parent=11 // pred_check_branch
        %544 = sbr.rel (%p542) target = $region80
      $region79: #{alpha_portfolio_forward.1} parent=11 // pred_region
        _
      $region80: #{alpha_portfolio_forward.1} parent=11 // pred_fallthru
        _
      // Predicated region
      $region81: #{alpha_portfolio_forward.1} parent=11 // pred_check
        %p545 = pneg %p432
      $region82: #{alpha_portfolio_forward.1} parent=11 // pred_check_branch
        %547 = sbr.rel (%p545) target = $region84
      $region83: #{alpha_portfolio_forward.1} parent=11 // pred_region
        _
      $region84: #{alpha_portfolio_forward.1} parent=11 // pred_fallthru
        _
      // Predicated region
      $region85: #{alpha_portfolio_forward.1} parent=11 // pred_check
        %p548 = pneg %p453
      $region86: #{alpha_portfolio_forward.1} parent=11 // pred_check_branch
        %550 = sbr.rel (%p548) target = $region88
      $region87: #{alpha_portfolio_forward.1} parent=11 // pred_region
        _
      $region88: #{alpha_portfolio_forward.1} parent=11 // pred_fallthru
        _
    $region12: #{alpha_portfolio_forward.1} parent=5 // pred_fallthru
      _
    %p551 = scmp.lt.s32.totalorder %s28, 2
    // Predicated region
    $region89: #{alpha_portfolio_forward.1} parent=5 // pred_check
      %p552 = pneg %p551
    $region90: #{alpha_portfolio_forward.1} parent=5 // pred_check_branch
      %554 = sbr.rel (%p552) target = $region92
    $region91: #{alpha_portfolio_forward.1} parent=5 // pred_region
      // Predicated region
      $region93: #{alpha_portfolio_forward.1} parent=91 // pred_check
        %p555 = pneg %p48
      $region94: #{alpha_portfolio_forward.1} parent=91 // pred_check_branch
        %557 = sbr.rel (%p555) target = $region96
      $region95: #{alpha_portfolio_forward.1} parent=91 // pred_region
        %p558 = scmp.lt.s32.totalorder %s28, 1
        %s559 = scalar_select %p558, %s28, 1
        %s560 = smul.addr %s559, 4
        %s561 = smul.addr %s560, 8
        %s562 = scalar_lea.vmem %s0, %s561
      $region96: #{alpha_portfolio_forward.1} parent=91 // pred_fallthru
        _
    $region92: #{alpha_portfolio_forward.1} parent=5 // pred_fallthru
      _
    %p563 = scmp.le.s32.totalorder 1, %s28
    %p564 = scmp.lt.s32.totalorder %s28, 3
    %p565 = pnand %p563, %p564
    %p566 = pneg %p565
    // Predicated region
    $region97: #{alpha_portfolio_forward.1} parent=5 // pred_check
      _
    $region98: #{alpha_portfolio_forward.1} parent=5 // pred_check_branch
      %568 = sbr.rel (%p565) target = $region100
    $region99: #{alpha_portfolio_forward.1} parent=5 // pred_region
      %s569 = ssub.s32 %s28, 1
      %p570 = scmp.lt.s32.totalorder %s33, 1
      %s571 = scalar_select %p570, %s33, 1
      %s572 = smul.addr %s571, 4
      %s573 = smul.addr %s572, 8
      %s574 = scalar_lea.vmem %s0, %s573
      %p575 = pneg %p54
      %p576 = pneg %p51
      %p577 = pneg %p75
      %p578 = pneg %p72
      %p579 = pneg %p96
      %p580 = pneg %p93
      %p581 = pneg %p117
      %p582 = pneg %p114
      %p583 = pneg %p138
      %p584 = pneg %p135
      %p585 = pneg %p159
      %p586 = pneg %p156
      %p587 = pneg %p180
      %p588 = pneg %p177
      %p589 = pneg %p201
      %p590 = pneg %p198
      %p591 = pneg %p222
      %p592 = pneg %p219
      %p593 = pneg %p243
      %p594 = pneg %p240
      %p595 = pneg %p264
      %p596 = pneg %p261
      %p597 = pneg %p285
      %p598 = pneg %p282
      %p599 = pneg %p306
      %p600 = pneg %p303
      %p601 = pneg %p327
      %p602 = pneg %p324
      %p603 = pneg %p348
      %p604 = pneg %p345
      %p605 = pneg %p369
      %p606 = pneg %p366
      %p607 = pneg %p390
      %p608 = pneg %p387
      %p609 = pneg %p411
      %p610 = pneg %p408
      %p611 = pneg %p432
      %p612 = pneg %p429
      %p613 = pneg %p453
      %p614 = pneg %p450
      %p615 = pneg %p479
      %p616 = pneg %p476
      %p617 = scmp.lt.s32.totalorder %s33, 1
      %s618 = scalar_select %p617, %s33, 1
      %s619 = smul.addr %s618, 4
      %s620 = scalar_lea.vmem %s20, %s619
      %p621 = scmp.lt.s32.totalorder %s33, 1
      %s622 = scalar_select %p621, %s33, 1
      %s623 = smul.addr %s622, 4
      %s624 = smul.addr %s623, 8
      %s625 = scalar_lea.vmem %s0, %s624
      %p626 = scmp.lt.s32.totalorder %s33, 1
      %s627 = scalar_select %p626, %s33, 1
      %s628 = smul.addr %s627, 4
      %s629 = scalar_lea.vmem %s20, %s628
      %v630 = vld [vmem:[%s625] sm:$0xff]
      %v631 = vld [vmem:[%s625 + $0x8] sm:$0xff]
      %v632 = vld [vmem:[%s625 + $0x10] sm:$0xff]
      %v633 = vld [vmem:[%s625 + $0x18] sm:$0xff]
      %v634 = vld [vmem:[%s1] sm:$0xf]
      %v635 = vld [vmem:[%s2] sm:$0x1]
      %v637 = vlaneseq
      %v638 = vshrl.u32 %v637, 7
      %v639 = vsub.s32 0, %v638
      %v640 = vrot.slane %v635, %v639
      %vm642 = vcmask 31744
      %v644 = vsel %vm642, %v630, 0
      %v647 = vsel %vm642, %v631, 0
      %v650 = vsel %vm642, %v632, 0
      %v653 = vsel %vm642, %v633, 0
      %vm655 = vcmask 1043456
      %v657 = vsel %vm655, %v634, 0
      %659 = vmatprep.subr.mxu0 0.0
      %660 = vmatpush1.msra.mxu0 %v657
      %661 = vmatprep.subr.mxu0 0.0
      %662 = vmatpush1.msra.mxu0 0.0
      %663 = vmatprep.subr.mxu0 0.0
      %664 = vmatpush1.msra.mxu0 0.0
      %665 = vmatprep.subr.mxu0 0.0
      %666 = vmatpush1.msra.mxu0 0.0
      %667 = vmatprep.subr.mxu0 0.0
      %668 = vmatpush1.msra.mxu0 0.0
      %669 = vmatprep.subr.mxu0 0.0
      %670 = vmatpush1.msra.mxu0 0.0
      %671 = vmatprep.subr.mxu0 0.0
      %672 = vmatpush1.msra.mxu0 0.0
      %673 = vmatprep.subr.mxu0 0.0
      %674 = vmatpush1.msra.mxu0 0.0
      %675 = vmatprep.subr.mxu0 0.0
      %676 = vmatpush1.msra.mxu0 0.0
      %677 = vmatprep.subr.mxu0 0.0
      %678 = vmatpush1.msra.mxu0 0.0
      %679 = vmatprep.subr.mxu0 0.0
      %680 = vmatpush1.msra.mxu0 0.0
      %681 = vmatprep.subr.mxu0 0.0
      %682 = vmatpush1.msra.mxu0 0.0
      %683 = vmatprep.subr.mxu0 0.0
      %684 = vmatpush1.msra.mxu0 0.0
      %685 = vmatprep.subr.mxu0 0.0
      %686 = vmatpush1.msra.mxu0 0.0
      %687 = vmatprep.subr.mxu0 0.0
      %688 = vmatpush1.msra.mxu0 0.0
      %689 = vmatprep.subr.mxu0 0.0
      %690 = vmatpush1.msra.mxu0 0.0
      %691 = vmatprep.subr.mxu0 0.0
      %692 = vmatpush1.msra.mxu0 0.0
      %693 = vmatprep.subr.mxu0 0.0
      %694 = vmatpush1.msra.mxu0 0.0
      %695 = vmatprep.subr.mxu0 0.0
      %696 = vmatpush1.msra.mxu0 0.0
      %697 = vmatprep.subr.mxu0 0.0
      %698 = vmatpush1.msra.mxu0 0.0
      %699 = vmatprep.subr.mxu0 0.0
      %700 = vmatpush1.msra.mxu0 0.0
      %701 = vmatprep.subr.mxu0 0.0
      %702 = vmatpush1.msra.mxu0 0.0
      %703 = vmatprep.subr.mxu0 0.0
      %704 = vmatpush1.msra.mxu0 0.0
      %705 = vmatprep.subr.mxu0 0.0
      %706 = vmatpush1.msra.mxu0 0.0
      %707 = vmatprep.subr.mxu0 0.0
      %708 = vmatpush1.msra.mxu0 0.0
      %709 = vmatprep.subr.mxu0 0.0
      %710 = vmatpush1.msra.mxu0 0.0
      %711 = vmatprep.subr.mxu0 0.0
      %712 = vmatpush1.msra.mxu0 0.0
      %713 = vmatprep.subr.mxu0 0.0
      %714 = vmatpush1.msra.mxu0 0.0
      %715 = vmatprep.subr.mxu0 0.0
      %716 = vmatpush1.msra.mxu0 0.0
      %717 = vmatprep.subr.mxu0 0.0
      %718 = vmatpush1.msra.mxu0 0.0
      %719 = vmatprep.subr.mxu0 0.0
      %720 = vmatpush1.msra.mxu0 0.0
      %721 = vmatprep.subr.mxu0 0.0
      %722 = vmatpush1.msra.mxu0 0.0
      %723 = vmatprep.mubr.f32.mxu0 0.0
      %724 = vmatmul.mubr.f32.gmra.mrb[0].mxu0 %v644
      %v725 = vpop.f32.mrb[0].mxu0
      %v726 = vadd.f32 %v640, %v725
      %v727 = vpop.f32.mrb[0].mxu0
      %728 = vmatprep.mubr.f32.mxu0 0.0
      %729 = vmatmul.mubr.f32.gmra.mrb[0].mxu0 %v647
      %v730 = vpop.f32.mrb[0].mxu0
      %v731 = vadd.f32 %v640, %v730
      %v732 = vpop.f32.mrb[0].mxu0
      %733 = vmatprep.mubr.f32.mxu0 0.0
      %734 = vmatmul.mubr.f32.gmra.mrb[0].mxu0 %v650
      %v735 = vpop.f32.mrb[0].mxu0
      %v736 = vadd.f32 %v640, %v735
      %v737 = vpop.f32.mrb[0].mxu0
      %738 = vmatprep.mubr.f32.mxu0 0.0
      %739 = vmatmul.mubr.f32.gmra.mrb[0].mxu0 %v653
      %v740 = vpop.f32.mrb[0].mxu0
      %v741 = vadd.f32 %v640, %v740
      %v742 = vpop.f32.mrb[0].mxu0
      %743 = vdwg.mxu0
      %v744 = vld [vmem:[%s3] sm:$0xff]
      %v745 = vadd.f32 %v726, %v744
      %v746 = vadd.f32 %v731, %v744
      %v747 = vadd.f32 %v736, %v744
      %v748 = vadd.f32 %v741, %v744
      %v749 = vld [vmem:[%s4] sm:$0xff]
      %v750 = vld [vmem:[%s4 + $0x8] sm:$0xff]
      %v751 = vld [vmem:[%s4 + $0x10] sm:$0xff]
      %v752 = vld [vmem:[%s4 + $0x18] sm:$0xff]
      %v753 = vld [vmem:[%s5] sm:$0x1]
      %v754 = vld [vmem:[%s6] sm:$0xff]
      %v755 = vld [vmem:[%s6 + $0x8] sm:$0xff]
      %v756 = vld [vmem:[%s6 + $0x10] sm:$0xff]
      %v757 = vld [vmem:[%s6 + $0x18] sm:$0xff]
      %v758 = vld [vmem:[%s7] sm:$0x1]
      %v760 = vlaneseq
      %v761 = vshrl.u32 %v760, 7
      %v762 = vsub.s32 0, %v761
      %v763 = vrot.slane %v753, %v762
      %vm765 = vcmask 261120
      %v767 = vsel %vm765, %v745, 0
      %v770 = vsel %vm765, %v746, 0
      %v773 = vsel %vm765, %v747, 0
      %v776 = vsel %vm765, %v748, 0
      %778 = vmatprep.subr.mxu0 0.0
      %779 = vmatpush1.msra.mxu0 %v749
      %780 = vmatprep.subr.mxu0 0.0
      %781 = vmatpush1.msra.mxu0 %v750
      %782 = vmatprep.subr.mxu0 0.0
      %783 = vmatpush1.msra.mxu0 %v751
      %784 = vmatprep.subr.mxu0 0.0
      %785 = vmatpush1.msra.mxu0 %v752
      %786 = vmatprep.subr.mxu0 0.0
      %787 = vmatpush1.msra.mxu0 0.0
      %788 = vmatprep.subr.mxu0 0.0
      %789 = vmatpush1.msra.mxu0 0.0
      %790 = vmatprep.subr.mxu0 0.0
      %791 = vmatpush1.msra.mxu0 0.0
      %792 = vmatprep.subr.mxu0 0.0
      %793 = vmatpush1.msra.mxu0 0.0
      %794 = vmatprep.subr.mxu0 0.0
      %795 = vmatpush1.msra.mxu0 0.0
      %796 = vmatprep.subr.mxu0 0.0
      %797 = vmatpush1.msra.mxu0 0.0
      %798 = vmatprep.subr.mxu0 0.0
      %799 = vmatpush1.msra.mxu0 0.0
      %800 = vmatprep.subr.mxu0 0.0
      %801 = vmatpush1.msra.mxu0 0.0
      %802 = vmatprep.subr.mxu0 0.0
      %803 = vmatpush1.msra.mxu0 0.0
      %804 = vmatprep.subr.mxu0 0.0
      %805 = vmatpush1.msra.mxu0 0.0
      %806 = vmatprep.subr.mxu0 0.0
      %807 = vmatpush1.msra.mxu0 0.0
      %808 = vmatprep.subr.mxu0 0.0
      %809 = vmatpush1.msra.mxu0 0.0
      %810 = vmatprep.subr.mxu0 0.0
      %811 = vmatpush1.msra.mxu0 0.0
      %812 = vmatprep.subr.mxu0 0.0
      %813 = vmatpush1.msra.mxu0 0.0
      %814 = vmatprep.subr.mxu0 0.0
      %815 = vmatpush1.msra.mxu0 0.0
      %816 = vmatprep.subr.mxu0 0.0
      %817 = vmatpush1.msra.mxu0 0.0
      %818 = vmatprep.subr.mxu0 0.0
      %819 = vmatpush1.msra.mxu0 0.0
      %820 = vmatprep.subr.mxu0 0.0
      %821 = vmatpush1.msra.mxu0 0.0
      %822 = vmatprep.subr.mxu0 0.0
      %823 = vmatpush1.msra.mxu0 0.0
      %824 = vmatprep.subr.mxu0 0.0
      %825 = vmatpush1.msra.mxu0 0.0
      %826 = vmatprep.subr.mxu0 0.0
      %827 = vmatpush1.msra.mxu0 0.0
      %828 = vmatprep.subr.mxu0 0.0
      %829 = vmatpush1.msra.mxu0 0.0
      %830 = vmatprep.subr.mxu0 0.0
      %831 = vmatpush1.msra.mxu0 0.0
      %832 = vmatprep.subr.mxu0 0.0
      %833 = vmatpush1.msra.mxu0 0.0
      %834 = vmatprep.subr.mxu0 0.0
      %835 = vmatpush1.msra.mxu0 0.0
      %836 = vmatprep.subr.mxu0 0.0
      %837 = vmatpush1.msra.mxu0 0.0
      %838 = vmatprep.subr.mxu0 0.0
      %839 = vmatpush1.msra.mxu0 0.0
      %840 = vmatprep.subr.mxu0 0.0
      %841 = vmatpush1.msra.mxu0 0.0
      %842 = vmatprep.mubr.f32.mxu0 0.0
      %843 = vmatmul.mubr.f32.gmra.mrb[0].mxu0 %v767
      %v844 = vpop.f32.mrb[0].mxu0
      %v845 = vadd.f32 %v763, %v844
      %v846 = vpop.f32.mrb[0].mxu0
      %847 = vmatprep.mubr.f32.mxu0 0.0
      %848 = vmatmul.mubr.f32.gmra.mrb[0].mxu0 %v770
      %v849 = vpop.f32.mrb[0].mxu0
      %v850 = vadd.f32 %v763, %v849
      %v851 = vpop.f32.mrb[0].mxu0
      %852 = vmatprep.mubr.f32.mxu0 0.0
      %853 = vmatmul.mubr.f32.gmra.mrb[0].mxu0 %v773
      %v854 = vpop.f32.mrb[0].mxu0
      %v855 = vadd.f32 %v763, %v854
      %v856 = vpop.f32.mrb[0].mxu0
      %857 = vmatprep.mubr.f32.mxu0 0.0
      %858 = vmatmul.mubr.f32.gmra.mrb[0].mxu0 %v776
      %v859 = vpop.f32.mrb[0].mxu0
      %v860 = vadd.f32 %v763, %v859
      %v861 = vpop.f32.mrb[0].mxu0
      %862 = vdwg.mxu0
      %864 = vrot.lane.b32.xlu0 %v845, 96
      %v865 = vpop.permute.xlu0 %864
      %vm866 = vcmask 130048
      %v867 = vsel %vm866, %v845, 0
      %v869 = vsel %vm866, %v865, 0
      %871 = vmatprep.subr.mxu0 0.0
      %872 = vmatpush1.xpose.msra.mxu0 %v869
      %873 = vmatprep.subr.mxu0 0.0
      %874 = vmatpush1.xpose.msra.mxu0 0.0
      %875 = vmatprep.subr.mxu0 0.0
      %876 = vmatpush1.xpose.msra.mxu0 0.0
      %877 = vmatprep.subr.mxu0 0.0
      %878 = vmatpush1.xpose.msra.mxu0 0.0
      %879 = vmatprep.subr.mxu0 0.0
      %880 = vmatpush1.xpose.msra.mxu0 0.0
      %881 = vmatprep.subr.mxu0 0.0
      %882 = vmatpush1.xpose.msra.mxu0 0.0
      %883 = vmatprep.subr.mxu0 0.0
      %884 = vmatpush1.xpose.msra.mxu0 0.0
      %885 = vmatprep.subr.mxu0 0.0
      %886 = vmatpush1.xpose.msra.mxu0 0.0
      %887 = vmatprep.subr.mxu0 0.0
      %888 = vmatpush1.xpose.msra.mxu0 0.0
      %889 = vmatprep.subr.mxu0 0.0
      %890 = vmatpush1.xpose.msra.mxu0 0.0
      %891 = vmatprep.subr.mxu0 0.0
      %892 = vmatpush1.xpose.msra.mxu0 0.0
      %893 = vmatprep.subr.mxu0 0.0
      %894 = vmatpush1.xpose.msra.mxu0 0.0
      %895 = vmatprep.subr.mxu0 0.0
      %896 = vmatpush1.xpose.msra.mxu0 0.0
      %897 = vmatprep.subr.mxu0 0.0
      %898 = vmatpush1.xpose.msra.mxu0 0.0
      %899 = vmatprep.subr.mxu0 0.0
      %900 = vmatpush1.xpose.msra.mxu0 0.0
      %901 = vmatprep.subr.mxu0 0.0
      %902 = vmatpush1.xpose.msra.mxu0 0.0
      %903 = vmatprep.subr.mxu0 0.0
      %904 = vmatpush1.xpose.msra.mxu0 0.0
      %905 = vmatprep.subr.mxu0 0.0
      %906 = vmatpush1.xpose.msra.mxu0 0.0
      %907 = vmatprep.subr.mxu0 0.0
      %908 = vmatpush1.xpose.msra.mxu0 0.0
      %909 = vmatprep.subr.mxu0 0.0
      %910 = vmatpush1.xpose.msra.mxu0 0.0
      %911 = vmatprep.subr.mxu0 0.0
      %912 = vmatpush1.xpose.msra.mxu0 0.0
      %913 = vmatprep.subr.mxu0 0.0
      %914 = vmatpush1.xpose.msra.mxu0 0.0
      %915 = vmatprep.subr.mxu0 0.0
      %916 = vmatpush1.xpose.msra.mxu0 0.0
      %917 = vmatprep.subr.mxu0 0.0
      %918 = vmatpush1.xpose.msra.mxu0 0.0
      %919 = vmatprep.subr.mxu0 0.0
      %920 = vmatpush1.xpose.msra.mxu0 0.0
      %921 = vmatprep.subr.mxu0 0.0
      %922 = vmatpush1.xpose.msra.mxu0 0.0
      %923 = vmatprep.subr.mxu0 0.0
      %924 = vmatpush1.xpose.msra.mxu0 0.0
      %925 = vmatprep.subr.mxu0 0.0
      %926 = vmatpush1.xpose.msra.mxu0 0.0
      %927 = vmatprep.subr.mxu0 0.0
      %928 = vmatpush1.xpose.msra.mxu0 0.0
      %929 = vmatprep.subr.mxu0 0.0
      %930 = vmatpush1.xpose.msra.mxu0 0.0
      %931 = vmatprep.subr.mxu0 0.0
      %932 = vmatpush1.xpose.msra.mxu0 0.0
      %933 = vmatprep.subr.mxu0 0.0
      %934 = vmatpush1.xpose.msra.mxu0 0.0
      %935 = vmatprep.mubr.f32.mxu0 0.0
      %936 = vmatmul.mubr.f32.gmra.mrb[0].mxu0 %v867
      %v937 = vpop.f32.mrb[0].mxu0
      %v938 = vadd.f32 0.0, %v937
      %v939 = vpop.f32.mrb[0].mxu0
      %940 = vdwg.mxu0
      %942 = vrot.lane.b32.xlu0 %v850, 96
      %v943 = vpop.permute.xlu0 %942
      %v944 = vsel %vm866, %v850, 0
      %v946 = vsel %vm866, %v943, 0
      %948 = vmatprep.subr.mxu0 0.0
      %949 = vmatpush1.xpose.msra.mxu0 %v946
      %950 = vmatprep.subr.mxu0 0.0
      %951 = vmatpush1.xpose.msra.mxu0 0.0
      %952 = vmatprep.subr.mxu0 0.0
      %953 = vmatpush1.xpose.msra.mxu0 0.0
      %954 = vmatprep.subr.mxu0 0.0
      %955 = vmatpush1.xpose.msra.mxu0 0.0
      %956 = vmatprep.subr.mxu0 0.0
      %957 = vmatpush1.xpose.msra.mxu0 0.0
      %958 = vmatprep.subr.mxu0 0.0
      %959 = vmatpush1.xpose.msra.mxu0 0.0
      %960 = vmatprep.subr.mxu0 0.0
      %961 = vmatpush1.xpose.msra.mxu0 0.0
      %962 = vmatprep.subr.mxu0 0.0
      %963 = vmatpush1.xpose.msra.mxu0 0.0
      %964 = vmatprep.subr.mxu0 0.0
      %965 = vmatpush1.xpose.msra.mxu0 0.0
      %966 = vmatprep.subr.mxu0 0.0
      %967 = vmatpush1.xpose.msra.mxu0 0.0
      %968 = vmatprep.subr.mxu0 0.0
      %969 = vmatpush1.xpose.msra.mxu0 0.0
      %970 = vmatprep.subr.mxu0 0.0
      %971 = vmatpush1.xpose.msra.mxu0 0.0
      %972 = vmatprep.subr.mxu0 0.0
      %973 = vmatpush1.xpose.msra.mxu0 0.0
      %974 = vmatprep.subr.mxu0 0.0
      %975 = vmatpush1.xpose.msra.mxu0 0.0
      %976 = vmatprep.subr.mxu0 0.0
      %977 = vmatpush1.xpose.msra.mxu0 0.0
      %978 = vmatprep.subr.mxu0 0.0
      %979 = vmatpush1.xpose.msra.mxu0 0.0
      %980 = vmatprep.subr.mxu0 0.0
      %981 = vmatpush1.xpose.msra.mxu0 0.0
      %982 = vmatprep.subr.mxu0 0.0
      %983 = vmatpush1.xpose.msra.mxu0 0.0
      %984 = vmatprep.subr.mxu0 0.0
      %985 = vmatpush1.xpose.msra.mxu0 0.0
      %986 = vmatprep.subr.mxu0 0.0
      %987 = vmatpush1.xpose.msra.mxu0 0.0
      %988 = vmatprep.subr.mxu0 0.0
      %989 = vmatpush1.xpose.msra.mxu0 0.0
      %990 = vmatprep.subr.mxu0 0.0
      %991 = vmatpush1.xpose.msra.mxu0 0.0
      %992 = vmatprep.subr.mxu0 0.0
      %993 = vmatpush1.xpose.msra.mxu0 0.0
      %994 = vmatprep.subr.mxu0 0.0
      %995 = vmatpush1.xpose.msra.mxu0 0.0
      %996 = vmatprep.subr.mxu0 0.0
      %997 = vmatpush1.xpose.msra.mxu0 0.0
      %998 = vmatprep.subr.mxu0 0.0
      %999 = vmatpush1.xpose.msra.mxu0 0.0
      %1000 = vmatprep.subr.mxu0 0.0
      %1001 = vmatpush1.xpose.msra.mxu0 0.0
      %1002 = vmatprep.subr.mxu0 0.0
      %1003 = vmatpush1.xpose.msra.mxu0 0.0
      %1004 = vmatprep.subr.mxu0 0.0
      %1005 = vmatpush1.xpose.msra.mxu0 0.0
      %1006 = vmatprep.subr.mxu0 0.0
      %1007 = vmatpush1.xpose.msra.mxu0 0.0
      %1008 = vmatprep.subr.mxu0 0.0
      %1009 = vmatpush1.xpose.msra.mxu0 0.0
      %1010 = vmatprep.subr.mxu0 0.0
      %1011 = vmatpush1.xpose.msra.mxu0 0.0
      %1012 = vmatprep.mubr.f32.mxu0 0.0
      %1013 = vmatmul.mubr.f32.gmra.mrb[0].mxu0 %v944
      %v1014 = vpop.f32.mrb[0].mxu0
      %v1015 = vadd.f32 0.0, %v1014
      %v1016 = vpop.f32.mrb[0].mxu0
      %1017 = vdwg.mxu0
      %1019 = vrot.lane.b32.xlu0 %v855, 96
      %v1020 = vpop.permute.xlu0 %1019
      %v1021 = vsel %vm866, %v855, 0
      %v1023 = vsel %vm866, %v1020, 0
      %1025 = vmatprep.subr.mxu0 0.0
      %1026 = vmatpush1.xpose.msra.mxu0 %v1023
      %1027 = vmatprep.subr.mxu0 0.0
      %1028 = vmatpush1.xpose.msra.mxu0 0.0
      %1029 = vmatprep.subr.mxu0 0.0
      %1030 = vmatpush1.xpose.msra.mxu0 0.0
      %1031 = vmatprep.subr.mxu0 0.0
      %1032 = vmatpush1.xpose.msra.mxu0 0.0
      %1033 = vmatprep.subr.mxu0 0.0
      %1034 = vmatpush1.xpose.msra.mxu0 0.0
      %1035 = vmatprep.subr.mxu0 0.0
      %1036 = vmatpush1.xpose.msra.mxu0 0.0
      %1037 = vmatprep.subr.mxu0 0.0
      %1038 = vmatpush1.xpose.msra.mxu0 0.0
      %1039 = vmatprep.subr.mxu0 0.0
      %1040 = vmatpush1.xpose.msra.mxu0 0.0
      %1041 = vmatprep.subr.mxu0 0.0
      %1042 = vmatpush1.xpose.msra.mxu0 0.0
      %1043 = vmatprep.subr.mxu0 0.0
      %1044 = vmatpush1.xpose.msra.mxu0 0.0
      %1045 = vmatprep.subr.mxu0 0.0
      %1046 = vmatpush1.xpose.msra.mxu0 0.0
      %1047 = vmatprep.subr.mxu0 0.0
      %1048 = vmatpush1.xpose.msra.mxu0 0.0
      %1049 = vmatprep.subr.mxu0 0.0
      %1050 = vmatpush1.xpose.msra.mxu0 0.0
      %1051 = vmatprep.subr.mxu0 0.0
      %1052 = vmatpush1.xpose.msra.mxu0 0.0
      %1053 = vmatprep.subr.mxu0 0.0
      %1054 = vmatpush1.xpose.msra.mxu0 0.0
      %1055 = vmatprep.subr.mxu0 0.0
      %1056 = vmatpush1.xpose.msra.mxu0 0.0
      %1057 = vmatprep.subr.mxu0 0.0
      %1058 = vmatpush1.xpose.msra.mxu0 0.0
      %1059 = vmatprep.subr.mxu0 0.0
      %1060 = vmatpush1.xpose.msra.mxu0 0.0
      %1061 = vmatprep.subr.mxu0 0.0
      %1062 = vmatpush1.xpose.msra.mxu0 0.0
      %1063 = vmatprep.subr.mxu0 0.0
      %1064 = vmatpush1.xpose.msra.mxu0 0.0
      %1065 = vmatprep.subr.mxu0 0.0
      %1066 = vmatpush1.xpose.msra.mxu0 0.0
      %1067 = vmatprep.subr.mxu0 0.0
      %1068 = vmatpush1.xpose.msra.mxu0 0.0
      %1069 = vmatprep.subr.mxu0 0.0
      %1070 = vmatpush1.xpose.msra.mxu0 0.0
      %1071 = vmatprep.subr.mxu0 0.0
      %1072 = vmatpush1.xpose.msra.mxu0 0.0
      %1073 = vmatprep.subr.mxu0 0.0
      %1074 = vmatpush1.xpose.msra.mxu0 0.0
      %1075 = vmatprep.subr.mxu0 0.0
      %1076 = vmatpush1.xpose.msra.mxu0 0.0
      %1077 = vmatprep.subr.mxu0 0.0
      %1078 = vmatpush1.xpose.msra.mxu0 0.0
      %1079 = vmatprep.subr.mxu0 0.0
      %1080 = vmatpush1.xpose.msra.mxu0 0.0
      %1081 = vmatprep.subr.mxu0 0.0
      %1082 = vmatpush1.xpose.msra.mxu0 0.0
      %1083 = vmatprep.subr.mxu0 0.0
      %1084 = vmatpush1.xpose.msra.mxu0 0.0
      %1085 = vmatprep.subr.mxu0 0.0
      %1086 = vmatpush1.xpose.msra.mxu0 0.0
      %1087 = vmatprep.subr.mxu0 0.0
      %1088 = vmatpush1.xpose.msra.mxu0 0.0
      %1089 = vmatprep.mubr.f32.mxu0 0.0
      %1090 = vmatmul.mubr.f32.gmra.mrb[0].mxu0 %v1021
      %v1091 = vpop.f32.mrb[0].mxu0
      %v1092 = vadd.f32 0.0, %v1091
      %v1093 = vpop.f32.mrb[0].mxu0
      %1094 = vdwg.mxu0
      %1096 = vrot.lane.b32.xlu0 %v860, 96
      %v1097 = vpop.permute.xlu0 %1096
      %v1098 = vsel %vm866, %v860, 0
      %v1100 = vsel %vm866, %v1097, 0
      %1102 = vmatprep.subr.mxu0 0.0
      %1103 = vmatpush1.xpose.msra.mxu0 %v1100
      %1104 = vmatprep.subr.mxu0 0.0
      %1105 = vmatpush1.xpose.msra.mxu0 0.0
      %1106 = vmatprep.subr.mxu0 0.0
      %1107 = vmatpush1.xpose.msra.mxu0 0.0
      %1108 = vmatprep.subr.mxu0 0.0
      %1109 = vmatpush1.xpose.msra.mxu0 0.0
      %1110 = vmatprep.subr.mxu0 0.0
      %1111 = vmatpush1.xpose.msra.mxu0 0.0
      %1112 = vmatprep.subr.mxu0 0.0
      %1113 = vmatpush1.xpose.msra.mxu0 0.0
      %1114 = vmatprep.subr.mxu0 0.0
      %1115 = vmatpush1.xpose.msra.mxu0 0.0
      %1116 = vmatprep.subr.mxu0 0.0
      %1117 = vmatpush1.xpose.msra.mxu0 0.0
      %1118 = vmatprep.subr.mxu0 0.0
      %1119 = vmatpush1.xpose.msra.mxu0 0.0
      %1120 = vmatprep.subr.mxu0 0.0
      %1121 = vmatpush1.xpose.msra.mxu0 0.0
      %1122 = vmatprep.subr.mxu0 0.0
      %1123 = vmatpush1.xpose.msra.mxu0 0.0
      %1124 = vmatprep.subr.mxu0 0.0
      %1125 = vmatpush1.xpose.msra.mxu0 0.0
      %1126 = vmatprep.subr.mxu0 0.0
      %1127 = vmatpush1.xpose.msra.mxu0 0.0
      %1128 = vmatprep.subr.mxu0 0.0
      %1129 = vmatpush1.xpose.msra.mxu0 0.0
      %1130 = vmatprep.subr.mxu0 0.0
      %1131 = vmatpush1.xpose.msra.mxu0 0.0
      %1132 = vmatprep.subr.mxu0 0.0
      %1133 = vmatpush1.xpose.msra.mxu0 0.0
      %1134 = vmatprep.subr.mxu0 0.0
      %1135 = vmatpush1.xpose.msra.mxu0 0.0
      %1136 = vmatprep.subr.mxu0 0.0
      %1137 = vmatpush1.xpose.msra.mxu0 0.0
      %1138 = vmatprep.subr.mxu0 0.0
      %1139 = vmatpush1.xpose.msra.mxu0 0.0
      %1140 = vmatprep.subr.mxu0 0.0
      %1141 = vmatpush1.xpose.msra.mxu0 0.0
      %1142 = vmatprep.subr.mxu0 0.0
      %1143 = vmatpush1.xpose.msra.mxu0 0.0
      %1144 = vmatprep.subr.mxu0 0.0
      %1145 = vmatpush1.xpose.msra.mxu0 0.0
      %1146 = vmatprep.subr.mxu0 0.0
      %1147 = vmatpush1.xpose.msra.mxu0 0.0
      %1148 = vmatprep.subr.mxu0 0.0
      %1149 = vmatpush1.xpose.msra.mxu0 0.0
      %1150 = vmatprep.subr.mxu0 0.0
      %1151 = vmatpush1.xpose.msra.mxu0 0.0
      %1152 = vmatprep.subr.mxu0 0.0
      %1153 = vmatpush1.xpose.msra.mxu0 0.0
      %1154 = vmatprep.subr.mxu0 0.0
      %1155 = vmatpush1.xpose.msra.mxu0 0.0
      %1156 = vmatprep.subr.mxu0 0.0
      %1157 = vmatpush1.xpose.msra.mxu0 0.0
      %1158 = vmatprep.subr.mxu0 0.0
      %1159 = vmatpush1.xpose.msra.mxu0 0.0
      %1160 = vmatprep.subr.mxu0 0.0
      %1161 = vmatpush1.xpose.msra.mxu0 0.0
      %1162 = vmatprep.subr.mxu0 0.0
      %1163 = vmatpush1.xpose.msra.mxu0 0.0
      %1164 = vmatprep.subr.mxu0 0.0
      %1165 = vmatpush1.xpose.msra.mxu0 0.0
      %1166 = vmatprep.mubr.f32.mxu0 0.0
      %1167 = vmatmul.mubr.f32.gmra.mrb[0].mxu0 %v1098
      %v1168 = vpop.f32.mrb[0].mxu0
      %v1169 = vadd.f32 0.0, %v1168
      %v1170 = vpop.f32.mrb[0].mxu0
      %1171 = vdwg.mxu0
      %v1172 = vmul.f32 %v938, 0.25
      %v1173 = vmul.f32 %v1015, 0.25
      %v1174 = vmul.f32 %v1092, 0.25
      %v1175 = vmul.f32 %v1169, 0.25
      %vm1176 = vcmask 64512
      %v1177 = vsel %vm1176, %v1172, -inf
      %1178 = vmax.xlane.f32.xlu0 %v1177
      %v1179 = vpop.xlane.xlu0 %1178
      %v1180 = vsel %vm1176, %v1173, -inf
      %1181 = vmax.xlane.f32.xlu0 %v1180
      %v1182 = vpop.xlane.xlu0 %1181
      %v1183 = vsel %vm1176, %v1174, -inf
      %1184 = vmax.xlane.f32.xlu0 %v1183
      %v1185 = vpop.xlane.xlu0 %1184
      %v1186 = vsel %vm1176, %v1175, -inf
      %1187 = vmax.xlane.f32.xlu0 %v1186
      %v1188 = vpop.xlane.xlu0 %1187
      %v1189 = vsub.f32 %v1172, %v1179
      %v1190 = vsub.f32 %v1173, %v1182
      %v1191 = vsub.f32 %v1174, %v1185
      %v1192 = vsub.f32 %v1175, %v1188
      %v1193 = vmul.f32 %v1189, 1.442695
      %v1194 = vpow.pop %v1193
      %v1195 = vmul.f32 %v1190, 1.442695
      %v1196 = vpow.pop %v1195
      %v1197 = vmul.f32 %v1191, 1.442695
      %v1198 = vpow.pop %v1197
      %v1199 = vmul.f32 %v1192, 1.442695
      %v1200 = vpow.pop %v1199
      %v1201 = vsel %vm1176, %v1194, 0.0
      %1202 = vadd.xlane.f32.xlu0 %v1201
      %v1203 = vpop.xlane.xlu0 %1202
      %v1204 = vsel %vm1176, %v1196, 0.0
      %1205 = vadd.xlane.f32.xlu0 %v1204
      %v1206 = vpop.xlane.xlu0 %1205
      %v1207 = vsel %vm1176, %v1198, 0.0
      %1208 = vadd.xlane.f32.xlu0 %v1207
      %v1209 = vpop.xlane.xlu0 %1208
      %v1210 = vsel %vm1176, %v1200, 0.0
      %1211 = vadd.xlane.f32.xlu0 %v1210
      %v1212 = vpop.xlane.xlu0 %1211
      %v1213 = vrcp.pop %v1203
      %v1214 = vmul.f32 %v1194, %v1213
      %v1215 = vrcp.pop %v1206
      %v1216 = vmul.f32 %v1196, %v1215
      %v1217 = vrcp.pop %v1209
      %v1218 = vmul.f32 %v1198, %v1217
      %v1219 = vrcp.pop %v1212
      %v1220 = vmul.f32 %v1200, %v1219
      %1221 = vrot.lane.b32.xlu0 %v845, 64
      %v1222 = vpop.permute.xlu0 %1221
      %v1225 = vsel %vm1176, %v1214, 0
      %1227 = vmatprep.subr.mxu0 0.0
      %1228 = vmatpush1.msra.mxu0 %v1222
      %1229 = vmatprep.subr.mxu0 0.0
      %1230 = vmatpush1.msra.mxu0 0.0
      %1231 = vmatprep.subr.mxu0 0.0
      %1232 = vmatpush1.msra.mxu0 0.0
      %1233 = vmatprep.subr.mxu0 0.0
      %1234 = vmatpush1.msra.mxu0 0.0
      %1235 = vmatprep.subr.mxu0 0.0
      %1236 = vmatpush1.msra.mxu0 0.0
      %1237 = vmatprep.subr.mxu0 0.0
      %1238 = vmatpush1.msra.mxu0 0.0
      %1239 = vmatprep.subr.mxu0 0.0
      %1240 = vmatpush1.msra.mxu0 0.0
      %1241 = vmatprep.subr.mxu0 0.0
      %1242 = vmatpush1.msra.mxu0 0.0
      %1243 = vmatprep.subr.mxu0 0.0
      %1244 = vmatpush1.msra.mxu0 0.0
      %1245 = vmatprep.subr.mxu0 0.0
      %1246 = vmatpush1.msra.mxu0 0.0
      %1247 = vmatprep.subr.mxu0 0.0
      %1248 = vmatpush1.msra.mxu0 0.0
      %1249 = vmatprep.subr.mxu0 0.0
      %1250 = vmatpush1.msra.mxu0 0.0
      %1251 = vmatprep.subr.mxu0 0.0
      %1252 = vmatpush1.msra.mxu0 0.0
      %1253 = vmatprep.subr.mxu0 0.0
      %1254 = vmatpush1.msra.mxu0 0.0
      %1255 = vmatprep.subr.mxu0 0.0
      %1256 = vmatpush1.msra.mxu0 0.0
      %1257 = vmatprep.subr.mxu0 0.0
      %1258 = vmatpush1.msra.mxu0 0.0
      %1259 = vmatprep.subr.mxu0 0.0
      %1260 = vmatpush1.msra.mxu0 0.0
      %1261 = vmatprep.subr.mxu0 0.0
      %1262 = vmatpush1.msra.mxu0 0.0
      %1263 = vmatprep.subr.mxu0 0.0
      %1264 = vmatpush1.msra.mxu0 0.0
      %1265 = vmatprep.subr.mxu0 0.0
      %1266 = vmatpush1.msra.mxu0 0.0
      %1267 = vmatprep.subr.mxu0 0.0
      %1268 = vmatpush1.msra.mxu0 0.0
      %1269 = vmatprep.subr.mxu0 0.0
      %1270 = vmatpush1.msra.mxu0 0.0
      %1271 = vmatprep.subr.mxu0 0.0
      %1272 = vmatpush1.msra.mxu0 0.0
      %1273 = vmatprep.subr.mxu0 0.0
      %1274 = vmatpush1.msra.mxu0 0.0
      %1275 = vmatprep.subr.mxu0 0.0
      %1276 = vmatpush1.msra.mxu0 0.0
      %1277 = vmatprep.subr.mxu0 0.0
      %1278 = vmatpush1.msra.mxu0 0.0
      %1279 = vmatprep.subr.mxu0 0.0
      %1280 = vmatpush1.msra.mxu0 0.0
      %1281 = vmatprep.subr.mxu0 0.0
      %1282 = vmatpush1.msra.mxu0 0.0
      %1283 = vmatprep.subr.mxu0 0.0
      %1284 = vmatpush1.msra.mxu0 0.0
      %1285 = vmatprep.subr.mxu0 0.0
      %1286 = vmatpush1.msra.mxu0 0.0
      %1287 = vmatprep.subr.mxu0 0.0
      %1288 = vmatpush1.msra.mxu0 0.0
      %1289 = vmatprep.subr.mxu0 0.0
      %1290 = vmatpush1.msra.mxu0 0.0
      %1291 = vmatprep.mubr.f32.mxu0 0.0
      %1292 = vmatmul.mubr.f32.gmra.mrb[0].mxu0 %v1225
      %v1293 = vpop.f32.mrb[0].mxu0
      %v1294 = vadd.f32 0.0, %v1293
      %v1295 = vpop.f32.mrb[0].mxu0
      %1296 = vdwg.mxu0
      %1297 = vrot.lane.b32.xlu0 %v850, 64
      %v1298 = vpop.permute.xlu0 %1297
      %v1301 = vsel %vm1176, %v1216, 0
      %1303 = vmatprep.subr.mxu0 0.0
      %1304 = vmatpush1.msra.mxu0 %v1298
      %1305 = vmatprep.subr.mxu0 0.0
      %1306 = vmatpush1.msra.mxu0 0.0
      %1307 = vmatprep.subr.mxu0 0.0
      %1308 = vmatpush1.msra.mxu0 0.0
      %1309 = vmatprep.subr.mxu0 0.0
      %1310 = vmatpush1.msra.mxu0 0.0
      %1311 = vmatprep.subr.mxu0 0.0
      %1312 = vmatpush1.msra.mxu0 0.0
      %1313 = vmatprep.subr.mxu0 0.0
      %1314 = vmatpush1.msra.mxu0 0.0
      %1315 = vmatprep.subr.mxu0 0.0
      %1316 = vmatpush1.msra.mxu0 0.0
      %1317 = vmatprep.subr.mxu0 0.0
      %1318 = vmatpush1.msra.mxu0 0.0
      %1319 = vmatprep.subr.mxu0 0.0
      %1320 = vmatpush1.msra.mxu0 0.0
      %1321 = vmatprep.subr.mxu0 0.0
      %1322 = vmatpush1.msra.mxu0 0.0
      %1323 = vmatprep.subr.mxu0 0.0
      %1324 = vmatpush1.msra.mxu0 0.0
      %1325 = vmatprep.subr.mxu0 0.0
      %1326 = vmatpush1.msra.mxu0 0.0
      %1327 = vmatprep.subr.mxu0 0.0
      %1328 = vmatpush1.msra.mxu0 0.0
      %1329 = vmatprep.subr.mxu0 0.0
      %1330 = vmatpush1.msra.mxu0 0.0
      %1331 = vmatprep.subr.mxu0 0.0
      %1332 = vmatpush1.msra.mxu0 0.0
      %1333 = vmatprep.subr.mxu0 0.0
      %1334 = vmatpush1.msra.mxu0 0.0
      %1335 = vmatprep.subr.mxu0 0.0
      %1336 = vmatpush1.msra.mxu0 0.0
      %1337 = vmatprep.subr.mxu0 0.0
      %1338 = vmatpush1.msra.mxu0 0.0
      %1339 = vmatprep.subr.mxu0 0.0
      %1340 = vmatpush1.msra.mxu0 0.0
      %1341 = vmatprep.subr.mxu0 0.0
      %1342 = vmatpush1.msra.mxu0 0.0
      %1343 = vmatprep.subr.mxu0 0.0
      %1344 = vmatpush1.msra.mxu0 0.0
      %1345 = vmatprep.subr.mxu0 0.0
      %1346 = vmatpush1.msra.mxu0 0.0
      %1347 = vmatprep.subr.mxu0 0.0
      %1348 = vmatpush1.msra.mxu0 0.0
      %1349 = vmatprep.subr.mxu0 0.0
      %1350 = vmatpush1.msra.mxu0 0.0
      %1351 = vmatprep.subr.mxu0 0.0
      %1352 = vmatpush1.msra.mxu0 0.0
      %1353 = vmatprep.subr.mxu0 0.0
      %1354 = vmatpush1.msra.mxu0 0.0
      %1355 = vmatprep.subr.mxu0 0.0
      %1356 = vmatpush1.msra.mxu0 0.0
      %1357 = vmatprep.subr.mxu0 0.0
      %1358 = vmatpush1.msra.mxu0 0.0
      %1359 = vmatprep.subr.mxu0 0.0
      %1360 = vmatpush1.msra.mxu0 0.0
      %1361 = vmatprep.subr.mxu0 0.0
      %1362 = vmatpush1.msra.mxu0 0.0
      %1363 = vmatprep.subr.mxu0 0.0
      %1364 = vmatpush1.msra.mxu0 0.0
      %1365 = vmatprep.subr.mxu0 0.0
      %1366 = vmatpush1.msra.mxu0 0.0
      %1367 = vmatprep.mubr.f32.mxu0 0.0
      %1368 = vmatmul.mubr.f32.gmra.mrb[0].mxu0 %v1301
      %v1369 = vpop.f32.mrb[0].mxu0
      %v1370 = vadd.f32 0.0, %v1369
      %v1371 = vpop.f32.mrb[0].mxu0
      %1372 = vdwg.mxu0
      %1373 = vrot.lane.b32.xlu0 %v855, 64
      %v1374 = vpop.permute.xlu0 %1373
      %v1377 = vsel %vm1176, %v1218, 0
      %1379 = vmatprep.subr.mxu0 0.0
      %1380 = vmatpush1.msra.mxu0 %v1374
      %1381 = vmatprep.subr.mxu0 0.0
      %1382 = vmatpush1.msra.mxu0 0.0
      %1383 = vmatprep.subr.mxu0 0.0
      %1384 = vmatpush1.msra.mxu0 0.0
      %1385 = vmatprep.subr.mxu0 0.0
      %1386 = vmatpush1.msra.mxu0 0.0
      %1387 = vmatprep.subr.mxu0 0.0
      %1388 = vmatpush1.msra.mxu0 0.0
      %1389 = vmatprep.subr.mxu0 0.0
      %1390 = vmatpush1.msra.mxu0 0.0
      %1391 = vmatprep.subr.mxu0 0.0
      %1392 = vmatpush1.msra.mxu0 0.0
      %1393 = vmatprep.subr.mxu0 0.0
      %1394 = vmatpush1.msra.mxu0 0.0
      %1395 = vmatprep.subr.mxu0 0.0
      %1396 = vmatpush1.msra.mxu0 0.0
      %1397 = vmatprep.subr.mxu0 0.0
      %1398 = vmatpush1.msra.mxu0 0.0
      %1399 = vmatprep.subr.mxu0 0.0
      %1400 = vmatpush1.msra.mxu0 0.0
      %1401 = vmatprep.subr.mxu0 0.0
      %1402 = vmatpush1.msra.mxu0 0.0
      %1403 = vmatprep.subr.mxu0 0.0
      %1404 = vmatpush1.msra.mxu0 0.0
      %1405 = vmatprep.subr.mxu0 0.0
      %1406 = vmatpush1.msra.mxu0 0.0
      %1407 = vmatprep.subr.mxu0 0.0
      %1408 = vmatpush1.msra.mxu0 0.0
      %1409 = vmatprep.subr.mxu0 0.0
      %1410 = vmatpush1.msra.mxu0 0.0
      %1411 = vmatprep.subr.mxu0 0.0
      %1412 = vmatpush1.msra.mxu0 0.0
      %1413 = vmatprep.subr.mxu0 0.0
      %1414 = vmatpush1.msra.mxu0 0.0
      %1415 = vmatprep.subr.mxu0 0.0
      %1416 = vmatpush1.msra.mxu0 0.0
      %1417 = vmatprep.subr.mxu0 0.0
      %1418 = vmatpush1.msra.mxu0 0.0
      %1419 = vmatprep.subr.mxu0 0.0
      %1420 = vmatpush1.msra.mxu0 0.0
      %1421 = vmatprep.subr.mxu0 0.0
      %1422 = vmatpush1.msra.mxu0 0.0
      %1423 = vmatprep.subr.mxu0 0.0
      %1424 = vmatpush1.msra.mxu0 0.0
      %1425 = vmatprep.subr.mxu0 0.0
      %1426 = vmatpush1.msra.mxu0 0.0
      %1427 = vmatprep.subr.mxu0 0.0
      %1428 = vmatpush1.msra.mxu0 0.0
      %1429 = vmatprep.subr.mxu0 0.0
      %1430 = vmatpush1.msra.mxu0 0.0
      %1431 = vmatprep.subr.mxu0 0.0
      %1432 = vmatpush1.msra.mxu0 0.0
      %1433 = vmatprep.subr.mxu0 0.0
      %1434 = vmatpush1.msra.mxu0 0.0
      %1435 = vmatprep.subr.mxu0 0.0
      %1436 = vmatpush1.msra.mxu0 0.0
      %1437 = vmatprep.subr.mxu0 0.0
      %1438 = vmatpush1.msra.mxu0 0.0
      %1439 = vmatprep.subr.mxu0 0.0
      %1440 = vmatpush1.msra.mxu0 0.0
      %1441 = vmatprep.subr.mxu0 0.0
      %1442 = vmatpush1.msra.mxu0 0.0
      %1443 = vmatprep.mubr.f32.mxu0 0.0
      %1444 = vmatmul.mubr.f32.gmra.mrb[0].mxu0 %v1377
      %v1445 = vpop.f32.mrb[0].mxu0
      %v1446 = vadd.f32 0.0, %v1445
      %v1447 = vpop.f32.mrb[0].mxu0
      %1448 = vdwg.mxu0
      %1449 = vrot.lane.b32.xlu0 %v860, 64
      %v1450 = vpop.permute.xlu0 %1449
      %v1453 = vsel %vm1176, %v1220, 0
      %1455 = vmatprep.subr.mxu0 0.0
      %1456 = vmatpush1.msra.mxu0 %v1450
      %1457 = vmatprep.subr.mxu0 0.0
      %1458 = vmatpush1.msra.mxu0 0.0
      %1459 = vmatprep.subr.mxu0 0.0
      %1460 = vmatpush1.msra.mxu0 0.0
      %1461 = vmatprep.subr.mxu0 0.0
      %1462 = vmatpush1.msra.mxu0 0.0
      %1463 = vmatprep.subr.mxu0 0.0
      %1464 = vmatpush1.msra.mxu0 0.0
      %1465 = vmatprep.subr.mxu0 0.0
      %1466 = vmatpush1.msra.mxu0 0.0
      %1467 = vmatprep.subr.mxu0 0.0
      %1468 = vmatpush1.msra.mxu0 0.0
      %1469 = vmatprep.subr.mxu0 0.0
      %1470 = vmatpush1.msra.mxu0 0.0
      %1471 = vmatprep.subr.mxu0 0.0
      %1472 = vmatpush1.msra.mxu0 0.0
      %1473 = vmatprep.subr.mxu0 0.0
      %1474 = vmatpush1.msra.mxu0 0.0
      %1475 = vmatprep.subr.mxu0 0.0
      %1476 = vmatpush1.msra.mxu0 0.0
      %1477 = vmatprep.subr.mxu0 0.0
      %1478 = vmatpush1.msra.mxu0 0.0
      %1479 = vmatprep.subr.mxu0 0.0
      %1480 = vmatpush1.msra.mxu0 0.0
      %1481 = vmatprep.subr.mxu0 0.0
      %1482 = vmatpush1.msra.mxu0 0.0
      %1483 = vmatprep.subr.mxu0 0.0
      %1484 = vmatpush1.msra.mxu0 0.0
      %1485 = vmatprep.subr.mxu0 0.0
      %1486 = vmatpush1.msra.mxu0 0.0
      %1487 = vmatprep.subr.mxu0 0.0
      %1488 = vmatpush1.msra.mxu0 0.0
      %1489 = vmatprep.subr.mxu0 0.0
      %1490 = vmatpush1.msra.mxu0 0.0
      %1491 = vmatprep.subr.mxu0 0.0
      %1492 = vmatpush1.msra.mxu0 0.0
      %1493 = vmatprep.subr.mxu0 0.0
      %1494 = vmatpush1.msra.mxu0 0.0
      %1495 = vmatprep.subr.mxu0 0.0
      %1496 = vmatpush1.msra.mxu0 0.0
      %1497 = vmatprep.subr.mxu0 0.0
      %1498 = vmatpush1.msra.mxu0 0.0
      %1499 = vmatprep.subr.mxu0 0.0
      %1500 = vmatpush1.msra.mxu0 0.0
      %1501 = vmatprep.subr.mxu0 0.0
      %1502 = vmatpush1.msra.mxu0 0.0
      %1503 = vmatprep.subr.mxu0 0.0
      %1504 = vmatpush1.msra.mxu0 0.0
      %1505 = vmatprep.subr.mxu0 0.0
      %1506 = vmatpush1.msra.mxu0 0.0
      %1507 = vmatprep.subr.mxu0 0.0
      %1508 = vmatpush1.msra.mxu0 0.0
      %1509 = vmatprep.subr.mxu0 0.0
      %1510 = vmatpush1.msra.mxu0 0.0
      %1511 = vmatprep.subr.mxu0 0.0
      %1512 = vmatpush1.msra.mxu0 0.0
      %1513 = vmatprep.subr.mxu0 0.0
      %1514 = vmatpush1.msra.mxu0 0.0
      %1515 = vmatprep.subr.mxu0 0.0
      %1516 = vmatpush1.msra.mxu0 0.0
      %1517 = vmatprep.subr.mxu0 0.0
      %1518 = vmatpush1.msra.mxu0 0.0
      %1519 = vmatprep.mubr.f32.mxu0 0.0
      %1520 = vmatmul.mubr.f32.gmra.mrb[0].mxu0 %v1453
      %v1521 = vpop.f32.mrb[0].mxu0
      %v1522 = vadd.f32 0.0, %v1521
      %v1523 = vpop.f32.mrb[0].mxu0
      %1524 = vdwg.mxu0
      %1525 = vrot.lane.b32.xlu0 %v845, 112
      %v1526 = vpop.permute.xlu0 %1525
      %1527 = vrot.lane.b32.xlu0 %v845, 80
      %v1528 = vpop.permute.xlu0 %1527
      %v1529 = vsel %vm866, %v1526, 0
      %v1531 = vsel %vm866, %v1528, 0
      %1533 = vmatprep.subr.mxu0 0.0
      %1534 = vmatpush1.xpose.msra.mxu0 %v1531
      %1535 = vmatprep.subr.mxu0 0.0
      %1536 = vmatpush1.xpose.msra.mxu0 0.0
      %1537 = vmatprep.subr.mxu0 0.0
      %1538 = vmatpush1.xpose.msra.mxu0 0.0
      %1539 = vmatprep.subr.mxu0 0.0
      %1540 = vmatpush1.xpose.msra.mxu0 0.0
      %1541 = vmatprep.subr.mxu0 0.0
      %1542 = vmatpush1.xpose.msra.mxu0 0.0
      %1543 = vmatprep.subr.mxu0 0.0
      %1544 = vmatpush1.xpose.msra.mxu0 0.0
      %1545 = vmatprep.subr.mxu0 0.0
      %1546 = vmatpush1.xpose.msra.mxu0 0.0
      %1547 = vmatprep.subr.mxu0 0.0
      %1548 = vmatpush1.xpose.msra.mxu0 0.0
      %1549 = vmatprep.subr.mxu0 0.0
      %1550 = vmatpush1.xpose.msra.mxu0 0.0
      %1551 = vmatprep.subr.mxu0 0.0
      %1552 = vmatpush1.xpose.msra.mxu0 0.0
      %1553 = vmatprep.subr.mxu0 0.0
      %1554 = vmatpush1.xpose.msra.mxu0 0.0
      %1555 = vmatprep.subr.mxu0 0.0
      %1556 = vmatpush1.xpose.msra.mxu0 0.0
      %1557 = vmatprep.subr.mxu0 0.0
      %1558 = vmatpush1.xpose.msra.mxu0 0.0
      %1559 = vmatprep.subr.mxu0 0.0
      %1560 = vmatpush1.xpose.msra.mxu0 0.0
      %1561 = vmatprep.subr.mxu0 0.0
      %1562 = vmatpush1.xpose.msra.mxu0 0.0
      %1563 = vmatprep.subr.mxu0 0.0
      %1564 = vmatpush1.xpose.msra.mxu0 0.0
      %1565 = vmatprep.subr.mxu0 0.0
      %1566 = vmatpush1.xpose.msra.mxu0 0.0
      %1567 = vmatprep.subr.mxu0 0.0
      %1568 = vmatpush1.xpose.msra.mxu0 0.0
      %1569 = vmatprep.subr.mxu0 0.0
      %1570 = vmatpush1.xpose.msra.mxu0 0.0
      %1571 = vmatprep.subr.mxu0 0.0
      %1572 = vmatpush1.xpose.msra.mxu0 0.0
      %1573 = vmatprep.subr.mxu0 0.0
      %1574 = vmatpush1.xpose.msra.mxu0 0.0
      %1575 = vmatprep.subr.mxu0 0.0
      %1576 = vmatpush1.xpose.msra.mxu0 0.0
      %1577 = vmatprep.subr.mxu0 0.0
      %1578 = vmatpush1.xpose.msra.mxu0 0.0
      %1579 = vmatprep.subr.mxu0 0.0
      %1580 = vmatpush1.xpose.msra.mxu0 0.0
      %1581 = vmatprep.subr.mxu0 0.0
      %1582 = vmatpush1.xpose.msra.mxu0 0.0
      %1583 = vmatprep.subr.mxu0 0.0
      %1584 = vmatpush1.xpose.msra.mxu0 0.0
      %1585 = vmatprep.subr.mxu0 0.0
      %1586 = vmatpush1.xpose.msra.mxu0 0.0
      %1587 = vmatprep.subr.mxu0 0.0
      %1588 = vmatpush1.xpose.msra.mxu0 0.0
      %1589 = vmatprep.subr.mxu0 0.0
      %1590 = vmatpush1.xpose.msra.mxu0 0.0
      %1591 = vmatprep.subr.mxu0 0.0
      %1592 = vmatpush1.xpose.msra.mxu0 0.0
      %1593 = vmatprep.subr.mxu0 0.0
      %1594 = vmatpush1.xpose.msra.mxu0 0.0
      %1595 = vmatprep.subr.mxu0 0.0
      %1596 = vmatpush1.xpose.msra.mxu0 0.0
      %1597 = vmatprep.mubr.f32.mxu0 0.0
      %1598 = vmatmul.mubr.f32.gmra.mrb[0].mxu0 %v1529
      %v1599 = vpop.f32.mrb[0].mxu0
      %v1600 = vadd.f32 0.0, %v1599
      %v1601 = vpop.f32.mrb[0].mxu0
      %1602 = vdwg.mxu0
      %1603 = vrot.lane.b32.xlu0 %v850, 112
      %v1604 = vpop.permute.xlu0 %1603
      %1605 = vrot.lane.b32.xlu0 %v850, 80
      %v1606 = vpop.permute.xlu0 %1605
      %v1607 = vsel %vm866, %v1604, 0
      %v1609 = vsel %vm866, %v1606, 0
      %1611 = vmatprep.subr.mxu0 0.0
      %1612 = vmatpush1.xpose.msra.mxu0 %v1609
      %1613 = vmatprep.subr.mxu0 0.0
      %1614 = vmatpush1.xpose.msra.mxu0 0.0
      %1615 = vmatprep.subr.mxu0 0.0
      %1616 = vmatpush1.xpose.msra.mxu0 0.0
      %1617 = vmatprep.subr.mxu0 0.0
      %1618 = vmatpush1.xpose.msra.mxu0 0.0
      %1619 = vmatprep.subr.mxu0 0.0
      %1620 = vmatpush1.xpose.msra.mxu0 0.0
      %1621 = vmatprep.subr.mxu0 0.0
      %1622 = vmatpush1.xpose.msra.mxu0 0.0
      %1623 = vmatprep.subr.mxu0 0.0
      %1624 = vmatpush1.xpose.msra.mxu0 0.0
      %1625 = vmatprep.subr.mxu0 0.0
      %1626 = vmatpush1.xpose.msra.mxu0 0.0
      %1627 = vmatprep.subr.mxu0 0.0
      %1628 = vmatpush1.xpose.msra.mxu0 0.0
      %1629 = vmatprep.subr.mxu0 0.0
      %1630 = vmatpush1.xpose.msra.mxu0 0.0
      %1631 = vmatprep.subr.mxu0 0.0
      %1632 = vmatpush1.xpose.msra.mxu0 0.0
      %1633 = vmatprep.subr.mxu0 0.0
      %1634 = vmatpush1.xpose.msra.mxu0 0.0
      %1635 = vmatprep.subr.mxu0 0.0
      %1636 = vmatpush1.xpose.msra.mxu0 0.0
      %1637 = vmatprep.subr.mxu0 0.0
      %1638 = vmatpush1.xpose.msra.mxu0 0.0
      %1639 = vmatprep.subr.mxu0 0.0
      %1640 = vmatpush1.xpose.msra.mxu0 0.0
      %1641 = vmatprep.subr.mxu0 0.0
      %1642 = vmatpush1.xpose.msra.mxu0 0.0
      %1643 = vmatprep.subr.mxu0 0.0
      %1644 = vmatpush1.xpose.msra.mxu0 0.0
      %1645 = vmatprep.subr.mxu0 0.0
      %1646 = vmatpush1.xpose.msra.mxu0 0.0
      %1647 = vmatprep.subr.mxu0 0.0
      %1648 = vmatpush1.xpose.msra.mxu0 0.0
      %1649 = vmatprep.subr.mxu0 0.0
      %1650 = vmatpush1.xpose.msra.mxu0 0.0
      %1651 = vmatprep.subr.mxu0 0.0
      %1652 = vmatpush1.xpose.msra.mxu0 0.0
      %1653 = vmatprep.subr.mxu0 0.0
      %1654 = vmatpush1.xpose.msra.mxu0 0.0
      %1655 = vmatprep.subr.mxu0 0.0
      %1656 = vmatpush1.xpose.msra.mxu0 0.0
      %1657 = vmatprep.subr.mxu0 0.0
      %1658 = vmatpush1.xpose.msra.mxu0 0.0
      %1659 = vmatprep.subr.mxu0 0.0
      %1660 = vmatpush1.xpose.msra.mxu0 0.0
      %1661 = vmatprep.subr.mxu0 0.0
      %1662 = vmatpush1.xpose.msra.mxu0 0.0
      %1663 = vmatprep.subr.mxu0 0.0
      %1664 = vmatpush1.xpose.msra.mxu0 0.0
      %1665 = vmatprep.subr.mxu0 0.0
      %1666 = vmatpush1.xpose.msra.mxu0 0.0
      %1667 = vmatprep.subr.mxu0 0.0
      %1668 = vmatpush1.xpose.msra.mxu0 0.0
      %1669 = vmatprep.subr.mxu0 0.0
      %1670 = vmatpush1.xpose.msra.mxu0 0.0
      %1671 = vmatprep.subr.mxu0 0.0
      %1672 = vmatpush1.xpose.msra.mxu0 0.0
      %1673 = vmatprep.subr.mxu0 0.0
      %1674 = vmatpush1.xpose.msra.mxu0 0.0
      %1675 = vmatprep.mubr.f32.mxu0 0.0
      %1676 = vmatmul.mubr.f32.gmra.mrb[0].mxu0 %v1607
      %v1677 = vpop.f32.mrb[0].mxu0
      %v1678 = vadd.f32 0.0, %v1677
      %v1679 = vpop.f32.mrb[0].mxu0
      %1680 = vdwg.mxu0
      %1681 = vrot.lane.b32.xlu0 %v855, 112
      %v1682 = vpop.permute.xlu0 %1681
      %1683 = vrot.lane.b32.xlu0 %v855, 80
      %v1684 = vpop.permute.xlu0 %1683
      %v1685 = vsel %vm866, %v1682, 0
      %v1687 = vsel %vm866, %v1684, 0
      %1689 = vmatprep.subr.mxu0 0.0
      %1690 = vmatpush1.xpose.msra.mxu0 %v1687
      %1691 = vmatprep.subr.mxu0 0.0
      %1692 = vmatpush1.xpose.msra.mxu0 0.0
      %1693 = vmatprep.subr.mxu0 0.0
      %1694 = vmatpush1.xpose.msra.mxu0 0.0
      %1695 = vmatprep.subr.mxu0 0.0
      %1696 = vmatpush1.xpose.msra.mxu0 0.0
      %1697 = vmatprep.subr.mxu0 0.0
      %1698 = vmatpush1.xpose.msra.mxu0 0.0
      %1699 = vmatprep.subr.mxu0 0.0
      %1700 = vmatpush1.xpose.msra.mxu0 0.0
      %1701 = vmatprep.subr.mxu0 0.0
      %1702 = vmatpush1.xpose.msra.mxu0 0.0
      %1703 = vmatprep.subr.mxu0 0.0
      %1704 = vmatpush1.xpose.msra.mxu0 0.0
      %1705 = vmatprep.subr.mxu0 0.0
      %1706 = vmatpush1.xpose.msra.mxu0 0.0
      %1707 = vmatprep.subr.mxu0 0.0
      %1708 = vmatpush1.xpose.msra.mxu0 0.0
      %1709 = vmatprep.subr.mxu0 0.0
      %1710 = vmatpush1.xpose.msra.mxu0 0.0
      %1711 = vmatprep.subr.mxu0 0.0
      %1712 = vmatpush1.xpose.msra.mxu0 0.0
      %1713 = vmatprep.subr.mxu0 0.0
      %1714 = vmatpush1.xpose.msra.mxu0 0.0
      %1715 = vmatprep.subr.mxu0 0.0
      %1716 = vmatpush1.xpose.msra.mxu0 0.0
      %1717 = vmatprep.subr.mxu0 0.0
      %1718 = vmatpush1.xpose.msra.mxu0 0.0
      %1719 = vmatprep.subr.mxu0 0.0
      %1720 = vmatpush1.xpose.msra.mxu0 0.0
      %1721 = vmatprep.subr.mxu0 0.0
      %1722 = vmatpush1.xpose.msra.mxu0 0.0
      %1723 = vmatprep.subr.mxu0 0.0
      %1724 = vmatpush1.xpose.msra.mxu0 0.0
      %1725 = vmatprep.subr.mxu0 0.0
      %1726 = vmatpush1.xpose.msra.mxu0 0.0
      %1727 = vmatprep.subr.mxu0 0.0
      %1728 = vmatpush1.xpose.msra.mxu0 0.0
      %1729 = vmatprep.subr.mxu0 0.0
      %1730 = vmatpush1.xpose.msra.mxu0 0.0
      %1731 = vmatprep.subr.mxu0 0.0
      %1732 = vmatpush1.xpose.msra.mxu0 0.0
      %1733 = vmatprep.subr.mxu0 0.0
      %1734 = vmatpush1.xpose.msra.mxu0 0.0
      %1735 = vmatprep.subr.mxu0 0.0
      %1736 = vmatpush1.xpose.msra.mxu0 0.0
      %1737 = vmatprep.subr.mxu0 0.0
      %1738 = vmatpush1.xpose.msra.mxu0 0.0
      %1739 = vmatprep.subr.mxu0 0.0
      %1740 = vmatpush1.xpose.msra.mxu0 0.0
      %1741 = vmatprep.subr.mxu0 0.0
      %1742 = vmatpush1.xpose.msra.mxu0 0.0
      %1743 = vmatprep.subr.mxu0 0.0
      %1744 = vmatpush1.xpose.msra.mxu0 0.0
      %1745 = vmatprep.subr.mxu0 0.0
      %1746 = vmatpush1.xpose.msra.mxu0 0.0
      %1747 = vmatprep.subr.mxu0 0.0
      %1748 = vmatpush1.xpose.msra.mxu0 0.0
      %1749 = vmatprep.subr.mxu0 0.0
      %1750 = vmatpush1.xpose.msra.mxu0 0.0
      %1751 = vmatprep.subr.mxu0 0.0
      %1752 = vmatpush1.xpose.msra.mxu0 0.0
      %1753 = vmatprep.mubr.f32.mxu0 0.0
      %1754 = vmatmul.mubr.f32.gmra.mrb[0].mxu0 %v1685
      %v1755 = vpop.f32.mrb[0].mxu0
      %v1756 = vadd.f32 0.0, %v1755
      %v1757 = vpop.f32.mrb[0].mxu0
      %1758 = vdwg.mxu0
      %1759 = vrot.lane.b32.xlu0 %v860, 112
      %v1760 = vpop.permute.xlu0 %1759
      %1761 = vrot.lane.b32.xlu0 %v860, 80
      %v1762 = vpop.permute.xlu0 %1761
      %v1763 = vsel %vm866, %v1760, 0
      %v1765 = vsel %vm866, %v1762, 0
      %1767 = vmatprep.subr.mxu0 0.0
      %1768 = vmatpush1.xpose.msra.mxu0 %v1765
      %1769 = vmatprep.subr.mxu0 0.0
      %1770 = vmatpush1.xpose.msra.mxu0 0.0
      %1771 = vmatprep.subr.mxu0 0.0
      %1772 = vmatpush1.xpose.msra.mxu0 0.0
      %1773 = vmatprep.subr.mxu0 0.0
      %1774 = vmatpush1.xpose.msra.mxu0 0.0
      %1775 = vmatprep.subr.mxu0 0.0
      %1776 = vmatpush1.xpose.msra.mxu0 0.0
      %1777 = vmatprep.subr.mxu0 0.0
      %1778 = vmatpush1.xpose.msra.mxu0 0.0
      %1779 = vmatprep.subr.mxu0 0.0
      %1780 = vmatpush1.xpose.msra.mxu0 0.0
      %1781 = vmatprep.subr.mxu0 0.0
      %1782 = vmatpush1.xpose.msra.mxu0 0.0
      %1783 = vmatprep.subr.mxu0 0.0
      %1784 = vmatpush1.xpose.msra.mxu0 0.0
      %1785 = vmatprep.subr.mxu0 0.0
      %1786 = vmatpush1.xpose.msra.mxu0 0.0
      %1787 = vmatprep.subr.mxu0 0.0
      %1788 = vmatpush1.xpose.msra.mxu0 0.0
      %1789 = vmatprep.subr.mxu0 0.0
      %1790 = vmatpush1.xpose.msra.mxu0 0.0
      %1791 = vmatprep.subr.mxu0 0.0
      %1792 = vmatpush1.xpose.msra.mxu0 0.0
      %1793 = vmatprep.subr.mxu0 0.0
      %1794 = vmatpush1.xpose.msra.mxu0 0.0
      %1795 = vmatprep.subr.mxu0 0.0
      %1796 = vmatpush1.xpose.msra.mxu0 0.0
      %1797 = vmatprep.subr.mxu0 0.0
      %1798 = vmatpush1.xpose.msra.mxu0 0.0
      %1799 = vmatprep.subr.mxu0 0.0
      %1800 = vmatpush1.xpose.msra.mxu0 0.0
      %1801 = vmatprep.subr.mxu0 0.0
      %1802 = vmatpush1.xpose.msra.mxu0 0.0
      %1803 = vmatprep.subr.mxu0 0.0
      %1804 = vmatpush1.xpose.msra.mxu0 0.0
      %1805 = vmatprep.subr.mxu0 0.0
      %1806 = vmatpush1.xpose.msra.mxu0 0.0
      %1807 = vmatprep.subr.mxu0 0.0
      %1808 = vmatpush1.xpose.msra.mxu0 0.0
      %1809 = vmatprep.subr.mxu0 0.0
      %1810 = vmatpush1.xpose.msra.mxu0 0.0
      %1811 = vmatprep.subr.mxu0 0.0
      %1812 = vmatpush1.xpose.msra.mxu0 0.0
      %1813 = vmatprep.subr.mxu0 0.0
      %1814 = vmatpush1.xpose.msra.mxu0 0.0
      %1815 = vmatprep.subr.mxu0 0.0
      %1816 = vmatpush1.xpose.msra.mxu0 0.0
      %1817 = vmatprep.subr.mxu0 0.0
      %1818 = vmatpush1.xpose.msra.mxu0 0.0
      %1819 = vmatprep.subr.mxu0 0.0
      %1820 = vmatpush1.xpose.msra.mxu0 0.0
      %1821 = vmatprep.subr.mxu0 0.0
      %1822 = vmatpush1.xpose.msra.mxu0 0.0
      %1823 = vmatprep.subr.mxu0 0.0
      %1824 = vmatpush1.xpose.msra.mxu0 0.0
      %1825 = vmatprep.subr.mxu0 0.0
      %1826 = vmatpush1.xpose.msra.mxu0 0.0
      %1827 = vmatprep.subr.mxu0 0.0
      %1828 = vmatpush1.xpose.msra.mxu0 0.0
      %1829 = vmatprep.subr.mxu0 0.0
      %1830 = vmatpush1.xpose.msra.mxu0 0.0
      %1831 = vmatprep.mubr.f32.mxu0 0.0
      %1832 = vmatmul.mubr.f32.gmra.mrb[0].mxu0 %v1763
      %v1833 = vpop.f32.mrb[0].mxu0
      %v1834 = vadd.f32 0.0, %v1833
      %v1835 = vpop.f32.mrb[0].mxu0
      %1836 = vdwg.mxu0
      %v1837 = vmul.f32 %v1600, 0.25
      %v1838 = vmul.f32 %v1678, 0.25
      %v1839 = vmul.f32 %v1756, 0.25
      %v1840 = vmul.f32 %v1834, 0.25
      %v1841 = vsel %vm1176, %v1837, -inf
      %1842 = vmax.xlane.f32.xlu0 %v1841
      %v1843 = vpop.xlane.xlu0 %1842
      %v1844 = vsel %vm1176, %v1838, -inf
      %1845 = vmax.xlane.f32.xlu0 %v1844
      %v1846 = vpop.xlane.xlu0 %1845
      %v1847 = vsel %vm1176, %v1839, -inf
      %1848 = vmax.xlane.f32.xlu0 %v1847
      %v1849 = vpop.xlane.xlu0 %1848
      %v1850 = vsel %vm1176, %v1840, -inf
      %1851 = vmax.xlane.f32.xlu0 %v1850
      %v1852 = vpop.xlane.xlu0 %1851
      %v1853 = vsub.f32 %v1837, %v1843
      %v1854 = vsub.f32 %v1838, %v1846
      %v1855 = vsub.f32 %v1839, %v1849
      %v1856 = vsub.f32 %v1840, %v1852
      %v1857 = vmul.f32 %v1853, 1.442695
      %v1858 = vpow.pop %v1857
      %v1859 = vmul.f32 %v1854, 1.442695
      %v1860 = vpow.pop %v1859
      %v1861 = vmul.f32 %v1855, 1.442695
      %v1862 = vpow.pop %v1861
      %v1863 = vmul.f32 %v1856, 1.442695
      %v1864 = vpow.pop %v1863
      %v1865 = vsel %vm1176, %v1858, 0.0
      %1866 = vadd.xlane.f32.xlu0 %v1865
      %v1867 = vpop.xlane.xlu0 %1866
      %v1868 = vsel %vm1176, %v1860, 0.0
      %1869 = vadd.xlane.f32.xlu0 %v1868
      %v1870 = vpop.xlane.xlu0 %1869
      %v1871 = vsel %vm1176, %v1862, 0.0
      %1872 = vadd.xlane.f32.xlu0 %v1871
      %v1873 = vpop.xlane.xlu0 %1872
      %v1874 = vsel %vm1176, %v1864, 0.0
      %1875 = vadd.xlane.f32.xlu0 %v1874
      %v1876 = vpop.xlane.xlu0 %1875
      %v1877 = vrcp.pop %v1867
      %v1878 = vmul.f32 %v1858, %v1877
      %v1879 = vrcp.pop %v1870
      %v1880 = vmul.f32 %v1860, %v1879
      %v1881 = vrcp.pop %v1873
      %v1882 = vmul.f32 %v1862, %v1881
      %v1883 = vrcp.pop %v1876
      %v1884 = vmul.f32 %v1864, %v1883
      %1885 = vrot.lane.b32.xlu0 %v845, 48
      %v1886 = vpop.permute.xlu0 %1885
      %v1889 = vsel %vm1176, %v1878, 0
      %1891 = vmatprep.subr.mxu0 0.0
      %1892 = vmatpush1.msra.mxu0 %v1886
      %1893 = vmatprep.subr.mxu0 0.0
      %1894 = vmatpush1.msra.mxu0 0.0
      %1895 = vmatprep.subr.mxu0 0.0
      %1896 = vmatpush1.msra.mxu0 0.0
      %1897 = vmatprep.subr.mxu0 0.0
      %1898 = vmatpush1.msra.mxu0 0.0
      %1899 = vmatprep.subr.mxu0 0.0
      %1900 = vmatpush1.msra.mxu0 0.0
      %1901 = vmatprep.subr.mxu0 0.0
      %1902 = vmatpush1.msra.mxu0 0.0
      %1903 = vmatprep.subr.mxu0 0.0
      %1904 = vmatpush1.msra.mxu0 0.0
      %1905 = vmatprep.subr.mxu0 0.0
      %1906 = vmatpush1.msra.mxu0 0.0
      %1907 = vmatprep.subr.mxu0 0.0
      %1908 = vmatpush1.msra.mxu0 0.0
      %1909 = vmatprep.subr.mxu0 0.0
      %1910 = vmatpush1.msra.mxu0 0.0
      %1911 = vmatprep.subr.mxu0 0.0
      %1912 = vmatpush1.msra.mxu0 0.0
      %1913 = vmatprep.subr.mxu0 0.0
      %1914 = vmatpush1.msra.mxu0 0.0
      %1915 = vmatprep.subr.mxu0 0.0
      %1916 = vmatpush1.msra.mxu0 0.0
      %1917 = vmatprep.subr.mxu0 0.0
      %1918 = vmatpush1.msra.mxu0 0.0
      %1919 = vmatprep.subr.mxu0 0.0
      %1920 = vmatpush1.msra.mxu0 0.0
      %1921 = vmatprep.subr.mxu0 0.0
      %1922 = vmatpush1.msra.mxu0 0.0
      %1923 = vmatprep.subr.mxu0 0.0
      %1924 = vmatpush1.msra.mxu0 0.0
      %1925 = vmatprep.subr.mxu0 0.0
      %1926 = vmatpush1.msra.mxu0 0.0
      %1927 = vmatprep.subr.mxu0 0.0
      %1928 = vmatpush1.msra.mxu0 0.0
      %1929 = vmatprep.subr.mxu0 0.0
      %1930 = vmatpush1.msra.mxu0 0.0
      %1931 = vmatprep.subr.mxu0 0.0
      %1932 = vmatpush1.msra.mxu0 0.0
      %1933 = vmatprep.subr.mxu0 0.0
      %1934 = vmatpush1.msra.mxu0 0.0
      %1935 = vmatprep.subr.mxu0 0.0
      %1936 = vmatpush1.msra.mxu0 0.0
      %1937 = vmatprep.subr.mxu0 0.0
      %1938 = vmatpush1.msra.mxu0 0.0
      %1939 = vmatprep.subr.mxu0 0.0
      %1940 = vmatpush1.msra.mxu0 0.0
      %1941 = vmatprep.subr.mxu0 0.0
      %1942 = vmatpush1.msra.mxu0 0.0
      %1943 = vmatprep.subr.mxu0 0.0
      %1944 = vmatpush1.msra.mxu0 0.0
      %1945 = vmatprep.subr.mxu0 0.0
      %1946 = vmatpush1.msra.mxu0 0.0
      %1947 = vmatprep.subr.mxu0 0.0
      %1948 = vmatpush1.msra.mxu0 0.0
      %1949 = vmatprep.subr.mxu0 0.0
      %1950 = vmatpush1.msra.mxu0 0.0
      %1951 = vmatprep.subr.mxu0 0.0
      %1952 = vmatpush1.msra.mxu0 0.0
      %1953 = vmatprep.subr.mxu0 0.0
      %1954 = vmatpush1.msra.mxu0 0.0
      %1955 = vmatprep.mubr.f32.mxu0 0.0
      %1956 = vmatmul.mubr.f32.gmra.mrb[0].mxu0 %v1889
      %v1957 = vpop.f32.mrb[0].mxu0
      %v1958 = vadd.f32 0.0, %v1957
      %v1959 = vpop.f32.mrb[0].mxu0
      %1960 = vdwg.mxu0
      %1961 = vrot.lane.b32.xlu0 %v850, 48
      %v1962 = vpop.permute.xlu0 %1961
      %v1965 = vsel %vm1176, %v1880, 0
      %1967 = vmatprep.subr.mxu0 0.0
      %1968 = vmatpush1.msra.mxu0 %v1962
      %1969 = vmatprep.subr.mxu0 0.0
      %1970 = vmatpush1.msra.mxu0 0.0
      %1971 = vmatprep.subr.mxu0 0.0
      %1972 = vmatpush1.msra.mxu0 0.0
      %1973 = vmatprep.subr.mxu0 0.0
      %1974 = vmatpush1.msra.mxu0 0.0
      %1975 = vmatprep.subr.mxu0 0.0
      %1976 = vmatpush1.msra.mxu0 0.0
      %1977 = vmatprep.subr.mxu0 0.0
      %1978 = vmatpush1.msra.mxu0 0.0
      %1979 = vmatprep.subr.mxu0 0.0
      %1980 = vmatpush1.msra.mxu0 0.0
      %1981 = vmatprep.subr.mxu0 0.0
      %1982 = vmatpush1.msra.mxu0 0.0
      %1983 = vmatprep.subr.mxu0 0.0
      %1984 = vmatpush1.msra.mxu0 0.0
      %1985 = vmatprep.subr.mxu0 0.0
      %1986 = vmatpush1.msra.mxu0 0.0
      %1987 = vmatprep.subr.mxu0 0.0
      %1988 = vmatpush1.msra.mxu0 0.0
      %1989 = vmatprep.subr.mxu0 0.0
      %1990 = vmatpush1.msra.mxu0 0.0
      %1991 = vmatprep.subr.mxu0 0.0
      %1992 = vmatpush1.msra.mxu0 0.0
      %1993 = vmatprep.subr.mxu0 0.0
      %1994 = vmatpush1.msra.mxu0 0.0
      %1995 = vmatprep.subr.mxu0 0.0
      %1996 = vmatpush1.msra.mxu0 0.0
      %1997 = vmatprep.subr.mxu0 0.0
      %1998 = vmatpush1.msra.mxu0 0.0
      %1999 = vmatprep.subr.mxu0 0.0
      %2000 = vmatpush1.msra.mxu0 0.0
      %2001 = vmatprep.subr.mxu0 0.0
      %2002 = vmatpush1.msra.mxu0 0.0
      %2003 = vmatprep.subr.mxu0 0.0
      %2004 = vmatpush1.msra.mxu0 0.0
      %2005 = vmatprep.subr.mxu0 0.0
      %2006 = vmatpush1.msra.mxu0 0.0
      %2007 = vmatprep.subr.mxu0 0.0
      %2008 = vmatpush1.msra.mxu0 0.0
      %2009 = vmatprep.subr.mxu0 0.0
      %2010 = vmatpush1.msra.mxu0 0.0
      %2011 = vmatprep.subr.mxu0 0.0
      %2012 = vmatpush1.msra.mxu0 0.0
      %2013 = vmatprep.subr.mxu0 0.0
      %2014 = vmatpush1.msra.mxu0 0.0
      %2015 = vmatprep.subr.mxu0 0.0
      %2016 = vmatpush1.msra.mxu0 0.0
      %2017 = vmatprep.subr.mxu0 0.0
      %2018 = vmatpush1.msra.mxu0 0.0
      %2019 = vmatprep.subr.mxu0 0.0
      %2020 = vmatpush1.msra.mxu0 0.0
      %2021 = vmatprep.subr.mxu0 0.0
      %2022 = vmatpush1.msra.mxu0 0.0
      %2023 = vmatprep.subr.mxu0 0.0
      %2024 = vmatpush1.msra.mxu0 0.0
      %2025 = vmatprep.subr.mxu0 0.0
      %2026 = vmatpush1.msra.mxu0 0.0
      %2027 = vmatprep.subr.mxu0 0.0
      %2028 = vmatpush1.msra.mxu0 0.0
      %2029 = vmatprep.subr.mxu0 0.0
      %2030 = vmatpush1.msra.mxu0 0.0
      %2031 = vmatprep.mubr.f32.mxu0 0.0
      %2032 = vmatmul.mubr.f32.gmra.mrb[0].mxu0 %v1965
      %v2033 = vpop.f32.mrb[0].mxu0
      %v2034 = vadd.f32 0.0, %v2033
      %v2035 = vpop.f32.mrb[0].mxu0
      %2036 = vdwg.mxu0
      %2037 = vrot.lane.b32.xlu0 %v855, 48
      %v2038 = vpop.permute.xlu0 %2037
      %v2041 = vsel %vm1176, %v1882, 0
      %2043 = vmatprep.subr.mxu0 0.0
      %2044 = vmatpush1.msra.mxu0 %v2038
      %2045 = vmatprep.subr.mxu0 0.0
      %2046 = vmatpush1.msra.mxu0 0.0
      %2047 = vmatprep.subr.mxu0 0.0
      %2048 = vmatpush1.msra.mxu0 0.0
      %2049 = vmatprep.subr.mxu0 0.0
      %2050 = vmatpush1.msra.mxu0 0.0
      %2051 = vmatprep.subr.mxu0 0.0
      %2052 = vmatpush1.msra.mxu0 0.0
      %2053 = vmatprep.subr.mxu0 0.0
      %2054 = vmatpush1.msra.mxu0 0.0
      %2055 = vmatprep.subr.mxu0 0.0
      %2056 = vmatpush1.msra.mxu0 0.0
      %2057 = vmatprep.subr.mxu0 0.0
      %2058 = vmatpush1.msra.mxu0 0.0
      %2059 = vmatprep.subr.mxu0 0.0
      %2060 = vmatpush1.msra.mxu0 0.0
      %2061 = vmatprep.subr.mxu0 0.0
      %2062 = vmatpush1.msra.mxu0 0.0
      %2063 = vmatprep.subr.mxu0 0.0
      %2064 = vmatpush1.msra.mxu0 0.0
      %2065 = vmatprep.subr.mxu0 0.0
      %2066 = vmatpush1.msra.mxu0 0.0
      %2067 = vmatprep.subr.mxu0 0.0
      %2068 = vmatpush1.msra.mxu0 0.0
      %2069 = vmatprep.subr.mxu0 0.0
      %2070 = vmatpush1.msra.mxu0 0.0
      %2071 = vmatprep.subr.mxu0 0.0
      %2072 = vmatpush1.msra.mxu0 0.0
      %2073 = vmatprep.subr.mxu0 0.0
      %2074 = vmatpush1.msra.mxu0 0.0
      %2075 = vmatprep.subr.mxu0 0.0
      %2076 = vmatpush1.msra.mxu0 0.0
      %2077 = vmatprep.subr.mxu0 0.0
      %2078 = vmatpush1.msra.mxu0 0.0
      %2079 = vmatprep.subr.mxu0 0.0
      %2080 = vmatpush1.msra.mxu0 0.0
      %2081 = vmatprep.subr.mxu0 0.0
      %2082 = vmatpush1.msra.mxu0 0.0
      %2083 = vmatprep.subr.mxu0 0.0
      %2084 = vmatpush1.msra.mxu0 0.0
      %2085 = vmatprep.subr.mxu0 0.0
      %2086 = vmatpush1.msra.mxu0 0.0
      %2087 = vmatprep.subr.mxu0 0.0
      %2088 = vmatpush1.msra.mxu0 0.0
      %2089 = vmatprep.subr.mxu0 0.0
      %2090 = vmatpush1.msra.mxu0 0.0
      %2091 = vmatprep.subr.mxu0 0.0
      %2092 = vmatpush1.msra.mxu0 0.0
      %2093 = vmatprep.subr.mxu0 0.0
      %2094 = vmatpush1.msra.mxu0 0.0
      %2095 = vmatprep.subr.mxu0 0.0
      %2096 = vmatpush1.msra.mxu0 0.0
      %2097 = vmatprep.subr.mxu0 0.0
      %2098 = vmatpush1.msra.mxu0 0.0
      %2099 = vmatprep.subr.mxu0 0.0
      %2100 = vmatpush1.msra.mxu0 0.0
      %2101 = vmatprep.subr.mxu0 0.0
      %2102 = vmatpush1.msra.mxu0 0.0
      %2103 = vmatprep.subr.mxu0 0.0
      %2104 = vmatpush1.msra.mxu0 0.0
      %2105 = vmatprep.subr.mxu0 0.0
      %2106 = vmatpush1.msra.mxu0 0.0
      %2107 = vmatprep.mubr.f32.mxu0 0.0
      %2108 = vmatmul.mubr.f32.gmra.mrb[0].mxu0 %v2041
      %v2109 = vpop.f32.mrb[0].mxu0
      %v2110 = vadd.f32 0.0, %v2109
      %v2111 = vpop.f32.mrb[0].mxu0
      %2112 = vdwg.mxu0
      %2113 = vrot.lane.b32.xlu0 %v860, 48
      %v2114 = vpop.permute.xlu0 %2113
      %v2117 = vsel %vm1176, %v1884, 0
      %2119 = vmatprep.subr.mxu0 0.0
      %2120 = vmatpush1.msra.mxu0 %v2114
      %2121 = vmatprep.subr.mxu0 0.0
      %2122 = vmatpush1.msra.mxu0 0.0
      %2123 = vmatprep.subr.mxu0 0.0
      %2124 = vmatpush1.msra.mxu0 0.0
      %2125 = vmatprep.subr.mxu0 0.0
      %2126 = vmatpush1.msra.mxu0 0.0
      %2127 = vmatprep.subr.mxu0 0.0
      %2128 = vmatpush1.msra.mxu0 0.0
      %2129 = vmatprep.subr.mxu0 0.0
      %2130 = vmatpush1.msra.mxu0 0.0
      %2131 = vmatprep.subr.mxu0 0.0
      %2132 = vmatpush1.msra.mxu0 0.0
      %2133 = vmatprep.subr.mxu0 0.0
      %2134 = vmatpush1.msra.mxu0 0.0
      %2135 = vmatprep.subr.mxu0 0.0
      %2136 = vmatpush1.msra.mxu0 0.0
      %2137 = vmatprep.subr.mxu0 0.0
      %2138 = vmatpush1.msra.mxu0 0.0
      %2139 = vmatprep.subr.mxu0 0.0
      %2140 = vmatpush1.msra.mxu0 0.0
      %2141 = vmatprep.subr.mxu0 0.0
      %2142 = vmatpush1.msra.mxu0 0.0
      %2143 = vmatprep.subr.mxu0 0.0
      %2144 = vmatpush1.msra.mxu0 0.0
      %2145 = vmatprep.subr.mxu0 0.0
      %2146 = vmatpush1.msra.mxu0 0.0
      %2147 = vmatprep.subr.mxu0 0.0
      %2148 = vmatpush1.msra.mxu0 0.0
      %2149 = vmatprep.subr.mxu0 0.0
      %2150 = vmatpush1.msra.mxu0 0.0
      %2151 = vmatprep.subr.mxu0 0.0
      %2152 = vmatpush1.msra.mxu0 0.0
      %2153 = vmatprep.subr.mxu0 0.0
      %2154 = vmatpush1.msra.mxu0 0.0
      %2155 = vmatprep.subr.mxu0 0.0
      %2156 = vmatpush1.msra.mxu0 0.0
      %2157 = vmatprep.subr.mxu0 0.0
      %2158 = vmatpush1.msra.mxu0 0.0
      %2159 = vmatprep.subr.mxu0 0.0
      %2160 = vmatpush1.msra.mxu0 0.0
      %2161 = vmatprep.subr.mxu0 0.0
      %2162 = vmatpush1.msra.mxu0 0.0
      %2163 = vmatprep.subr.mxu0 0.0
      %2164 = vmatpush1.msra.mxu0 0.0
      %2165 = vmatprep.subr.mxu0 0.0
      %2166 = vmatpush1.msra.mxu0 0.0
      %2167 = vmatprep.subr.mxu0 0.0
      %2168 = vmatpush1.msra.mxu0 0.0
      %2169 = vmatprep.subr.mxu0 0.0
      %2170 = vmatpush1.msra.mxu0 0.0
      %2171 = vmatprep.subr.mxu0 0.0
      %2172 = vmatpush1.msra.mxu0 0.0
      %2173 = vmatprep.subr.mxu0 0.0
      %2174 = vmatpush1.msra.mxu0 0.0
      %2175 = vmatprep.subr.mxu0 0.0
      %2176 = vmatpush1.msra.mxu0 0.0
      %2177 = vmatprep.subr.mxu0 0.0
      %2178 = vmatpush1.msra.mxu0 0.0
      %2179 = vmatprep.subr.mxu0 0.0
      %2180 = vmatpush1.msra.mxu0 0.0
      %2181 = vmatprep.subr.mxu0 0.0
      %2182 = vmatpush1.msra.mxu0 0.0
      %2183 = vmatprep.mubr.f32.mxu0 0.0
      %2184 = vmatmul.mubr.f32.gmra.mrb[0].mxu0 %v2117
      %v2185 = vpop.f32.mrb[0].mxu0
      %v2186 = vadd.f32 0.0, %v2185
      %v2187 = vpop.f32.mrb[0].mxu0
      %2188 = vdwg.mxu0
      %v2190 = vsel %vm866, %v1958, 0
      %v2193 = vsel %vm866, %v2034, 0
      %v2196 = vsel %vm866, %v2110, 0
      %v2199 = vsel %vm866, %v2186, 0
      %2201 = vmatprep.subr.mxu0 0.0
      %2202 = vmatpush1.msra.mxu0 %v756
      %2203 = vmatprep.subr.mxu0 0.0
      %2204 = vmatpush1.msra.mxu0 %v757
      %2205 = vmatprep.subr.mxu0 0.0
      %2206 = vmatpush1.msra.mxu0 0.0
      %2207 = vmatprep.subr.mxu0 0.0
      %2208 = vmatpush1.msra.mxu0 0.0
      %2209 = vmatprep.subr.mxu0 0.0
      %2210 = vmatpush1.msra.mxu0 0.0
      %2211 = vmatprep.subr.mxu0 0.0
      %2212 = vmatpush1.msra.mxu0 0.0
      %2213 = vmatprep.subr.mxu0 0.0
      %2214 = vmatpush1.msra.mxu0 0.0
      %2215 = vmatprep.subr.mxu0 0.0
      %2216 = vmatpush1.msra.mxu0 0.0
      %2217 = vmatprep.subr.mxu0 0.0
      %2218 = vmatpush1.msra.mxu0 0.0
      %2219 = vmatprep.subr.mxu0 0.0
      %2220 = vmatpush1.msra.mxu0 0.0
      %2221 = vmatprep.subr.mxu0 0.0
      %2222 = vmatpush1.msra.mxu0 0.0
      %2223 = vmatprep.subr.mxu0 0.0
      %2224 = vmatpush1.msra.mxu0 0.0
      %2225 = vmatprep.subr.mxu0 0.0
      %2226 = vmatpush1.msra.mxu0 0.0
      %2227 = vmatprep.subr.mxu0 0.0
      %2228 = vmatpush1.msra.mxu0 0.0
      %2229 = vmatprep.subr.mxu0 0.0
      %2230 = vmatpush1.msra.mxu0 0.0
      %2231 = vmatprep.subr.mxu0 0.0
      %2232 = vmatpush1.msra.mxu0 0.0
      %2233 = vmatprep.subr.mxu0 0.0
      %2234 = vmatpush1.msra.mxu0 0.0
      %2235 = vmatprep.subr.mxu0 0.0
      %2236 = vmatpush1.msra.mxu0 0.0
      %2237 = vmatprep.subr.mxu0 0.0
      %2238 = vmatpush1.msra.mxu0 0.0
      %2239 = vmatprep.subr.mxu0 0.0
      %2240 = vmatpush1.msra.mxu0 0.0
      %2241 = vmatprep.subr.mxu0 0.0
      %2242 = vmatpush1.msra.mxu0 0.0
      %2243 = vmatprep.subr.mxu0 0.0
      %2244 = vmatpush1.msra.mxu0 0.0
      %2245 = vmatprep.subr.mxu0 0.0
      %2246 = vmatpush1.msra.mxu0 0.0
      %2247 = vmatprep.subr.mxu0 0.0
      %2248 = vmatpush1.msra.mxu0 0.0
      %2249 = vmatprep.subr.mxu0 0.0
      %2250 = vmatpush1.msra.mxu0 0.0
      %2251 = vmatprep.subr.mxu0 0.0
      %2252 = vmatpush1.msra.mxu0 0.0
      %2253 = vmatprep.subr.mxu0 0.0
      %2254 = vmatpush1.msra.mxu0 0.0
      %2255 = vmatprep.subr.mxu0 0.0
      %2256 = vmatpush1.msra.mxu0 0.0
      %2257 = vmatprep.subr.mxu0 0.0
      %2258 = vmatpush1.msra.mxu0 0.0
      %2259 = vmatprep.subr.mxu0 0.0
      %2260 = vmatpush1.msra.mxu0 0.0
      %2261 = vmatprep.subr.mxu0 0.0
      %2262 = vmatpush1.msra.mxu0 0.0
      %2263 = vmatprep.subr.mxu0 0.0
      %2264 = vmatpush1.msra.mxu0 0.0
      %2265 = vmatprep.mubr.f32.mxu0 0.0
      %2266 = vmatmul.mubr.f32.gmra.mrb[0].mxu0 %v2190
      %v2267 = vpop.f32.mrb[0].mxu0
      %v2268 = vadd.f32 0.0, %v2267
      %v2269 = vpop.f32.mrb[0].mxu0
      %2270 = vmatprep.mubr.f32.mxu0 0.0
      %2271 = vmatmul.mubr.f32.gmra.mrb[0].mxu0 %v2193
      %v2272 = vpop.f32.mrb[0].mxu0
      %v2273 = vadd.f32 0.0, %v2272
      %v2274 = vpop.f32.mrb[0].mxu0
      %2275 = vmatprep.mubr.f32.mxu0 0.0
      %2276 = vmatmul.mubr.f32.gmra.mrb[0].mxu0 %v2196
      %v2277 = vpop.f32.mrb[0].mxu0
      %v2278 = vadd.f32 0.0, %v2277
      %v2279 = vpop.f32.mrb[0].mxu0
      %2280 = vmatprep.mubr.f32.mxu0 0.0
      %2281 = vmatmul.mubr.f32.gmra.mrb[0].mxu0 %v2199
      %v2282 = vpop.f32.mrb[0].mxu0
      %v2283 = vadd.f32 0.0, %v2282
      %v2284 = vpop.f32.mrb[0].mxu0
      %2285 = vdwg.mxu0
      %v2287 = vsel %vm866, %v1294, 0
      %v2290 = vsel %vm866, %v1370, 0
      %v2293 = vsel %vm866, %v1446, 0
      %v2296 = vsel %vm866, %v1522, 0
      %2298 = vmatprep.subr.mxu0 0.0
      %2299 = vmatpush1.msra.mxu0 %v754
      %2300 = vmatprep.subr.mxu0 0.0
      %2301 = vmatpush1.msra.mxu0 %v755
      %2302 = vmatprep.subr.mxu0 0.0
      %2303 = vmatpush1.msra.mxu0 0.0
      %2304 = vmatprep.subr.mxu0 0.0
      %2305 = vmatpush1.msra.mxu0 0.0
      %2306 = vmatprep.subr.mxu0 0.0
      %2307 = vmatpush1.msra.mxu0 0.0
      %2308 = vmatprep.subr.mxu0 0.0
      %2309 = vmatpush1.msra.mxu0 0.0
      %2310 = vmatprep.subr.mxu0 0.0
      %2311 = vmatpush1.msra.mxu0 0.0
      %2312 = vmatprep.subr.mxu0 0.0
      %2313 = vmatpush1.msra.mxu0 0.0
      %2314 = vmatprep.subr.mxu0 0.0
      %2315 = vmatpush1.msra.mxu0 0.0
      %2316 = vmatprep.subr.mxu0 0.0
      %2317 = vmatpush1.msra.mxu0 0.0
      %2318 = vmatprep.subr.mxu0 0.0
      %2319 = vmatpush1.msra.mxu0 0.0
      %2320 = vmatprep.subr.mxu0 0.0
      %2321 = vmatpush1.msra.mxu0 0.0
      %2322 = vmatprep.subr.mxu0 0.0
      %2323 = vmatpush1.msra.mxu0 0.0
      %2324 = vmatprep.subr.mxu0 0.0
      %2325 = vmatpush1.msra.mxu0 0.0
      %2326 = vmatprep.subr.mxu0 0.0
      %2327 = vmatpush1.msra.mxu0 0.0
      %2328 = vmatprep.subr.mxu0 0.0
      %2329 = vmatpush1.msra.mxu0 0.0
      %2330 = vmatprep.subr.mxu0 0.0
      %2331 = vmatpush1.msra.mxu0 0.0
      %2332 = vmatprep.subr.mxu0 0.0
      %2333 = vmatpush1.msra.mxu0 0.0
      %2334 = vmatprep.subr.mxu0 0.0
      %2335 = vmatpush1.msra.mxu0 0.0
      %2336 = vmatprep.subr.mxu0 0.0
      %2337 = vmatpush1.msra.mxu0 0.0
      %2338 = vmatprep.subr.mxu0 0.0
      %2339 = vmatpush1.msra.mxu0 0.0
      %2340 = vmatprep.subr.mxu0 0.0
      %2341 = vmatpush1.msra.mxu0 0.0
      %2342 = vmatprep.subr.mxu0 0.0
      %2343 = vmatpush1.msra.mxu0 0.0
      %2344 = vmatprep.subr.mxu0 0.0
      %2345 = vmatpush1.msra.mxu0 0.0
      %2346 = vmatprep.subr.mxu0 0.0
      %2347 = vmatpush1.msra.mxu0 0.0
      %2348 = vmatprep.subr.mxu0 0.0
      %2349 = vmatpush1.msra.mxu0 0.0
      %2350 = vmatprep.subr.mxu0 0.0
      %2351 = vmatpush1.msra.mxu0 0.0
      %2352 = vmatprep.subr.mxu0 0.0
      %2353 = vmatpush1.msra.mxu0 0.0
      %2354 = vmatprep.subr.mxu0 0.0
      %2355 = vmatpush1.msra.mxu0 0.0
      %2356 = vmatprep.subr.mxu0 0.0
      %2357 = vmatpush1.msra.mxu0 0.0
      %2358 = vmatprep.subr.mxu0 0.0
      %2359 = vmatpush1.msra.mxu0 0.0
      %2360 = vmatprep.subr.mxu0 0.0
      %2361 = vmatpush1.msra.mxu0 0.0
      %2362 = vmatprep.mubr.f32.mxu0 0.0
      %2363 = vmatmul.mubr.f32.gmra.mrb[0].mxu0 %v2287
      %v2364 = vpop.f32.mrb[0].mxu0
      %v2365 = vadd.f32 %v2268, %v2364
      %v2366 = vpop.f32.mrb[0].mxu0
      %2367 = vmatprep.mubr.f32.mxu0 0.0
      %2368 = vmatmul.mubr.f32.gmra.mrb[0].mxu0 %v2290
      %v2369 = vpop.f32.mrb[0].mxu0
      %v2370 = vadd.f32 %v2273, %v2369
      %v2371 = vpop.f32.mrb[0].mxu0
      %2372 = vmatprep.mubr.f32.mxu0 0.0
      %2373 = vmatmul.mubr.f32.gmra.mrb[0].mxu0 %v2293
      %v2374 = vpop.f32.mrb[0].mxu0
      %v2375 = vadd.f32 %v2278, %v2374
      %v2376 = vpop.f32.mrb[0].mxu0
      %2377 = vmatprep.mubr.f32.mxu0 0.0
      %2378 = vmatmul.mubr.f32.gmra.mrb[0].mxu0 %v2296
      %v2379 = vpop.f32.mrb[0].mxu0
      %v2380 = vadd.f32 %v2283, %v2379
      %v2381 = vpop.f32.mrb[0].mxu0
      %2382 = vdwg.mxu0
      %v2384 = vlaneseq
      %v2385 = vshrl.u32 %v2384, 7
      %v2386 = vsub.s32 0, %v2385
      %v2387 = vrot.slane %v758, %v2386
      %v2389 = vadd.f32 %v2365, %v2387
      %v2390 = vadd.f32 %v2370, %v2387
      %v2391 = vadd.f32 %v2375, %v2387
      %v2392 = vadd.f32 %v2380, %v2387
      %v2393 = vadd.f32 %v745, %v2389
      %v2394 = vadd.f32 %v746, %v2390
      %v2395 = vadd.f32 %v747, %v2391
      %v2396 = vadd.f32 %v748, %v2392
      %v2397 = vld [vmem:[%s8] sm:$0x1]
      %v2398 = vld [vmem:[%s9] sm:$0x1]
      %v2399 = vsel %vm765, %v2393, 0.0
      %2400 = vadd.xlane.f32.xlu0 %v2399
      %v2401 = vpop.xlane.xlu0 %2400
      %v2402 = vsel %vm765, %v2394, 0.0
      %2403 = vadd.xlane.f32.xlu0 %v2402
      %v2404 = vpop.xlane.xlu0 %2403
      %v2405 = vsel %vm765, %v2395, 0.0
      %2406 = vadd.xlane.f32.xlu0 %v2405
      %v2407 = vpop.xlane.xlu0 %2406
      %v2408 = vsel %vm765, %v2396, 0.0
      %2409 = vadd.xlane.f32.xlu0 %v2408
      %v2410 = vpop.xlane.xlu0 %2409
      %v2411 = vrcp.pop 32.0
      %v2412 = vmul.f32 %v2401, %v2411
      %v2413 = vmul.f32 %v2404, %v2411
      %v2414 = vmul.f32 %v2407, %v2411
      %v2415 = vmul.f32 %v2410, %v2411
      %v2416 = vsub.f32 %v2393, %v2412
      %v2417 = vsub.f32 %v2394, %v2413
      %v2418 = vsub.f32 %v2395, %v2414
      %v2419 = vsub.f32 %v2396, %v2415
      %v2420 = vmul.f32 %v2416, %v2416
      %v2421 = vmul.f32 %v2417, %v2417
      %v2422 = vmul.f32 %v2418, %v2418
      %v2423 = vmul.f32 %v2419, %v2419
      %v2424 = vsel %vm765, %v2420, 0.0
      %2425 = vadd.xlane.f32.xlu0 %v2424
      %v2426 = vpop.xlane.xlu0 %2425
      %v2427 = vsel %vm765, %v2421, 0.0
      %2428 = vadd.xlane.f32.xlu0 %v2427
      %v2429 = vpop.xlane.xlu0 %2428
      %v2430 = vsel %vm765, %v2422, 0.0
      %2431 = vadd.xlane.f32.xlu0 %v2430
      %v2432 = vpop.xlane.xlu0 %2431
      %v2433 = vsel %vm765, %v2423, 0.0
      %2434 = vadd.xlane.f32.xlu0 %v2433
      %v2435 = vpop.xlane.xlu0 %2434
      %v2436 = vmul.f32 %v2426, %v2411
      %v2437 = vmul.f32 %v2429, %v2411
      %v2438 = vmul.f32 %v2432, %v2411
      %v2439 = vmul.f32 %v2435, %v2411
      %v2440 = vadd.f32 %v2436, 1e-05
      %v2441 = vadd.f32 %v2437, 1e-05
      %v2442 = vadd.f32 %v2438, 1e-05
      %v2443 = vadd.f32 %v2439, 1e-05
      %v2444 = vrsqrt.pop %v2440
      %v2445 = vrsqrt.pop %v2441
      %v2446 = vrsqrt.pop %v2442
      %v2447 = vrsqrt.pop %v2443
      %v2448 = vmul.f32 %v2416, %v2444
      %v2449 = vmul.f32 %v2417, %v2445
      %v2450 = vmul.f32 %v2418, %v2446
      %v2451 = vmul.f32 %v2419, %v2447
      %v2453 = vlaneseq
      %v2454 = vshrl.u32 %v2453, 7
      %v2455 = vsub.s32 0, %v2454
      %v2456 = vrot.slane %v2397, %v2455
      %v2458 = vmul.f32 %v2448, %v2456
      %v2459 = vmul.f32 %v2449, %v2456
      %v2460 = vmul.f32 %v2450, %v2456
      %v2461 = vmul.f32 %v2451, %v2456
      %v2463 = vlaneseq
      %v2464 = vshrl.u32 %v2463, 7
      %v2465 = vsub.s32 0, %v2464
      %v2466 = vrot.slane %v2398, %v2465
      %v2468 = vadd.f32 %v2458, %v2466
      %v2469 = vadd.f32 %v2459, %v2466
      %v2470 = vadd.f32 %v2460, %v2466
      %v2471 = vadd.f32 %v2461, %v2466
      %v2472 = vld [vmem:[%s10] sm:$0xff]
      %v2473 = vld [vmem:[%s10 + $0x8] sm:$0xff]
      %v2474 = vld [vmem:[%s10 + $0x10] sm:$0xff]
      %v2475 = vld [vmem:[%s10 + $0x18] sm:$0xff]
      %v2476 = vld [vmem:[%s11] sm:$0x1]
      %v2478 = vlaneseq
      %v2479 = vshrl.u32 %v2478, 7
      %v2480 = vsub.s32 0, %v2479
      %v2481 = vrot.slane %v2476, %v2480
      %v2484 = vsel %vm765, %v2468, 0
      %v2487 = vsel %vm765, %v2469, 0
      %v2490 = vsel %vm765, %v2470, 0
      %v2493 = vsel %vm765, %v2471, 0
      %2495 = vmatprep.subr.mxu0 0.0
      %2496 = vmatpush1.msra.mxu0 %v2472
      %2497 = vmatprep.subr.mxu0 0.0
      %2498 = vmatpush1.msra.mxu0 %v2473
      %2499 = vmatprep.subr.mxu0 0.0
      %2500 = vmatpush1.msra.mxu0 %v2474
      %2501 = vmatprep.subr.mxu0 0.0
      %2502 = vmatpush1.msra.mxu0 %v2475
      %2503 = vmatprep.subr.mxu0 0.0
      %2504 = vmatpush1.msra.mxu0 0.0
      %2505 = vmatprep.subr.mxu0 0.0
      %2506 = vmatpush1.msra.mxu0 0.0
      %2507 = vmatprep.subr.mxu0 0.0
      %2508 = vmatpush1.msra.mxu0 0.0
      %2509 = vmatprep.subr.mxu0 0.0
      %2510 = vmatpush1.msra.mxu0 0.0
      %2511 = vmatprep.subr.mxu0 0.0
      %2512 = vmatpush1.msra.mxu0 0.0
      %2513 = vmatprep.subr.mxu0 0.0
      %2514 = vmatpush1.msra.mxu0 0.0
      %2515 = vmatprep.subr.mxu0 0.0
      %2516 = vmatpush1.msra.mxu0 0.0
      %2517 = vmatprep.subr.mxu0 0.0
      %2518 = vmatpush1.msra.mxu0 0.0
      %2519 = vmatprep.subr.mxu0 0.0
      %2520 = vmatpush1.msra.mxu0 0.0
      %2521 = vmatprep.subr.mxu0 0.0
      %2522 = vmatpush1.msra.mxu0 0.0
      %2523 = vmatprep.subr.mxu0 0.0
      %2524 = vmatpush1.msra.mxu0 0.0
      %2525 = vmatprep.subr.mxu0 0.0
      %2526 = vmatpush1.msra.mxu0 0.0
      %2527 = vmatprep.subr.mxu0 0.0
      %2528 = vmatpush1.msra.mxu0 0.0
      %2529 = vmatprep.subr.mxu0 0.0
      %2530 = vmatpush1.msra.mxu0 0.0
      %2531 = vmatprep.subr.mxu0 0.0
      %2532 = vmatpush1.msra.mxu0 0.0
      %2533 = vmatprep.subr.mxu0 0.0
      %2534 = vmatpush1.msra.mxu0 0.0
      %2535 = vmatprep.subr.mxu0 0.0
      %2536 = vmatpush1.msra.mxu0 0.0
      %2537 = vmatprep.subr.mxu0 0.0
      %2538 = vmatpush1.msra.mxu0 0.0
      %2539 = vmatprep.subr.mxu0 0.0
      %2540 = vmatpush1.msra.mxu0 0.0
      %2541 = vmatprep.subr.mxu0 0.0
      %2542 = vmatpush1.msra.mxu0 0.0
      %2543 = vmatprep.subr.mxu0 0.0
      %2544 = vmatpush1.msra.mxu0 0.0
      %2545 = vmatprep.subr.mxu0 0.0
      %2546 = vmatpush1.msra.mxu0 0.0
      %2547 = vmatprep.subr.mxu0 0.0
      %2548 = vmatpush1.msra.mxu0 0.0
      %2549 = vmatprep.subr.mxu0 0.0
      %2550 = vmatpush1.msra.mxu0 0.0
      %2551 = vmatprep.subr.mxu0 0.0
      %2552 = vmatpush1.msra.mxu0 0.0
      %2553 = vmatprep.subr.mxu0 0.0
      %2554 = vmatpush1.msra.mxu0 0.0
      %2555 = vmatprep.subr.mxu0 0.0
      %2556 = vmatpush1.msra.mxu0 0.0
      %2557 = vmatprep.subr.mxu0 0.0
      %2558 = vmatpush1.msra.mxu0 0.0
      %2559 = vmatprep.mubr.f32.mxu0 0.0
      %2560 = vmatmul.mubr.f32.gmra.mrb[0].mxu0 %v2484
      %v2561 = vpop.f32.mrb[0].mxu0
      %v2562 = vadd.f32 %v2481, %v2561
      %v2563 = vpop.f32.mrb[0].mxu0
      %2564 = vmatprep.mubr.f32.mxu0 0.0
      %2565 = vmatmul.mubr.f32.gmra.mrb[0].mxu0 %v2487
      %v2566 = vpop.f32.mrb[0].mxu0
      %v2567 = vadd.f32 %v2481, %v2566
      %v2568 = vpop.f32.mrb[0].mxu0
      %2569 = vmatprep.mubr.f32.mxu0 0.0
      %2570 = vmatmul.mubr.f32.gmra.mrb[0].mxu0 %v2490
      %v2571 = vpop.f32.mrb[0].mxu0
      %v2572 = vadd.f32 %v2481, %v2571
      %v2573 = vpop.f32.mrb[0].mxu0
      %2574 = vmatprep.mubr.f32.mxu0 0.0
      %2575 = vmatmul.mubr.f32.gmra.mrb[0].mxu0 %v2493
      %v2576 = vpop.f32.mrb[0].mxu0
      %v2577 = vadd.f32 %v2481, %v2576
      %v2578 = vpop.f32.mrb[0].mxu0
      %2579 = vdwg.mxu0
      %v2580 = vmax.f32 %v2562, 0.0
      %v2581 = vmax.f32 %v2567, 0.0
      %v2582 = vmax.f32 %v2572, 0.0
      %v2583 = vmax.f32 %v2577, 0.0
      %v2584 = vld [vmem:[%s12] sm:$0xff]
      %v2585 = vld [vmem:[%s12 + $0x8] sm:$0xff]
      %v2586 = vld [vmem:[%s12 + $0x10] sm:$0xff]
      %v2587 = vld [vmem:[%s12 + $0x18] sm:$0xff]
      %v2588 = vld [vmem:[%s12 + $0x20] sm:$0xff]
      %v2589 = vld [vmem:[%s12 + $0x28] sm:$0xff]
      %v2590 = vld [vmem:[%s12 + $0x30] sm:$0xff]
      %v2591 = vld [vmem:[%s12 + $0x38] sm:$0xff]
      %v2592 = vld [vmem:[%s13] sm:$0x1]
      %v2594 = vlaneseq
      %v2595 = vshrl.u32 %v2594, 7
      %v2596 = vsub.s32 0, %v2595
      %v2597 = vrot.slane %v2592, %v2596
      %vm2599 = vcmask 523264
      %v2601 = vsel %vm2599, %v2580, 0
      %v2604 = vsel %vm2599, %v2581, 0
      %v2607 = vsel %vm2599, %v2582, 0
      %v2610 = vsel %vm2599, %v2583, 0
      %2612 = vmatprep.subr.mxu0 0.0
      %2613 = vmatpush1.msra.mxu0 %v2584
      %2614 = vmatprep.subr.mxu0 0.0
      %2615 = vmatpush1.msra.mxu0 %v2585
      %2616 = vmatprep.subr.mxu0 0.0
      %2617 = vmatpush1.msra.mxu0 %v2586
      %2618 = vmatprep.subr.mxu0 0.0
      %2619 = vmatpush1.msra.mxu0 %v2587
      %2620 = vmatprep.subr.mxu0 0.0
      %2621 = vmatpush1.msra.mxu0 %v2588
      %2622 = vmatprep.subr.mxu0 0.0
      %2623 = vmatpush1.msra.mxu0 %v2589
      %2624 = vmatprep.subr.mxu0 0.0
      %2625 = vmatpush1.msra.mxu0 %v2590
      %2626 = vmatprep.subr.mxu0 0.0
      %2627 = vmatpush1.msra.mxu0 %v2591
      %2628 = vmatprep.subr.mxu0 0.0
      %2629 = vmatpush1.msra.mxu0 0.0
      %2630 = vmatprep.subr.mxu0 0.0
      %2631 = vmatpush1.msra.mxu0 0.0
      %2632 = vmatprep.subr.mxu0 0.0
      %2633 = vmatpush1.msra.mxu0 0.0
      %2634 = vmatprep.subr.mxu0 0.0
      %2635 = vmatpush1.msra.mxu0 0.0
      %2636 = vmatprep.subr.mxu0 0.0
      %2637 = vmatpush1.msra.mxu0 0.0
      %2638 = vmatprep.subr.mxu0 0.0
      %2639 = vmatpush1.msra.mxu0 0.0
      %2640 = vmatprep.subr.mxu0 0.0
      %2641 = vmatpush1.msra.mxu0 0.0
      %2642 = vmatprep.subr.mxu0 0.0
      %2643 = vmatpush1.msra.mxu0 0.0
      %2644 = vmatprep.subr.mxu0 0.0
      %2645 = vmatpush1.msra.mxu0 0.0
      %2646 = vmatprep.subr.mxu0 0.0
      %2647 = vmatpush1.msra.mxu0 0.0
      %2648 = vmatprep.subr.mxu0 0.0
      %2649 = vmatpush1.msra.mxu0 0.0
      %2650 = vmatprep.subr.mxu0 0.0
      %2651 = vmatpush1.msra.mxu0 0.0
      %2652 = vmatprep.subr.mxu0 0.0
      %2653 = vmatpush1.msra.mxu0 0.0
      %2654 = vmatprep.subr.mxu0 0.0
      %2655 = vmatpush1.msra.mxu0 0.0
      %2656 = vmatprep.subr.mxu0 0.0
      %2657 = vmatpush1.msra.mxu0 0.0
      %2658 = vmatprep.subr.mxu0 0.0
      %2659 = vmatpush1.msra.mxu0 0.0
      %2660 = vmatprep.subr.mxu0 0.0
      %2661 = vmatpush1.msra.mxu0 0.0
      %2662 = vmatprep.subr.mxu0 0.0
      %2663 = vmatpush1.msra.mxu0 0.0
      %2664 = vmatprep.subr.mxu0 0.0
      %2665 = vmatpush1.msra.mxu0 0.0
      %2666 = vmatprep.subr.mxu0 0.0
      %2667 = vmatpush1.msra.mxu0 0.0
      %2668 = vmatprep.subr.mxu0 0.0
      %2669 = vmatpush1.msra.mxu0 0.0
      %2670 = vmatprep.subr.mxu0 0.0
      %2671 = vmatpush1.msra.mxu0 0.0
      %2672 = vmatprep.subr.mxu0 0.0
      %2673 = vmatpush1.msra.mxu0 0.0
      %2674 = vmatprep.subr.mxu0 0.0
      %2675 = vmatpush1.msra.mxu0 0.0
      %2676 = vmatprep.mubr.f32.mxu0 0.0
      %2677 = vmatmul.mubr.f32.gmra.mrb[0].mxu0 %v2601
      %v2678 = vpop.f32.mrb[0].mxu0
      %v2679 = vadd.f32 %v2597, %v2678
      %v2680 = vpop.f32.mrb[0].mxu0
      %2681 = vmatprep.mubr.f32.mxu0 0.0
      %2682 = vmatmul.mubr.f32.gmra.mrb[0].mxu0 %v2604
      %v2683 = vpop.f32.mrb[0].mxu0
      %v2684 = vadd.f32 %v2597, %v2683
      %v2685 = vpop.f32.mrb[0].mxu0
      %2686 = vmatprep.mubr.f32.mxu0 0.0
      %2687 = vmatmul.mubr.f32.gmra.mrb[0].mxu0 %v2607
      %v2688 = vpop.f32.mrb[0].mxu0
      %v2689 = vadd.f32 %v2597, %v2688
      %v2690 = vpop.f32.mrb[0].mxu0
      %2691 = vmatprep.mubr.f32.mxu0 0.0
      %2692 = vmatmul.mubr.f32.gmra.mrb[0].mxu0 %v2610
      %v2693 = vpop.f32.mrb[0].mxu0
      %v2694 = vadd.f32 %v2597, %v2693
      %v2695 = vpop.f32.mrb[0].mxu0
      %2696 = vdwg.mxu0
      %v2697 = vadd.f32 %v2468, %v2679
      %v2698 = vadd.f32 %v2469, %v2684
      %v2699 = vadd.f32 %v2470, %v2689
      %v2700 = vadd.f32 %v2471, %v2694
      %v2701 = vld [vmem:[%s14] sm:$0x1]
      %v2702 = vld [vmem:[%s15] sm:$0x1]
      %v2703 = vsel %vm765, %v2697, 0.0
      %2704 = vadd.xlane.f32.xlu0 %v2703
      %v2705 = vpop.xlane.xlu0 %2704
      %v2706 = vsel %vm765, %v2698, 0.0
      %2707 = vadd.xlane.f32.xlu0 %v2706
      %v2708 = vpop.xlane.xlu0 %2707
      %v2709 = vsel %vm765, %v2699, 0.0
      %2710 = vadd.xlane.f32.xlu0 %v2709
      %v2711 = vpop.xlane.xlu0 %2710
      %v2712 = vsel %vm765, %v2700, 0.0
      %2713 = vadd.xlane.f32.xlu0 %v2712
      %v2714 = vpop.xlane.xlu0 %2713
      %v2715 = vmul.f32 %v2705, %v2411
      %v2716 = vmul.f32 %v2708, %v2411
      %v2717 = vmul.f32 %v2711, %v2411
      %v2718 = vmul.f32 %v2714, %v2411
      %v2719 = vsub.f32 %v2697, %v2715
      %v2720 = vsub.f32 %v2698, %v2716
      %v2721 = vsub.f32 %v2699, %v2717
      %v2722 = vsub.f32 %v2700, %v2718
      %v2723 = vmul.f32 %v2719, %v2719
      %v2724 = vmul.f32 %v2720, %v2720
      %v2725 = vmul.f32 %v2721, %v2721
      %v2726 = vmul.f32 %v2722, %v2722
      %v2727 = vsel %vm765, %v2723, 0.0
      %2728 = vadd.xlane.f32.xlu0 %v2727
      %v2729 = vpop.xlane.xlu0 %2728
      %v2730 = vsel %vm765, %v2724, 0.0
      %2731 = vadd.xlane.f32.xlu0 %v2730
      %v2732 = vpop.xlane.xlu0 %2731
      %v2733 = vsel %vm765, %v2725, 0.0
      %2734 = vadd.xlane.f32.xlu0 %v2733
      %v2735 = vpop.xlane.xlu0 %2734
      %v2736 = vsel %vm765, %v2726, 0.0
      %2737 = vadd.xlane.f32.xlu0 %v2736
      %v2738 = vpop.xlane.xlu0 %2737
      %v2739 = vmul.f32 %v2729, %v2411
      %v2740 = vmul.f32 %v2732, %v2411
      %v2741 = vmul.f32 %v2735, %v2411
      %v2742 = vmul.f32 %v2738, %v2411
      %v2743 = vadd.f32 %v2739, 1e-05
      %v2744 = vadd.f32 %v2740, 1e-05
      %v2745 = vadd.f32 %v2741, 1e-05
      %v2746 = vadd.f32 %v2742, 1e-05
      %v2747 = vrsqrt.pop %v2743
      %v2748 = vrsqrt.pop %v2744
      %v2749 = vrsqrt.pop %v2745
      %v2750 = vrsqrt.pop %v2746
      %v2751 = vmul.f32 %v2719, %v2747
      %v2752 = vmul.f32 %v2720, %v2748
      %v2753 = vmul.f32 %v2721, %v2749
      %v2754 = vmul.f32 %v2722, %v2750
      %v2756 = vlaneseq
      %v2757 = vshrl.u32 %v2756, 7
      %v2758 = vsub.s32 0, %v2757
      %v2759 = vrot.slane %v2701, %v2758
      %v2761 = vmul.f32 %v2751, %v2759
      %v2762 = vmul.f32 %v2752, %v2759
      %v2763 = vmul.f32 %v2753, %v2759
      %v2764 = vmul.f32 %v2754, %v2759
      %v2766 = vlaneseq
      %v2767 = vshrl.u32 %v2766, 7
      %v2768 = vsub.s32 0, %v2767
      %v2769 = vrot.slane %v2702, %v2768
      %v2771 = vadd.f32 %v2761, %v2769
      %v2772 = vadd.f32 %v2762, %v2769
      %v2773 = vadd.f32 %v2763, %v2769
      %v2774 = vadd.f32 %v2764, %v2769
      %s2775 = scalar_lea.vmem %s4, 32
      %v2776 = vld [vmem:[%s2775] sm:$0xff]
      %v2777 = vld [vmem:[%s2775 + $0x8] sm:$0xff]
      %v2778 = vld [vmem:[%s2775 + $0x10] sm:$0xff]
      %v2779 = vld [vmem:[%s2775 + $0x18] sm:$0xff]
      %s2780 = scalar_lea.vmem %s5, 1
      %v2781 = vld [vmem:[%s2780] sm:$0x1]
      %s2782 = scalar_lea.vmem %s6, 32
      %v2783 = vld [vmem:[%s2782] sm:$0xff]
      %v2784 = vld [vmem:[%s2782 + $0x8] sm:$0xff]
      %v2785 = vld [vmem:[%s2782 + $0x10] sm:$0xff]
      %v2786 = vld [vmem:[%s2782 + $0x18] sm:$0xff]
      %s2787 = scalar_lea.vmem %s7, 1
      %v2788 = vld [vmem:[%s2787] sm:$0x1]
      %v2790 = vlaneseq
      %v2791 = vshrl.u32 %v2790, 7
      %v2792 = vsub.s32 0, %v2791
      %v2793 = vrot.slane %v2781, %v2792
      %v2796 = vsel %vm765, %v2771, 0
      %v2799 = vsel %vm765, %v2772, 0
      %v2802 = vsel %vm765, %v2773, 0
      %v2805 = vsel %vm765, %v2774, 0
      %2807 = vmatprep.subr.mxu0 0.0
      %2808 = vmatpush1.msra.mxu0 %v2776
      %2809 = vmatprep.subr.mxu0 0.0
      %2810 = vmatpush1.msra.mxu0 %v2777
      %2811 = vmatprep.subr.mxu0 0.0
      %2812 = vmatpush1.msra.mxu0 %v2778
      %2813 = vmatprep.subr.mxu0 0.0
      %2814 = vmatpush1.msra.mxu0 %v2779
      %2815 = vmatprep.subr.mxu0 0.0
      %2816 = vmatpush1.msra.mxu0 0.0
      %2817 = vmatprep.subr.mxu0 0.0
      %2818 = vmatpush1.msra.mxu0 0.0
      %2819 = vmatprep.subr.mxu0 0.0
      %2820 = vmatpush1.msra.mxu0 0.0
      %2821 = vmatprep.subr.mxu0 0.0
      %2822 = vmatpush1.msra.mxu0 0.0
      %2823 = vmatprep.subr.mxu0 0.0
      %2824 = vmatpush1.msra.mxu0 0.0
      %2825 = vmatprep.subr.mxu0 0.0
      %2826 = vmatpush1.msra.mxu0 0.0
      %2827 = vmatprep.subr.mxu0 0.0
      %2828 = vmatpush1.msra.mxu0 0.0
      %2829 = vmatprep.subr.mxu0 0.0
      %2830 = vmatpush1.msra.mxu0 0.0
      %2831 = vmatprep.subr.mxu0 0.0
      %2832 = vmatpush1.msra.mxu0 0.0
      %2833 = vmatprep.subr.mxu0 0.0
      %2834 = vmatpush1.msra.mxu0 0.0
      %2835 = vmatprep.subr.mxu0 0.0
      %2836 = vmatpush1.msra.mxu0 0.0
      %2837 = vmatprep.subr.mxu0 0.0
      %2838 = vmatpush1.msra.mxu0 0.0
      %2839 = vmatprep.subr.mxu0 0.0
      %2840 = vmatpush1.msra.mxu0 0.0
      %2841 = vmatprep.subr.mxu0 0.0
      %2842 = vmatpush1.msra.mxu0 0.0
      %2843 = vmatprep.subr.mxu0 0.0
      %2844 = vmatpush1.msra.mxu0 0.0
      %2845 = vmatprep.subr.mxu0 0.0
      %2846 = vmatpush1.msra.mxu0 0.0
      %2847 = vmatprep.subr.mxu0 0.0
      %2848 = vmatpush1.msra.mxu0 0.0
      %2849 = vmatprep.subr.mxu0 0.0
      %2850 = vmatpush1.msra.mxu0 0.0
      %2851 = vmatprep.subr.mxu0 0.0
      %2852 = vmatpush1.msra.mxu0 0.0
      %2853 = vmatprep.subr.mxu0 0.0
      %2854 = vmatpush1.msra.mxu0 0.0
      %2855 = vmatprep.subr.mxu0 0.0
      %2856 = vmatpush1.msra.mxu0 0.0
      %2857 = vmatprep.subr.mxu0 0.0
      %2858 = vmatpush1.msra.mxu0 0.0
      %2859 = vmatprep.subr.mxu0 0.0
      %2860 = vmatpush1.msra.mxu0 0.0
      %2861 = vmatprep.subr.mxu0 0.0
      %2862 = vmatpush1.msra.mxu0 0.0
      %2863 = vmatprep.subr.mxu0 0.0
      %2864 = vmatpush1.msra.mxu0 0.0
      %2865 = vmatprep.subr.mxu0 0.0
      %2866 = vmatpush1.msra.mxu0 0.0
      %2867 = vmatprep.subr.mxu0 0.0
      %2868 = vmatpush1.msra.mxu0 0.0
      %2869 = vmatprep.subr.mxu0 0.0
      %2870 = vmatpush1.msra.mxu0 0.0
      %2871 = vmatprep.mubr.f32.mxu0 0.0
      %2872 = vmatmul.mubr.f32.gmra.mrb[0].mxu0 %v2796
      %v2873 = vpop.f32.mrb[0].mxu0
      %v2874 = vadd.f32 %v2793, %v2873
      %v2875 = vpop.f32.mrb[0].mxu0
      %2876 = vmatprep.mubr.f32.mxu0 0.0
      %2877 = vmatmul.mubr.f32.gmra.mrb[0].mxu0 %v2799
      %v2878 = vpop.f32.mrb[0].mxu0
      %v2879 = vadd.f32 %v2793, %v2878
      %v2880 = vpop.f32.mrb[0].mxu0
      %2881 = vmatprep.mubr.f32.mxu0 0.0
      %2882 = vmatmul.mubr.f32.gmra.mrb[0].mxu0 %v2802
      %v2883 = vpop.f32.mrb[0].mxu0
      %v2884 = vadd.f32 %v2793, %v2883
      %v2885 = vpop.f32.mrb[0].mxu0
      %2886 = vmatprep.mubr.f32.mxu0 0.0
      %2887 = vmatmul.mubr.f32.gmra.mrb[0].mxu0 %v2805
      %v2888 = vpop.f32.mrb[0].mxu0
      %v2889 = vadd.f32 %v2793, %v2888
      %v2890 = vpop.f32.mrb[0].mxu0
      %2891 = vdwg.mxu0
      %2893 = vrot.lane.b32.xlu0 %v2874, 96
      %v2894 = vpop.permute.xlu0 %2893
      %v2895 = vsel %vm866, %v2874, 0
      %v2897 = vsel %vm866, %v2894, 0
      %2899 = vmatprep.subr.mxu0 0.0
      %2900 = vmatpush1.xpose.msra.mxu0 %v2897
      %2901 = vmatprep.subr.mxu0 0.0
      %2902 = vmatpush1.xpose.msra.mxu0 0.0
      %2903 = vmatprep.subr.mxu0 0.0
      %2904 = vmatpush1.xpose.msra.mxu0 0.0
      %2905 = vmatprep.subr.mxu0 0.0
      %2906 = vmatpush1.xpose.msra.mxu0 0.0
      %2907 = vmatprep.subr.mxu0 0.0
      %2908 = vmatpush1.xpose.msra.mxu0 0.0
      %2909 = vmatprep.subr.mxu0 0.0
      %2910 = vmatpush1.xpose.msra.mxu0 0.0
      %2911 = vmatprep.subr.mxu0 0.0
      %2912 = vmatpush1.xpose.msra.mxu0 0.0
      %2913 = vmatprep.subr.mxu0 0.0
      %2914 = vmatpush1.xpose.msra.mxu0 0.0
      %2915 = vmatprep.subr.mxu0 0.0
      %2916 = vmatpush1.xpose.msra.mxu0 0.0
      %2917 = vmatprep.subr.mxu0 0.0
      %2918 = vmatpush1.xpose.msra.mxu0 0.0
      %2919 = vmatprep.subr.mxu0 0.0
      %2920 = vmatpush1.xpose.msra.mxu0 0.0
      %2921 = vmatprep.subr.mxu0 0.0
      %2922 = vmatpush1.xpose.msra.mxu0 0.0
      %2923 = vmatprep.subr.mxu0 0.0
      %2924 = vmatpush1.xpose.msra.mxu0 0.0
      %2925 = vmatprep.subr.mxu0 0.0
      %2926 = vmatpush1.xpose.msra.mxu0 0.0
      %2927 = vmatprep.subr.mxu0 0.0
      %2928 = vmatpush1.xpose.msra.mxu0 0.0
      %2929 = vmatprep.subr.mxu0 0.0
      %2930 = vmatpush1.xpose.msra.mxu0 0.0
      %2931 = vmatprep.subr.mxu0 0.0
      %2932 = vmatpush1.xpose.msra.mxu0 0.0
      %2933 = vmatprep.subr.mxu0 0.0
      %2934 = vmatpush1.xpose.msra.mxu0 0.0
      %2935 = vmatprep.subr.mxu0 0.0
      %2936 = vmatpush1.xpose.msra.mxu0 0.0
      %2937 = vmatprep.subr.mxu0 0.0
      %2938 = vmatpush1.xpose.msra.mxu0 0.0
      %2939 = vmatprep.subr.mxu0 0.0
      %2940 = vmatpush1.xpose.msra.mxu0 0.0
      %2941 = vmatprep.subr.mxu0 0.0
      %2942 = vmatpush1.xpose.msra.mxu0 0.0
      %2943 = vmatprep.subr.mxu0 0.0
      %2944 = vmatpush1.xpose.msra.mxu0 0.0
      %2945 = vmatprep.subr.mxu0 0.0
      %2946 = vmatpush1.xpose.msra.mxu0 0.0
      %2947 = vmatprep.subr.mxu0 0.0
      %2948 = vmatpush1.xpose.msra.mxu0 0.0
      %2949 = vmatprep.subr.mxu0 0.0
      %2950 = vmatpush1.xpose.msra.mxu0 0.0
      %2951 = vmatprep.subr.mxu0 0.0
      %2952 = vmatpush1.xpose.msra.mxu0 0.0
      %2953 = vmatprep.subr.mxu0 0.0
      %2954 = vmatpush1.xpose.msra.mxu0 0.0
      %2955 = vmatprep.subr.mxu0 0.0
      %2956 = vmatpush1.xpose.msra.mxu0 0.0
      %2957 = vmatprep.subr.mxu0 0.0
      %2958 = vmatpush1.xpose.msra.mxu0 0.0
      %2959 = vmatprep.subr.mxu0 0.0
      %2960 = vmatpush1.xpose.msra.mxu0 0.0
      %2961 = vmatprep.subr.mxu0 0.0
      %2962 = vmatpush1.xpose.msra.mxu0 0.0
      %2963 = vmatprep.mubr.f32.mxu0 0.0
      %2964 = vmatmul.mubr.f32.gmra.mrb[0].mxu0 %v2895
      %v2965 = vpop.f32.mrb[0].mxu0
      %v2966 = vadd.f32 0.0, %v2965
      %v2967 = vpop.f32.mrb[0].mxu0
      %2968 = vdwg.mxu0
      %2970 = vrot.lane.b32.xlu0 %v2879, 96
      %v2971 = vpop.permute.xlu0 %2970
      %v2972 = vsel %vm866, %v2879, 0
      %v2974 = vsel %vm866, %v2971, 0
      %2976 = vmatprep.subr.mxu0 0.0
      %2977 = vmatpush1.xpose.msra.mxu0 %v2974
      %2978 = vmatprep.subr.mxu0 0.0
      %2979 = vmatpush1.xpose.msra.mxu0 0.0
      %2980 = vmatprep.subr.mxu0 0.0
      %2981 = vmatpush1.xpose.msra.mxu0 0.0
      %2982 = vmatprep.subr.mxu0 0.0
      %2983 = vmatpush1.xpose.msra.mxu0 0.0
      %2984 = vmatprep.subr.mxu0 0.0
      %2985 = vmatpush1.xpose.msra.mxu0 0.0
      %2986 = vmatprep.subr.mxu0 0.0
      %2987 = vmatpush1.xpose.msra.mxu0 0.0
      %2988 = vmatprep.subr.mxu0 0.0
      %2989 = vmatpush1.xpose.msra.mxu0 0.0
      %2990 = vmatprep.subr.mxu0 0.0
      %2991 = vmatpush1.xpose.msra.mxu0 0.0
      %2992 = vmatprep.subr.mxu0 0.0
      %2993 = vmatpush1.xpose.msra.mxu0 0.0
      %2994 = vmatprep.subr.mxu0 0.0
      %2995 = vmatpush1.xpose.msra.mxu0 0.0
      %2996 = vmatprep.subr.mxu0 0.0
      %2997 = vmatpush1.xpose.msra.mxu0 0.0
      %2998 = vmatprep.subr.mxu0 0.0
      %2999 = vmatpush1.xpose.msra.mxu0 0.0
      %3000 = vmatprep.subr.mxu0 0.0
      %3001 = vmatpush1.xpose.msra.mxu0 0.0
      %3002 = vmatprep.subr.mxu0 0.0
      %3003 = vmatpush1.xpose.msra.mxu0 0.0
      %3004 = vmatprep.subr.mxu0 0.0
      %3005 = vmatpush1.xpose.msra.mxu0 0.0
      %3006 = vmatprep.subr.mxu0 0.0
      %3007 = vmatpush1.xpose.msra.mxu0 0.0
      %3008 = vmatprep.subr.mxu0 0.0
      %3009 = vmatpush1.xpose.msra.mxu0 0.0
      %3010 = vmatprep.subr.mxu0 0.0
      %3011 = vmatpush1.xpose.msra.mxu0 0.0
      %3012 = vmatprep.subr.mxu0 0.0
      %3013 = vmatpush1.xpose.msra.mxu0 0.0
      %3014 = vmatprep.subr.mxu0 0.0
      %3015 = vmatpush1.xpose.msra.mxu0 0.0
      %3016 = vmatprep.subr.mxu0 0.0
      %3017 = vmatpush1.xpose.msra.mxu0 0.0
      %3018 = vmatprep.subr.mxu0 0.0
      %3019 = vmatpush1.xpose.msra.mxu0 0.0
      %3020 = vmatprep.subr.mxu0 0.0
      %3021 = vmatpush1.xpose.msra.mxu0 0.0
      %3022 = vmatprep.subr.mxu0 0.0
      %3023 = vmatpush1.xpose.msra.mxu0 0.0
      %3024 = vmatprep.subr.mxu0 0.0
      %3025 = vmatpush1.xpose.msra.mxu0 0.0
      %3026 = vmatprep.subr.mxu0 0.0
      %3027 = vmatpush1.xpose.msra.mxu0 0.0
      %3028 = vmatprep.subr.mxu0 0.0
      %3029 = vmatpush1.xpose.msra.mxu0 0.0
      %3030 = vmatprep.subr.mxu0 0.0
      %3031 = vmatpush1.xpose.msra.mxu0 0.0
      %3032 = vmatprep.subr.mxu0 0.0
      %3033 = vmatpush1.xpose.msra.mxu0 0.0
      %3034 = vmatprep.subr.mxu0 0.0
      %3035 = vmatpush1.xpose.msra.mxu0 0.0
      %3036 = vmatprep.subr.mxu0 0.0
      %3037 = vmatpush1.xpose.msra.mxu0 0.0
      %3038 = vmatprep.subr.mxu0 0.0
      %3039 = vmatpush1.xpose.msra.mxu0 0.0
      %3040 = vmatprep.mubr.f32.mxu0 0.0
      %3041 = vmatmul.mubr.f32.gmra.mrb[0].mxu0 %v2972
      %v3042 = vpop.f32.mrb[0].mxu0
      %v3043 = vadd.f32 0.0, %v3042
      %v3044 = vpop.f32.mrb[0].mxu0
      %3045 = vdwg.mxu0
      %3047 = vrot.lane.b32.xlu0 %v2884, 96
      %v3048 = vpop.permute.xlu0 %3047
      %v3049 = vsel %vm866, %v2884, 0
      %v3051 = vsel %vm866, %v3048, 0
      %3053 = vmatprep.subr.mxu0 0.0
      %3054 = vmatpush1.xpose.msra.mxu0 %v3051
      %3055 = vmatprep.subr.mxu0 0.0
      %3056 = vmatpush1.xpose.msra.mxu0 0.0
      %3057 = vmatprep.subr.mxu0 0.0
      %3058 = vmatpush1.xpose.msra.mxu0 0.0
      %3059 = vmatprep.subr.mxu0 0.0
      %3060 = vmatpush1.xpose.msra.mxu0 0.0
      %3061 = vmatprep.subr.mxu0 0.0
      %3062 = vmatpush1.xpose.msra.mxu0 0.0
      %3063 = vmatprep.subr.mxu0 0.0
      %3064 = vmatpush1.xpose.msra.mxu0 0.0
      %3065 = vmatprep.subr.mxu0 0.0
      %3066 = vmatpush1.xpose.msra.mxu0 0.0
      %3067 = vmatprep.subr.mxu0 0.0
      %3068 = vmatpush1.xpose.msra.mxu0 0.0
      %3069 = vmatprep.subr.mxu0 0.0
      %3070 = vmatpush1.xpose.msra.mxu0 0.0
      %3071 = vmatprep.subr.mxu0 0.0
      %3072 = vmatpush1.xpose.msra.mxu0 0.0
      %3073 = vmatprep.subr.mxu0 0.0
      %3074 = vmatpush1.xpose.msra.mxu0 0.0
      %3075 = vmatprep.subr.mxu0 0.0
      %3076 = vmatpush1.xpose.msra.mxu0 0.0
      %3077 = vmatprep.subr.mxu0 0.0
      %3078 = vmatpush1.xpose.msra.mxu0 0.0
      %3079 = vmatprep.subr.mxu0 0.0
      %3080 = vmatpush1.xpose.msra.mxu0 0.0
      %3081 = vmatprep.subr.mxu0 0.0
      %3082 = vmatpush1.xpose.msra.mxu0 0.0
      %3083 = vmatprep.subr.mxu0 0.0
      %3084 = vmatpush1.xpose.msra.mxu0 0.0
      %3085 = vmatprep.subr.mxu0 0.0
      %3086 = vmatpush1.xpose.msra.mxu0 0.0
      %3087 = vmatprep.subr.mxu0 0.0
      %3088 = vmatpush1.xpose.msra.mxu0 0.0
      %3089 = vmatprep.subr.mxu0 0.0
      %3090 = vmatpush1.xpose.msra.mxu0 0.0
      %3091 = vmatprep.subr.mxu0 0.0
      %3092 = vmatpush1.xpose.msra.mxu0 0.0
      %3093 = vmatprep.subr.mxu0 0.0
      %3094 = vmatpush1.xpose.msra.mxu0 0.0
      %3095 = vmatprep.subr.mxu0 0.0
      %3096 = vmatpush1.xpose.msra.mxu0 0.0
      %3097 = vmatprep.subr.mxu0 0.0
      %3098 = vmatpush1.xpose.msra.mxu0 0.0
      %3099 = vmatprep.subr.mxu0 0.0
      %3100 = vmatpush1.xpose.msra.mxu0 0.0
      %3101 = vmatprep.subr.mxu0 0.0
      %3102 = vmatpush1.xpose.msra.mxu0 0.0
      %3103 = vmatprep.subr.mxu0 0.0
      %3104 = vmatpush1.xpose.msra.mxu0 0.0
      %3105 = vmatprep.subr.mxu0 0.0
      %3106 = vmatpush1.xpose.msra.mxu0 0.0
      %3107 = vmatprep.subr.mxu0 0.0
      %3108 = vmatpush1.xpose.msra.mxu0 0.0
      %3109 = vmatprep.subr.mxu0 0.0
      %3110 = vmatpush1.xpose.msra.mxu0 0.0
      %3111 = vmatprep.subr.mxu0 0.0
      %3112 = vmatpush1.xpose.msra.mxu0 0.0
      %3113 = vmatprep.subr.mxu0 0.0
      %3114 = vmatpush1.xpose.msra.mxu0 0.0
      %3115 = vmatprep.subr.mxu0 0.0
      %3116 = vmatpush1.xpose.msra.mxu0 0.0
      %3117 = vmatprep.mubr.f32.mxu0 0.0
      %3118 = vmatmul.mubr.f32.gmra.mrb[0].mxu0 %v3049
      %v3119 = vpop.f32.mrb[0].mxu0
      %v3120 = vadd.f32 0.0, %v3119
      %v3121 = vpop.f32.mrb[0].mxu0
      %3122 = vdwg.mxu0
      %3124 = vrot.lane.b32.xlu0 %v2889, 96
      %v3125 = vpop.permute.xlu0 %3124
      %v3126 = vsel %vm866, %v2889, 0
      %v3128 = vsel %vm866, %v3125, 0
      %3130 = vmatprep.subr.mxu0 0.0
      %3131 = vmatpush1.xpose.msra.mxu0 %v3128
      %3132 = vmatprep.subr.mxu0 0.0
      %3133 = vmatpush1.xpose.msra.mxu0 0.0
      %3134 = vmatprep.subr.mxu0 0.0
      %3135 = vmatpush1.xpose.msra.mxu0 0.0
      %3136 = vmatprep.subr.mxu0 0.0
      %3137 = vmatpush1.xpose.msra.mxu0 0.0
      %3138 = vmatprep.subr.mxu0 0.0
      %3139 = vmatpush1.xpose.msra.mxu0 0.0
      %3140 = vmatprep.subr.mxu0 0.0
      %3141 = vmatpush1.xpose.msra.mxu0 0.0
      %3142 = vmatprep.subr.mxu0 0.0
      %3143 = vmatpush1.xpose.msra.mxu0 0.0
      %3144 = vmatprep.subr.mxu0 0.0
      %3145 = vmatpush1.xpose.msra.mxu0 0.0
      %3146 = vmatprep.subr.mxu0 0.0
      %3147 = vmatpush1.xpose.msra.mxu0 0.0
      %3148 = vmatprep.subr.mxu0 0.0
      %3149 = vmatpush1.xpose.msra.mxu0 0.0
      %3150 = vmatprep.subr.mxu0 0.0
      %3151 = vmatpush1.xpose.msra.mxu0 0.0
      %3152 = vmatprep.subr.mxu0 0.0
      %3153 = vmatpush1.xpose.msra.mxu0 0.0
      %3154 = vmatprep.subr.mxu0 0.0
      %3155 = vmatpush1.xpose.msra.mxu0 0.0
      %3156 = vmatprep.subr.mxu0 0.0
      %3157 = vmatpush1.xpose.msra.mxu0 0.0
      %3158 = vmatprep.subr.mxu0 0.0
      %3159 = vmatpush1.xpose.msra.mxu0 0.0
      %3160 = vmatprep.subr.mxu0 0.0
      %3161 = vmatpush1.xpose.msra.mxu0 0.0
      %3162 = vmatprep.subr.mxu0 0.0
      %3163 = vmatpush1.xpose.msra.mxu0 0.0
      %3164 = vmatprep.subr.mxu0 0.0
      %3165 = vmatpush1.xpose.msra.mxu0 0.0
      %3166 = vmatprep.subr.mxu0 0.0
      %3167 = vmatpush1.xpose.msra.mxu0 0.0
      %3168 = vmatprep.subr.mxu0 0.0
      %3169 = vmatpush1.xpose.msra.mxu0 0.0
      %3170 = vmatprep.subr.mxu0 0.0
      %3171 = vmatpush1.xpose.msra.mxu0 0.0
      %3172 = vmatprep.subr.mxu0 0.0
      %3173 = vmatpush1.xpose.msra.mxu0 0.0
      %3174 = vmatprep.subr.mxu0 0.0
      %3175 = vmatpush1.xpose.msra.mxu0 0.0
      %3176 = vmatprep.subr.mxu0 0.0
      %3177 = vmatpush1.xpose.msra.mxu0 0.0
      %3178 = vmatprep.subr.mxu0 0.0
      %3179 = vmatpush1.xpose.msra.mxu0 0.0
      %3180 = vmatprep.subr.mxu0 0.0
      %3181 = vmatpush1.xpose.msra.mxu0 0.0
      %3182 = vmatprep.subr.mxu0 0.0
      %3183 = vmatpush1.xpose.msra.mxu0 0.0
      %3184 = vmatprep.subr.mxu0 0.0
      %3185 = vmatpush1.xpose.msra.mxu0 0.0
      %3186 = vmatprep.subr.mxu0 0.0
      %3187 = vmatpush1.xpose.msra.mxu0 0.0
      %3188 = vmatprep.subr.mxu0 0.0
      %3189 = vmatpush1.xpose.msra.mxu0 0.0
      %3190 = vmatprep.subr.mxu0 0.0
      %3191 = vmatpush1.xpose.msra.mxu0 0.0
      %3192 = vmatprep.subr.mxu0 0.0
      %3193 = vmatpush1.xpose.msra.mxu0 0.0
      %3194 = vmatprep.mubr.f32.mxu0 0.0
      %3195 = vmatmul.mubr.f32.gmra.mrb[0].mxu0 %v3126
      %v3196 = vpop.f32.mrb[0].mxu0
      %v3197 = vadd.f32 0.0, %v3196
      %v3198 = vpop.f32.mrb[0].mxu0
      %3199 = vdwg.mxu0
      %v3200 = vmul.f32 %v2966, 0.25
      %v3201 = vmul.f32 %v3043, 0.25
      %v3202 = vmul.f32 %v3120, 0.25
      %v3203 = vmul.f32 %v3197, 0.25
      %v3204 = vsel %vm1176, %v3200, -inf
      %3205 = vmax.xlane.f32.xlu0 %v3204
      %v3206 = vpop.xlane.xlu0 %3205
      %v3207 = vsel %vm1176, %v3201, -inf
      %3208 = vmax.xlane.f32.xlu0 %v3207
      %v3209 = vpop.xlane.xlu0 %3208
      %v3210 = vsel %vm1176, %v3202, -inf
      %3211 = vmax.xlane.f32.xlu0 %v3210
      %v3212 = vpop.xlane.xlu0 %3211
      %v3213 = vsel %vm1176, %v3203, -inf
      %3214 = vmax.xlane.f32.xlu0 %v3213
      %v3215 = vpop.xlane.xlu0 %3214
      %v3216 = vsub.f32 %v3200, %v3206
      %v3217 = vsub.f32 %v3201, %v3209
      %v3218 = vsub.f32 %v3202, %v3212
      %v3219 = vsub.f32 %v3203, %v3215
      %v3220 = vmul.f32 %v3216, 1.442695
      %v3221 = vpow.pop %v3220
      %v3222 = vmul.f32 %v3217, 1.442695
      %v3223 = vpow.pop %v3222
      %v3224 = vmul.f32 %v3218, 1.442695
      %v3225 = vpow.pop %v3224
      %v3226 = vmul.f32 %v3219, 1.442695
      %v3227 = vpow.pop %v3226
      %v3228 = vsel %vm1176, %v3221, 0.0
      %3229 = vadd.xlane.f32.xlu0 %v3228
      %v3230 = vpop.xlane.xlu0 %3229
      %v3231 = vsel %vm1176, %v3223, 0.0
      %3232 = vadd.xlane.f32.xlu0 %v3231
      %v3233 = vpop.xlane.xlu0 %3232
      %v3234 = vsel %vm1176, %v3225, 0.0
      %3235 = vadd.xlane.f32.xlu0 %v3234
      %v3236 = vpop.xlane.xlu0 %3235
      %v3237 = vsel %vm1176, %v3227, 0.0
      %3238 = vadd.xlane.f32.xlu0 %v3237
      %v3239 = vpop.xlane.xlu0 %3238
      %v3240 = vrcp.pop %v3230
      %v3241 = vmul.f32 %v3221, %v3240
      %v3242 = vrcp.pop %v3233
      %v3243 = vmul.f32 %v3223, %v3242
      %v3244 = vrcp.pop %v3236
      %v3245 = vmul.f32 %v3225, %v3244
      %v3246 = vrcp.pop %v3239
      %v3247 = vmul.f32 %v3227, %v3246
      %3248 = vrot.lane.b32.xlu0 %v2874, 64
      %v3249 = vpop.permute.xlu0 %3248
      %v3252 = vsel %vm1176, %v3241, 0
      %3254 = vmatprep.subr.mxu0 0.0
      %3255 = vmatpush1.msra.mxu0 %v3249
      %3256 = vmatprep.subr.mxu0 0.0
      %3257 = vmatpush1.msra.mxu0 0.0
      %3258 = vmatprep.subr.mxu0 0.0
      %3259 = vmatpush1.msra.mxu0 0.0
      %3260 = vmatprep.subr.mxu0 0.0
      %3261 = vmatpush1.msra.mxu0 0.0
      %3262 = vmatprep.subr.mxu0 0.0
      %3263 = vmatpush1.msra.mxu0 0.0
      %3264 = vmatprep.subr.mxu0 0.0
      %3265 = vmatpush1.msra.mxu0 0.0
      %3266 = vmatprep.subr.mxu0 0.0
      %3267 = vmatpush1.msra.mxu0 0.0
      %3268 = vmatprep.subr.mxu0 0.0
      %3269 = vmatpush1.msra.mxu0 0.0
      %3270 = vmatprep.subr.mxu0 0.0
      %3271 = vmatpush1.msra.mxu0 0.0
      %3272 = vmatprep.subr.mxu0 0.0
      %3273 = vmatpush1.msra.mxu0 0.0
      %3274 = vmatprep.subr.mxu0 0.0
      %3275 = vmatpush1.msra.mxu0 0.0
      %3276 = vmatprep.subr.mxu0 0.0
      %3277 = vmatpush1.msra.mxu0 0.0
      %3278 = vmatprep.subr.mxu0 0.0
      %3279 = vmatpush1.msra.mxu0 0.0
      %3280 = vmatprep.subr.mxu0 0.0
      %3281 = vmatpush1.msra.mxu0 0.0
      %3282 = vmatprep.subr.mxu0 0.0
      %3283 = vmatpush1.msra.mxu0 0.0
      %3284 = vmatprep.subr.mxu0 0.0
      %3285 = vmatpush1.msra.mxu0 0.0
      %3286 = vmatprep.subr.mxu0 0.0
      %3287 = vmatpush1.msra.mxu0 0.0
      %3288 = vmatprep.subr.mxu0 0.0
      %3289 = vmatpush1.msra.mxu0 0.0
      %3290 = vmatprep.subr.mxu0 0.0
      %3291 = vmatpush1.msra.mxu0 0.0
      %3292 = vmatprep.subr.mxu0 0.0
      %3293 = vmatpush1.msra.mxu0 0.0
      %3294 = vmatprep.subr.mxu0 0.0
      %3295 = vmatpush1.msra.mxu0 0.0
      %3296 = vmatprep.subr.mxu0 0.0
      %3297 = vmatpush1.msra.mxu0 0.0
      %3298 = vmatprep.subr.mxu0 0.0
      %3299 = vmatpush1.msra.mxu0 0.0
      %3300 = vmatprep.subr.mxu0 0.0
      %3301 = vmatpush1.msra.mxu0 0.0
      %3302 = vmatprep.subr.mxu0 0.0
      %3303 = vmatpush1.msra.mxu0 0.0
      %3304 = vmatprep.subr.mxu0 0.0
      %3305 = vmatpush1.msra.mxu0 0.0
      %3306 = vmatprep.subr.mxu0 0.0
      %3307 = vmatpush1.msra.mxu0 0.0
      %3308 = vmatprep.subr.mxu0 0.0
      %3309 = vmatpush1.msra.mxu0 0.0
      %3310 = vmatprep.subr.mxu0 0.0
      %3311 = vmatpush1.msra.mxu0 0.0
      %3312 = vmatprep.subr.mxu0 0.0
      %3313 = vmatpush1.msra.mxu0 0.0
      %3314 = vmatprep.subr.mxu0 0.0
      %3315 = vmatpush1.msra.mxu0 0.0
      %3316 = vmatprep.subr.mxu0 0.0
      %3317 = vmatpush1.msra.mxu0 0.0
      %3318 = vmatprep.mubr.f32.mxu0 0.0
      %3319 = vmatmul.mubr.f32.gmra.mrb[0].mxu0 %v3252
      %v3320 = vpop.f32.mrb[0].mxu0
      %v3321 = vadd.f32 0.0, %v3320
      %v3322 = vpop.f32.mrb[0].mxu0
      %3323 = vdwg.mxu0
      %3324 = vrot.lane.b32.xlu0 %v2879, 64
      %v3325 = vpop.permute.xlu0 %3324
      %v3328 = vsel %vm1176, %v3243, 0
      %3330 = vmatprep.subr.mxu0 0.0
      %3331 = vmatpush1.msra.mxu0 %v3325
      %3332 = vmatprep.subr.mxu0 0.0
      %3333 = vmatpush1.msra.mxu0 0.0
      %3334 = vmatprep.subr.mxu0 0.0
      %3335 = vmatpush1.msra.mxu0 0.0
      %3336 = vmatprep.subr.mxu0 0.0
      %3337 = vmatpush1.msra.mxu0 0.0
      %3338 = vmatprep.subr.mxu0 0.0
      %3339 = vmatpush1.msra.mxu0 0.0
      %3340 = vmatprep.subr.mxu0 0.0
      %3341 = vmatpush1.msra.mxu0 0.0
      %3342 = vmatprep.subr.mxu0 0.0
      %3343 = vmatpush1.msra.mxu0 0.0
      %3344 = vmatprep.subr.mxu0 0.0
      %3345 = vmatpush1.msra.mxu0 0.0
      %3346 = vmatprep.subr.mxu0 0.0
      %3347 = vmatpush1.msra.mxu0 0.0
      %3348 = vmatprep.subr.mxu0 0.0
      %3349 = vmatpush1.msra.mxu0 0.0
      %3350 = vmatprep.subr.mxu0 0.0
      %3351 = vmatpush1.msra.mxu0 0.0
      %3352 = vmatprep.subr.mxu0 0.0
      %3353 = vmatpush1.msra.mxu0 0.0
      %3354 = vmatprep.subr.mxu0 0.0
      %3355 = vmatpush1.msra.mxu0 0.0
      %3356 = vmatprep.subr.mxu0 0.0
      %3357 = vmatpush1.msra.mxu0 0.0
      %3358 = vmatprep.subr.mxu0 0.0
      %3359 = vmatpush1.msra.mxu0 0.0
      %3360 = vmatprep.subr.mxu0 0.0
      %3361 = vmatpush1.msra.mxu0 0.0
      %3362 = vmatprep.subr.mxu0 0.0
      %3363 = vmatpush1.msra.mxu0 0.0
      %3364 = vmatprep.subr.mxu0 0.0
      %3365 = vmatpush1.msra.mxu0 0.0
      %3366 = vmatprep.subr.mxu0 0.0
      %3367 = vmatpush1.msra.mxu0 0.0
      %3368 = vmatprep.subr.mxu0 0.0
      %3369 = vmatpush1.msra.mxu0 0.0
      %3370 = vmatprep.subr.mxu0 0.0
      %3371 = vmatpush1.msra.mxu0 0.0
      %3372 = vmatprep.subr.mxu0 0.0
      %3373 = vmatpush1.msra.mxu0 0.0
      %3374 = vmatprep.subr.mxu0 0.0
      %3375 = vmatpush1.msra.mxu0 0.0
      %3376 = vmatprep.subr.mxu0 0.0
      %3377 = vmatpush1.msra.mxu0 0.0
      %3378 = vmatprep.subr.mxu0 0.0
      %3379 = vmatpush1.msra.mxu0 0.0
      %3380 = vmatprep.subr.mxu0 0.0
      %3381 = vmatpush1.msra.mxu0 0.0
      %3382 = vmatprep.subr.mxu0 0.0
      %3383 = vmatpush1.msra.mxu0 0.0
      %3384 = vmatprep.subr.mxu0 0.0
      %3385 = vmatpush1.msra.mxu0 0.0
      %3386 = vmatprep.subr.mxu0 0.0
      %3387 = vmatpush1.msra.mxu0 0.0
      %3388 = vmatprep.subr.mxu0 0.0
      %3389 = vmatpush1.msra.mxu0 0.0
      %3390 = vmatprep.subr.mxu0 0.0
      %3391 = vmatpush1.msra.mxu0 0.0
      %3392 = vmatprep.subr.mxu0 0.0
      %3393 = vmatpush1.msra.mxu0 0.0
      %3394 = vmatprep.mubr.f32.mxu0 0.0
      %3395 = vmatmul.mubr.f32.gmra.mrb[0].mxu0 %v3328
      %v3396 = vpop.f32.mrb[0].mxu0
      %v3397 = vadd.f32 0.0, %v3396
      %v3398 = vpop.f32.mrb[0].mxu0
      %3399 = vdwg.mxu0
      %3400 = vrot.lane.b32.xlu0 %v2884, 64
      %v3401 = vpop.permute.xlu0 %3400
      %v3404 = vsel %vm1176, %v3245, 0
      %3406 = vmatprep.subr.mxu0 0.0
      %3407 = vmatpush1.msra.mxu0 %v3401
      %3408 = vmatprep.subr.mxu0 0.0
      %3409 = vmatpush1.msra.mxu0 0.0
      %3410 = vmatprep.subr.mxu0 0.0
      %3411 = vmatpush1.msra.mxu0 0.0
      %3412 = vmatprep.subr.mxu0 0.0
      %3413 = vmatpush1.msra.mxu0 0.0
      %3414 = vmatprep.subr.mxu0 0.0
      %3415 = vmatpush1.msra.mxu0 0.0
      %3416 = vmatprep.subr.mxu0 0.0
      %3417 = vmatpush1.msra.mxu0 0.0
      %3418 = vmatprep.subr.mxu0 0.0
      %3419 = vmatpush1.msra.mxu0 0.0
      %3420 = vmatprep.subr.mxu0 0.0
      %3421 = vmatpush1.msra.mxu0 0.0
      %3422 = vmatprep.subr.mxu0 0.0
      %3423 = vmatpush1.msra.mxu0 0.0
      %3424 = vmatprep.subr.mxu0 0.0
      %3425 = vmatpush1.msra.mxu0 0.0
      %3426 = vmatprep.subr.mxu0 0.0
      %3427 = vmatpush1.msra.mxu0 0.0
      %3428 = vmatprep.subr.mxu0 0.0
      %3429 = vmatpush1.msra.mxu0 0.0
      %3430 = vmatprep.subr.mxu0 0.0
      %3431 = vmatpush1.msra.mxu0 0.0
      %3432 = vmatprep.subr.mxu0 0.0
      %3433 = vmatpush1.msra.mxu0 0.0
      %3434 = vmatprep.subr.mxu0 0.0
      %3435 = vmatpush1.msra.mxu0 0.0
      %3436 = vmatprep.subr.mxu0 0.0
      %3437 = vmatpush1.msra.mxu0 0.0
      %3438 = vmatprep.subr.mxu0 0.0
      %3439 = vmatpush1.msra.mxu0 0.0
      %3440 = vmatprep.subr.mxu0 0.0
      %3441 = vmatpush1.msra.mxu0 0.0
      %3442 = vmatprep.subr.mxu0 0.0
      %3443 = vmatpush1.msra.mxu0 0.0
      %3444 = vmatprep.subr.mxu0 0.0
      %3445 = vmatpush1.msra.mxu0 0.0
      %3446 = vmatprep.subr.mxu0 0.0
      %3447 = vmatpush1.msra.mxu0 0.0
      %3448 = vmatprep.subr.mxu0 0.0
      %3449 = vmatpush1.msra.mxu0 0.0
      %3450 = vmatprep.subr.mxu0 0.0
      %3451 = vmatpush1.msra.mxu0 0.0
      %3452 = vmatprep.subr.mxu0 0.0
      %3453 = vmatpush1.msra.mxu0 0.0
      %3454 = vmatprep.subr.mxu0 0.0
      %3455 = vmatpush1.msra.mxu0 0.0
      %3456 = vmatprep.subr.mxu0 0.0
      %3457 = vmatpush1.msra.mxu0 0.0
      %3458 = vmatprep.subr.mxu0 0.0
      %3459 = vmatpush1.msra.mxu0 0.0
      %3460 = vmatprep.subr.mxu0 0.0
      %3461 = vmatpush1.msra.mxu0 0.0
      %3462 = vmatprep.subr.mxu0 0.0
      %3463 = vmatpush1.msra.mxu0 0.0
      %3464 = vmatprep.subr.mxu0 0.0
      %3465 = vmatpush1.msra.mxu0 0.0
      %3466 = vmatprep.subr.mxu0 0.0
      %3467 = vmatpush1.msra.mxu0 0.0
      %3468 = vmatprep.subr.mxu0 0.0
      %3469 = vmatpush1.msra.mxu0 0.0
      %3470 = vmatprep.mubr.f32.mxu0 0.0
      %3471 = vmatmul.mubr.f32.gmra.mrb[0].mxu0 %v3404
      %v3472 = vpop.f32.mrb[0].mxu0
      %v3473 = vadd.f32 0.0, %v3472
      %v3474 = vpop.f32.mrb[0].mxu0
      %3475 = vdwg.mxu0
      %3476 = vrot.lane.b32.xlu0 %v2889, 64
      %v3477 = vpop.permute.xlu0 %3476
      %v3480 = vsel %vm1176, %v3247, 0
      %3482 = vmatprep.subr.mxu0 0.0
      %3483 = vmatpush1.msra.mxu0 %v3477
      %3484 = vmatprep.subr.mxu0 0.0
      %3485 = vmatpush1.msra.mxu0 0.0
      %3486 = vmatprep.subr.mxu0 0.0
      %3487 = vmatpush1.msra.mxu0 0.0
      %3488 = vmatprep.subr.mxu0 0.0
      %3489 = vmatpush1.msra.mxu0 0.0
      %3490 = vmatprep.subr.mxu0 0.0
      %3491 = vmatpush1.msra.mxu0 0.0
      %3492 = vmatprep.subr.mxu0 0.0
      %3493 = vmatpush1.msra.mxu0 0.0
      %3494 = vmatprep.subr.mxu0 0.0
      %3495 = vmatpush1.msra.mxu0 0.0
      %3496 = vmatprep.subr.mxu0 0.0
      %3497 = vmatpush1.msra.mxu0 0.0
      %3498 = vmatprep.subr.mxu0 0.0
      %3499 = vmatpush1.msra.mxu0 0.0
      %3500 = vmatprep.subr.mxu0 0.0
      %3501 = vmatpush1.msra.mxu0 0.0
      %3502 = vmatprep.subr.mxu0 0.0
      %3503 = vmatpush1.msra.mxu0 0.0
      %3504 = vmatprep.subr.mxu0 0.0
      %3505 = vmatpush1.msra.mxu0 0.0
      %3506 = vmatprep.subr.mxu0 0.0
      %3507 = vmatpush1.msra.mxu0 0.0
      %3508 = vmatprep.subr.mxu0 0.0
      %3509 = vmatpush1.msra.mxu0 0.0
      %3510 = vmatprep.subr.mxu0 0.0
      %3511 = vmatpush1.msra.mxu0 0.0
      %3512 = vmatprep.subr.mxu0 0.0
      %3513 = vmatpush1.msra.mxu0 0.0
      %3514 = vmatprep.subr.mxu0 0.0
      %3515 = vmatpush1.msra.mxu0 0.0
      %3516 = vmatprep.subr.mxu0 0.0
      %3517 = vmatpush1.msra.mxu0 0.0
      %3518 = vmatprep.subr.mxu0 0.0
      %3519 = vmatpush1.msra.mxu0 0.0
      %3520 = vmatprep.subr.mxu0 0.0
      %3521 = vmatpush1.msra.mxu0 0.0
      %3522 = vmatprep.subr.mxu0 0.0
      %3523 = vmatpush1.msra.mxu0 0.0
      %3524 = vmatprep.subr.mxu0 0.0
      %3525 = vmatpush1.msra.mxu0 0.0
      %3526 = vmatprep.subr.mxu0 0.0
      %3527 = vmatpush1.msra.mxu0 0.0
      %3528 = vmatprep.subr.mxu0 0.0
      %3529 = vmatpush1.msra.mxu0 0.0
      %3530 = vmatprep.subr.mxu0 0.0
      %3531 = vmatpush1.msra.mxu0 0.0
      %3532 = vmatprep.subr.mxu0 0.0
      %3533 = vmatpush1.msra.mxu0 0.0
      %3534 = vmatprep.subr.mxu0 0.0
      %3535 = vmatpush1.msra.mxu0 0.0
      %3536 = vmatprep.subr.mxu0 0.0
      %3537 = vmatpush1.msra.mxu0 0.0
      %3538 = vmatprep.subr.mxu0 0.0
      %3539 = vmatpush1.msra.mxu0 0.0
      %3540 = vmatprep.subr.mxu0 0.0
      %3541 = vmatpush1.msra.mxu0 0.0
      %3542 = vmatprep.subr.mxu0 0.0
      %3543 = vmatpush1.msra.mxu0 0.0
      %3544 = vmatprep.subr.mxu0 0.0
      %3545 = vmatpush1.msra.mxu0 0.0
      %3546 = vmatprep.mubr.f32.mxu0 0.0
      %3547 = vmatmul.mubr.f32.gmra.mrb[0].mxu0 %v3480
      %v3548 = vpop.f32.mrb[0].mxu0
      %v3549 = vadd.f32 0.0, %v3548
      %v3550 = vpop.f32.mrb[0].mxu0
      %3551 = vdwg.mxu0
      %3552 = vrot.lane.b32.xlu0 %v2874, 112
      %v3553 = vpop.permute.xlu0 %3552
      %3554 = vrot.lane.b32.xlu0 %v2874, 80
      %v3555 = vpop.permute.xlu0 %3554
      %v3556 = vsel %vm866, %v3553, 0
      %v3558 = vsel %vm866, %v3555, 0
      %3560 = vmatprep.subr.mxu0 0.0
      %3561 = vmatpush1.xpose.msra.mxu0 %v3558
      %3562 = vmatprep.subr.mxu0 0.0
      %3563 = vmatpush1.xpose.msra.mxu0 0.0
      %3564 = vmatprep.subr.mxu0 0.0
      %3565 = vmatpush1.xpose.msra.mxu0 0.0
      %3566 = vmatprep.subr.mxu0 0.0
      %3567 = vmatpush1.xpose.msra.mxu0 0.0
      %3568 = vmatprep.subr.mxu0 0.0
      %3569 = vmatpush1.xpose.msra.mxu0 0.0
      %3570 = vmatprep.subr.mxu0 0.0
      %3571 = vmatpush1.xpose.msra.mxu0 0.0
      %3572 = vmatprep.subr.mxu0 0.0
      %3573 = vmatpush1.xpose.msra.mxu0 0.0
      %3574 = vmatprep.subr.mxu0 0.0
      %3575 = vmatpush1.xpose.msra.mxu0 0.0
      %3576 = vmatprep.subr.mxu0 0.0
      %3577 = vmatpush1.xpose.msra.mxu0 0.0
      %3578 = vmatprep.subr.mxu0 0.0
      %3579 = vmatpush1.xpose.msra.mxu0 0.0
      %3580 = vmatprep.subr.mxu0 0.0
      %3581 = vmatpush1.xpose.msra.mxu0 0.0
      %3582 = vmatprep.subr.mxu0 0.0
      %3583 = vmatpush1.xpose.msra.mxu0 0.0
      %3584 = vmatprep.subr.mxu0 0.0
      %3585 = vmatpush1.xpose.msra.mxu0 0.0
      %3586 = vmatprep.subr.mxu0 0.0
      %3587 = vmatpush1.xpose.msra.mxu0 0.0
      %3588 = vmatprep.subr.mxu0 0.0
      %3589 = vmatpush1.xpose.msra.mxu0 0.0
      %3590 = vmatprep.subr.mxu0 0.0
      %3591 = vmatpush1.xpose.msra.mxu0 0.0
      %3592 = vmatprep.subr.mxu0 0.0
      %3593 = vmatpush1.xpose.msra.mxu0 0.0
      %3594 = vmatprep.subr.mxu0 0.0
      %3595 = vmatpush1.xpose.msra.mxu0 0.0
      %3596 = vmatprep.subr.mxu0 0.0
      %3597 = vmatpush1.xpose.msra.mxu0 0.0
      %3598 = vmatprep.subr.mxu0 0.0
      %3599 = vmatpush1.xpose.msra.mxu0 0.0
      %3600 = vmatprep.subr.mxu0 0.0
      %3601 = vmatpush1.xpose.msra.mxu0 0.0
      %3602 = vmatprep.subr.mxu0 0.0
      %3603 = vmatpush1.xpose.msra.mxu0 0.0
      %3604 = vmatprep.subr.mxu0 0.0
      %3605 = vmatpush1.xpose.msra.mxu0 0.0
      %3606 = vmatprep.subr.mxu0 0.0
      %3607 = vmatpush1.xpose.msra.mxu0 0.0
      %3608 = vmatprep.subr.mxu0 0.0
      %3609 = vmatpush1.xpose.msra.mxu0 0.0
      %3610 = vmatprep.subr.mxu0 0.0
      %3611 = vmatpush1.xpose.msra.mxu0 0.0
      %3612 = vmatprep.subr.mxu0 0.0
      %3613 = vmatpush1.xpose.msra.mxu0 0.0
      %3614 = vmatprep.subr.mxu0 0.0
      %3615 = vmatpush1.xpose.msra.mxu0 0.0
      %3616 = vmatprep.subr.mxu0 0.0
      %3617 = vmatpush1.xpose.msra.mxu0 0.0
      %3618 = vmatprep.subr.mxu0 0.0
      %3619 = vmatpush1.xpose.msra.mxu0 0.0
      %3620 = vmatprep.subr.mxu0 0.0
      %3621 = vmatpush1.xpose.msra.mxu0 0.0
      %3622 = vmatprep.subr.mxu0 0.0
      %3623 = vmatpush1.xpose.msra.mxu0 0.0
      %3624 = vmatprep.mubr.f32.mxu0 0.0
      %3625 = vmatmul.mubr.f32.gmra.mrb[0].mxu0 %v3556
      %v3626 = vpop.f32.mrb[0].mxu0
      %v3627 = vadd.f32 0.0, %v3626
      %v3628 = vpop.f32.mrb[0].mxu0
      %3629 = vdwg.mxu0
      %3630 = vrot.lane.b32.xlu0 %v2879, 112
      %v3631 = vpop.permute.xlu0 %3630
      %3632 = vrot.lane.b32.xlu0 %v2879, 80
      %v3633 = vpop.permute.xlu0 %3632
      %v3634 = vsel %vm866, %v3631, 0
      %v3636 = vsel %vm866, %v3633, 0
      %3638 = vmatprep.subr.mxu0 0.0
      %3639 = vmatpush1.xpose.msra.mxu0 %v3636
      %3640 = vmatprep.subr.mxu0 0.0
      %3641 = vmatpush1.xpose.msra.mxu0 0.0
      %3642 = vmatprep.subr.mxu0 0.0
      %3643 = vmatpush1.xpose.msra.mxu0 0.0
      %3644 = vmatprep.subr.mxu0 0.0
      %3645 = vmatpush1.xpose.msra.mxu0 0.0
      %3646 = vmatprep.subr.mxu0 0.0
      %3647 = vmatpush1.xpose.msra.mxu0 0.0
      %3648 = vmatprep.subr.mxu0 0.0
      %3649 = vmatpush1.xpose.msra.mxu0 0.0
      %3650 = vmatprep.subr.mxu0 0.0
      %3651 = vmatpush1.xpose.msra.mxu0 0.0
      %3652 = vmatprep.subr.mxu0 0.0
      %3653 = vmatpush1.xpose.msra.mxu0 0.0
      %3654 = vmatprep.subr.mxu0 0.0
      %3655 = vmatpush1.xpose.msra.mxu0 0.0
      %3656 = vmatprep.subr.mxu0 0.0
      %3657 = vmatpush1.xpose.msra.mxu0 0.0
      %3658 = vmatprep.subr.mxu0 0.0
      %3659 = vmatpush1.xpose.msra.mxu0 0.0
      %3660 = vmatprep.subr.mxu0 0.0
      %3661 = vmatpush1.xpose.msra.mxu0 0.0
      %3662 = vmatprep.subr.mxu0 0.0
      %3663 = vmatpush1.xpose.msra.mxu0 0.0
      %3664 = vmatprep.subr.mxu0 0.0
      %3665 = vmatpush1.xpose.msra.mxu0 0.0
      %3666 = vmatprep.subr.mxu0 0.0
      %3667 = vmatpush1.xpose.msra.mxu0 0.0
      %3668 = vmatprep.subr.mxu0 0.0
      %3669 = vmatpush1.xpose.msra.mxu0 0.0
      %3670 = vmatprep.subr.mxu0 0.0
      %3671 = vmatpush1.xpose.msra.mxu0 0.0
      %3672 = vmatprep.subr.mxu0 0.0
      %3673 = vmatpush1.xpose.msra.mxu0 0.0
      %3674 = vmatprep.subr.mxu0 0.0
      %3675 = vmatpush1.xpose.msra.mxu0 0.0
      %3676 = vmatprep.subr.mxu0 0.0
      %3677 = vmatpush1.xpose.msra.mxu0 0.0
      %3678 = vmatprep.subr.mxu0 0.0
      %3679 = vmatpush1.xpose.msra.mxu0 0.0
      %3680 = vmatprep.subr.mxu0 0.0
      %3681 = vmatpush1.xpose.msra.mxu0 0.0
      %3682 = vmatprep.subr.mxu0 0.0
      %3683 = vmatpush1.xpose.msra.mxu0 0.0
      %3684 = vmatprep.subr.mxu0 0.0
      %3685 = vmatpush1.xpose.msra.mxu0 0.0
      %3686 = vmatprep.subr.mxu0 0.0
      %3687 = vmatpush1.xpose.msra.mxu0 0.0
      %3688 = vmatprep.subr.mxu0 0.0
      %3689 = vmatpush1.xpose.msra.mxu0 0.0
      %3690 = vmatprep.subr.mxu0 0.0
      %3691 = vmatpush1.xpose.msra.mxu0 0.0
      %3692 = vmatprep.subr.mxu0 0.0
      %3693 = vmatpush1.xpose.msra.mxu0 0.0
      %3694 = vmatprep.subr.mxu0 0.0
      %3695 = vmatpush1.xpose.msra.mxu0 0.0
      %3696 = vmatprep.subr.mxu0 0.0
      %3697 = vmatpush1.xpose.msra.mxu0 0.0
      %3698 = vmatprep.subr.mxu0 0.0
      %3699 = vmatpush1.xpose.msra.mxu0 0.0
      %3700 = vmatprep.subr.mxu0 0.0
      %3701 = vmatpush1.xpose.msra.mxu0 0.0
      %3702 = vmatprep.mubr.f32.mxu0 0.0
      %3703 = vmatmul.mubr.f32.gmra.mrb[0].mxu0 %v3634
      %v3704 = vpop.f32.mrb[0].mxu0
      %v3705 = vadd.f32 0.0, %v3704
      %v3706 = vpop.f32.mrb[0].mxu0
      %3707 = vdwg.mxu0
      %3708 = vrot.lane.b32.xlu0 %v2884, 112
      %v3709 = vpop.permute.xlu0 %3708
      %3710 = vrot.lane.b32.xlu0 %v2884, 80
      %v3711 = vpop.permute.xlu0 %3710
      %v3712 = vsel %vm866, %v3709, 0
      %v3714 = vsel %vm866, %v3711, 0
      %3716 = vmatprep.subr.mxu0 0.0
      %3717 = vmatpush1.xpose.msra.mxu0 %v3714
      %3718 = vmatprep.subr.mxu0 0.0
      %3719 = vmatpush1.xpose.msra.mxu0 0.0
      %3720 = vmatprep.subr.mxu0 0.0
      %3721 = vmatpush1.xpose.msra.mxu0 0.0
      %3722 = vmatprep.subr.mxu0 0.0
      %3723 = vmatpush1.xpose.msra.mxu0 0.0
      %3724 = vmatprep.subr.mxu0 0.0
      %3725 = vmatpush1.xpose.msra.mxu0 0.0
      %3726 = vmatprep.subr.mxu0 0.0
      %3727 = vmatpush1.xpose.msra.mxu0 0.0
      %3728 = vmatprep.subr.mxu0 0.0
      %3729 = vmatpush1.xpose.msra.mxu0 0.0
      %3730 = vmatprep.subr.mxu0 0.0
      %3731 = vmatpush1.xpose.msra.mxu0 0.0
      %3732 = vmatprep.subr.mxu0 0.0
      %3733 = vmatpush1.xpose.msra.mxu0 0.0
      %3734 = vmatprep.subr.mxu0 0.0
      %3735 = vmatpush1.xpose.msra.mxu0 0.0
      %3736 = vmatprep.subr.mxu0 0.0
      %3737 = vmatpush1.xpose.msra.mxu0 0.0
      %3738 = vmatprep.subr.mxu0 0.0
      %3739 = vmatpush1.xpose.msra.mxu0 0.0
      %3740 = vmatprep.subr.mxu0 0.0
      %3741 = vmatpush1.xpose.msra.mxu0 0.0
      %3742 = vmatprep.subr.mxu0 0.0
      %3743 = vmatpush1.xpose.msra.mxu0 0.0
      %3744 = vmatprep.subr.mxu0 0.0
      %3745 = vmatpush1.xpose.msra.mxu0 0.0
      %3746 = vmatprep.subr.mxu0 0.0
      %3747 = vmatpush1.xpose.msra.mxu0 0.0
      %3748 = vmatprep.subr.mxu0 0.0
      %3749 = vmatpush1.xpose.msra.mxu0 0.0
      %3750 = vmatprep.subr.mxu0 0.0
      %3751 = vmatpush1.xpose.msra.mxu0 0.0
      %3752 = vmatprep.subr.mxu0 0.0
      %3753 = vmatpush1.xpose.msra.mxu0 0.0
      %3754 = vmatprep.subr.mxu0 0.0
      %3755 = vmatpush1.xpose.msra.mxu0 0.0
      %3756 = vmatprep.subr.mxu0 0.0
      %3757 = vmatpush1.xpose.msra.mxu0 0.0
      %3758 = vmatprep.subr.mxu0 0.0
      %3759 = vmatpush1.xpose.msra.mxu0 0.0
      %3760 = vmatprep.subr.mxu0 0.0
      %3761 = vmatpush1.xpose.msra.mxu0 0.0
      %3762 = vmatprep.subr.mxu0 0.0
      %3763 = vmatpush1.xpose.msra.mxu0 0.0
      %3764 = vmatprep.subr.mxu0 0.0
      %3765 = vmatpush1.xpose.msra.mxu0 0.0
      %3766 = vmatprep.subr.mxu0 0.0
      %3767 = vmatpush1.xpose.msra.mxu0 0.0
      %3768 = vmatprep.subr.mxu0 0.0
      %3769 = vmatpush1.xpose.msra.mxu0 0.0
      %3770 = vmatprep.subr.mxu0 0.0
      %3771 = vmatpush1.xpose.msra.mxu0 0.0
      %3772 = vmatprep.subr.mxu0 0.0
      %3773 = vmatpush1.xpose.msra.mxu0 0.0
      %3774 = vmatprep.subr.mxu0 0.0
      %3775 = vmatpush1.xpose.msra.mxu0 0.0
      %3776 = vmatprep.subr.mxu0 0.0
      %3777 = vmatpush1.xpose.msra.mxu0 0.0
      %3778 = vmatprep.subr.mxu0 0.0
      %3779 = vmatpush1.xpose.msra.mxu0 0.0
      %3780 = vmatprep.mubr.f32.mxu0 0.0
      %3781 = vmatmul.mubr.f32.gmra.mrb[0].mxu0 %v3712
      %v3782 = vpop.f32.mrb[0].mxu0
      %v3783 = vadd.f32 0.0, %v3782
      %v3784 = vpop.f32.mrb[0].mxu0
      %3785 = vdwg.mxu0
      %3786 = vrot.lane.b32.xlu0 %v2889, 112
      %v3787 = vpop.permute.xlu0 %3786
      %3788 = vrot.lane.b32.xlu0 %v2889, 80
      %v3789 = vpop.permute.xlu0 %3788
      %v3790 = vsel %vm866, %v3787, 0
      %v3792 = vsel %vm866, %v3789, 0
      %3794 = vmatprep.subr.mxu0 0.0
      %3795 = vmatpush1.xpose.msra.mxu0 %v3792
      %3796 = vmatprep.subr.mxu0 0.0
      %3797 = vmatpush1.xpose.msra.mxu0 0.0
      %3798 = vmatprep.subr.mxu0 0.0
      %3799 = vmatpush1.xpose.msra.mxu0 0.0
      %3800 = vmatprep.subr.mxu0 0.0
      %3801 = vmatpush1.xpose.msra.mxu0 0.0
      %3802 = vmatprep.subr.mxu0 0.0
      %3803 = vmatpush1.xpose.msra.mxu0 0.0
      %3804 = vmatprep.subr.mxu0 0.0
      %3805 = vmatpush1.xpose.msra.mxu0 0.0
      %3806 = vmatprep.subr.mxu0 0.0
      %3807 = vmatpush1.xpose.msra.mxu0 0.0
      %3808 = vmatprep.subr.mxu0 0.0
      %3809 = vmatpush1.xpose.msra.mxu0 0.0
      %3810 = vmatprep.subr.mxu0 0.0
      %3811 = vmatpush1.xpose.msra.mxu0 0.0
      %3812 = vmatprep.subr.mxu0 0.0
      %3813 = vmatpush1.xpose.msra.mxu0 0.0
      %3814 = vmatprep.subr.mxu0 0.0
      %3815 = vmatpush1.xpose.msra.mxu0 0.0
      %3816 = vmatprep.subr.mxu0 0.0
      %3817 = vmatpush1.xpose.msra.mxu0 0.0
      %3818 = vmatprep.subr.mxu0 0.0
      %3819 = vmatpush1.xpose.msra.mxu0 0.0
      %3820 = vmatprep.subr.mxu0 0.0
      %3821 = vmatpush1.xpose.msra.mxu0 0.0
      %3822 = vmatprep.subr.mxu0 0.0
      %3823 = vmatpush1.xpose.msra.mxu0 0.0
      %3824 = vmatprep.subr.mxu0 0.0
      %3825 = vmatpush1.xpose.msra.mxu0 0.0
      %3826 = vmatprep.subr.mxu0 0.0
      %3827 = vmatpush1.xpose.msra.mxu0 0.0
      %3828 = vmatprep.subr.mxu0 0.0
      %3829 = vmatpush1.xpose.msra.mxu0 0.0
      %3830 = vmatprep.subr.mxu0 0.0
      %3831 = vmatpush1.xpose.msra.mxu0 0.0
      %3832 = vmatprep.subr.mxu0 0.0
      %3833 = vmatpush1.xpose.msra.mxu0 0.0
      %3834 = vmatprep.subr.mxu0 0.0
      %3835 = vmatpush1.xpose.msra.mxu0 0.0
      %3836 = vmatprep.subr.mxu0 0.0
      %3837 = vmatpush1.xpose.msra.mxu0 0.0
      %3838 = vmatprep.subr.mxu0 0.0
      %3839 = vmatpush1.xpose.msra.mxu0 0.0
      %3840 = vmatprep.subr.mxu0 0.0
      %3841 = vmatpush1.xpose.msra.mxu0 0.0
      %3842 = vmatprep.subr.mxu0 0.0
      %3843 = vmatpush1.xpose.msra.mxu0 0.0
      %3844 = vmatprep.subr.mxu0 0.0
      %3845 = vmatpush1.xpose.msra.mxu0 0.0
      %3846 = vmatprep.subr.mxu0 0.0
      %3847 = vmatpush1.xpose.msra.mxu0 0.0
      %3848 = vmatprep.subr.mxu0 0.0
      %3849 = vmatpush1.xpose.msra.mxu0 0.0
      %3850 = vmatprep.subr.mxu0 0.0
      %3851 = vmatpush1.xpose.msra.mxu0 0.0
      %3852 = vmatprep.subr.mxu0 0.0
      %3853 = vmatpush1.xpose.msra.mxu0 0.0
      %3854 = vmatprep.subr.mxu0 0.0
      %3855 = vmatpush1.xpose.msra.mxu0 0.0
      %3856 = vmatprep.subr.mxu0 0.0
      %3857 = vmatpush1.xpose.msra.mxu0 0.0
      %3858 = vmatprep.mubr.f32.mxu0 0.0
      %3859 = vmatmul.mubr.f32.gmra.mrb[0].mxu0 %v3790
      %v3860 = vpop.f32.mrb[0].mxu0
      %v3861 = vadd.f32 0.0, %v3860
      %v3862 = vpop.f32.mrb[0].mxu0
      %3863 = vdwg.mxu0
      %v3864 = vmul.f32 %v3627, 0.25
      %v3865 = vmul.f32 %v3705, 0.25
      %v3866 = vmul.f32 %v3783, 0.25
      %v3867 = vmul.f32 %v3861, 0.25
      %v3868 = vsel %vm1176, %v3864, -inf
      %3869 = vmax.xlane.f32.xlu0 %v3868
      %v3870 = vpop.xlane.xlu0 %3869
      %v3871 = vsel %vm1176, %v3865, -inf
      %3872 = vmax.xlane.f32.xlu0 %v3871
      %v3873 = vpop.xlane.xlu0 %3872
      %v3874 = vsel %vm1176, %v3866, -inf
      %3875 = vmax.xlane.f32.xlu0 %v3874
      %v3876 = vpop.xlane.xlu0 %3875
      %v3877 = vsel %vm1176, %v3867, -inf
      %3878 = vmax.xlane.f32.xlu0 %v3877
      %v3879 = vpop.xlane.xlu0 %3878
      %v3880 = vsub.f32 %v3864, %v3870
      %v3881 = vsub.f32 %v3865, %v3873
      %v3882 = vsub.f32 %v3866, %v3876
      %v3883 = vsub.f32 %v3867, %v3879
      %v3884 = vmul.f32 %v3880, 1.442695
      %v3885 = vpow.pop %v3884
      %v3886 = vmul.f32 %v3881, 1.442695
      %v3887 = vpow.pop %v3886
      %v3888 = vmul.f32 %v3882, 1.442695
      %v3889 = vpow.pop %v3888
      %v3890 = vmul.f32 %v3883, 1.442695
      %v3891 = vpow.pop %v3890
      %v3892 = vsel %vm1176, %v3885, 0.0
      %3893 = vadd.xlane.f32.xlu0 %v3892
      %v3894 = vpop.xlane.xlu0 %3893
      %v3895 = vsel %vm1176, %v3887, 0.0
      %3896 = vadd.xlane.f32.xlu0 %v3895
      %v3897 = vpop.xlane.xlu0 %3896
      %v3898 = vsel %vm1176, %v3889, 0.0
      %3899 = vadd.xlane.f32.xlu0 %v3898
      %v3900 = vpop.xlane.xlu0 %3899
      %v3901 = vsel %vm1176, %v3891, 0.0
      %3902 = vadd.xlane.f32.xlu0 %v3901
      %v3903 = vpop.xlane.xlu0 %3902
      %v3904 = vrcp.pop %v3894
      %v3905 = vmul.f32 %v3885, %v3904
      %v3906 = vrcp.pop %v3897
      %v3907 = vmul.f32 %v3887, %v3906
      %v3908 = vrcp.pop %v3900
      %v3909 = vmul.f32 %v3889, %v3908
      %v3910 = vrcp.pop %v3903
      %v3911 = vmul.f32 %v3891, %v3910
      %3912 = vrot.lane.b32.xlu0 %v2874, 48
      %v3913 = vpop.permute.xlu0 %3912
      %v3916 = vsel %vm1176, %v3905, 0
      %3918 = vmatprep.subr.mxu0 0.0
      %3919 = vmatpush1.msra.mxu0 %v3913
      %3920 = vmatprep.subr.mxu0 0.0
      %3921 = vmatpush1.msra.mxu0 0.0
      %3922 = vmatprep.subr.mxu0 0.0
      %3923 = vmatpush1.msra.mxu0 0.0
      %3924 = vmatprep.subr.mxu0 0.0
      %3925 = vmatpush1.msra.mxu0 0.0
      %3926 = vmatprep.subr.mxu0 0.0
      %3927 = vmatpush1.msra.mxu0 0.0
      %3928 = vmatprep.subr.mxu0 0.0
      %3929 = vmatpush1.msra.mxu0 0.0
      %3930 = vmatprep.subr.mxu0 0.0
      %3931 = vmatpush1.msra.mxu0 0.0
      %3932 = vmatprep.subr.mxu0 0.0
      %3933 = vmatpush1.msra.mxu0 0.0
      %3934 = vmatprep.subr.mxu0 0.0
      %3935 = vmatpush1.msra.mxu0 0.0
      %3936 = vmatprep.subr.mxu0 0.0
      %3937 = vmatpush1.msra.mxu0 0.0
      %3938 = vmatprep.subr.mxu0 0.0
      %3939 = vmatpush1.msra.mxu0 0.0
      %3940 = vmatprep.subr.mxu0 0.0
      %3941 = vmatpush1.msra.mxu0 0.0
      %3942 = vmatprep.subr.mxu0 0.0
      %3943 = vmatpush1.msra.mxu0 0.0
      %3944 = vmatprep.subr.mxu0 0.0
      %3945 = vmatpush1.msra.mxu0 0.0
      %3946 = vmatprep.subr.mxu0 0.0
      %3947 = vmatpush1.msra.mxu0 0.0
      %3948 = vmatprep.subr.mxu0 0.0
      %3949 = vmatpush1.msra.mxu0 0.0
      %3950 = vmatprep.subr.mxu0 0.0
      %3951 = vmatpush1.msra.mxu0 0.0
      %3952 = vmatprep.subr.mxu0 0.0
      %3953 = vmatpush1.msra.mxu0 0.0
      %3954 = vmatprep.subr.mxu0 0.0
      %3955 = vmatpush1.msra.mxu0 0.0
      %3956 = vmatprep.subr.mxu0 0.0
      %3957 = vmatpush1.msra.mxu0 0.0
      %3958 = vmatprep.subr.mxu0 0.0
      %3959 = vmatpush1.msra.mxu0 0.0
      %3960 = vmatprep.subr.mxu0 0.0
      %3961 = vmatpush1.msra.mxu0 0.0
      %3962 = vmatprep.subr.mxu0 0.0
      %3963 = vmatpush1.msra.mxu0 0.0
      %3964 = vmatprep.subr.mxu0 0.0
      %3965 = vmatpush1.msra.mxu0 0.0
      %3966 = vmatprep.subr.mxu0 0.0
      %3967 = vmatpush1.msra.mxu0 0.0
      %3968 = vmatprep.subr.mxu0 0.0
      %3969 = vmatpush1.msra.mxu0 0.0
      %3970 = vmatprep.subr.mxu0 0.0
      %3971 = vmatpush1.msra.mxu0 0.0
      %3972 = vmatprep.subr.mxu0 0.0
      %3973 = vmatpush1.msra.mxu0 0.0
      %3974 = vmatprep.subr.mxu0 0.0
      %3975 = vmatpush1.msra.mxu0 0.0
      %3976 = vmatprep.subr.mxu0 0.0
      %3977 = vmatpush1.msra.mxu0 0.0
      %3978 = vmatprep.subr.mxu0 0.0
      %3979 = vmatpush1.msra.mxu0 0.0
      %3980 = vmatprep.subr.mxu0 0.0
      %3981 = vmatpush1.msra.mxu0 0.0
      %3982 = vmatprep.mubr.f32.mxu0 0.0
      %3983 = vmatmul.mubr.f32.gmra.mrb[0].mxu0 %v3916
      %v3984 = vpop.f32.mrb[0].mxu0
      %v3985 = vadd.f32 0.0, %v3984
      %v3986 = vpop.f32.mrb[0].mxu0
      %3987 = vdwg.mxu0
      %3988 = vrot.lane.b32.xlu0 %v2879, 48
      %v3989 = vpop.permute.xlu0 %3988
      %v3992 = vsel %vm1176, %v3907, 0
      %3994 = vmatprep.subr.mxu0 0.0
      %3995 = vmatpush1.msra.mxu0 %v3989
      %3996 = vmatprep.subr.mxu0 0.0
      %3997 = vmatpush1.msra.mxu0 0.0
      %3998 = vmatprep.subr.mxu0 0.0
      %3999 = vmatpush1.msra.mxu0 0.0
      %4000 = vmatprep.subr.mxu0 0.0
      %4001 = vmatpush1.msra.mxu0 0.0
      %4002 = vmatprep.subr.mxu0 0.0
      %4003 = vmatpush1.msra.mxu0 0.0
      %4004 = vmatprep.subr.mxu0 0.0
      %4005 = vmatpush1.msra.mxu0 0.0
      %4006 = vmatprep.subr.mxu0 0.0
      %4007 = vmatpush1.msra.mxu0 0.0
      %4008 = vmatprep.subr.mxu0 0.0
      %4009 = vmatpush1.msra.mxu0 0.0
      %4010 = vmatprep.subr.mxu0 0.0
      %4011 = vmatpush1.msra.mxu0 0.0
      %4012 = vmatprep.subr.mxu0 0.0
      %4013 = vmatpush1.msra.mxu0 0.0
      %4014 = vmatprep.subr.mxu0 0.0
      %4015 = vmatpush1.msra.mxu0 0.0
      %4016 = vmatprep.subr.mxu0 0.0
      %4017 = vmatpush1.msra.mxu0 0.0
      %4018 = vmatprep.subr.mxu0 0.0
      %4019 = vmatpush1.msra.mxu0 0.0
      %4020 = vmatprep.subr.mxu0 0.0
      %4021 = vmatpush1.msra.mxu0 0.0
      %4022 = vmatprep.subr.mxu0 0.0
      %4023 = vmatpush1.msra.mxu0 0.0
      %4024 = vmatprep.subr.mxu0 0.0
      %4025 = vmatpush1.msra.mxu0 0.0
      %4026 = vmatprep.subr.mxu0 0.0
      %4027 = vmatpush1.msra.mxu0 0.0
      %4028 = vmatprep.subr.mxu0 0.0
      %4029 = vmatpush1.msra.mxu0 0.0
      %4030 = vmatprep.subr.mxu0 0.0
      %4031 = vmatpush1.msra.mxu0 0.0
      %4032 = vmatprep.subr.mxu0 0.0
      %4033 = vmatpush1.msra.mxu0 0.0
      %4034 = vmatprep.subr.mxu0 0.0
      %4035 = vmatpush1.msra.mxu0 0.0
      %4036 = vmatprep.subr.mxu0 0.0
      %4037 = vmatpush1.msra.mxu0 0.0
      %4038 = vmatprep.subr.mxu0 0.0
      %4039 = vmatpush1.msra.mxu0 0.0
      %4040 = vmatprep.subr.mxu0 0.0
      %4041 = vmatpush1.msra.mxu0 0.0
      %4042 = vmatprep.subr.mxu0 0.0
      %4043 = vmatpush1.msra.mxu0 0.0
      %4044 = vmatprep.subr.mxu0 0.0
      %4045 = vmatpush1.msra.mxu0 0.0
      %4046 = vmatprep.subr.mxu0 0.0
      %4047 = vmatpush1.msra.mxu0 0.0
      %4048 = vmatprep.subr.mxu0 0.0
      %4049 = vmatpush1.msra.mxu0 0.0
      %4050 = vmatprep.subr.mxu0 0.0
      %4051 = vmatpush1.msra.mxu0 0.0
      %4052 = vmatprep.subr.mxu0 0.0
      %4053 = vmatpush1.msra.mxu0 0.0
      %4054 = vmatprep.subr.mxu0 0.0
      %4055 = vmatpush1.msra.mxu0 0.0
      %4056 = vmatprep.subr.mxu0 0.0
      %4057 = vmatpush1.msra.mxu0 0.0
      %4058 = vmatprep.mubr.f32.mxu0 0.0
      %4059 = vmatmul.mubr.f32.gmra.mrb[0].mxu0 %v3992
      %v4060 = vpop.f32.mrb[0].mxu0
      %v4061 = vadd.f32 0.0, %v4060
      %v4062 = vpop.f32.mrb[0].mxu0
      %4063 = vdwg.mxu0
      %4064 = vrot.lane.b32.xlu0 %v2884, 48
      %v4065 = vpop.permute.xlu0 %4064
      %v4068 = vsel %vm1176, %v3909, 0
      %4070 = vmatprep.subr.mxu0 0.0
      %4071 = vmatpush1.msra.mxu0 %v4065
      %4072 = vmatprep.subr.mxu0 0.0
      %4073 = vmatpush1.msra.mxu0 0.0
      %4074 = vmatprep.subr.mxu0 0.0
      %4075 = vmatpush1.msra.mxu0 0.0
      %4076 = vmatprep.subr.mxu0 0.0
      %4077 = vmatpush1.msra.mxu0 0.0
      %4078 = vmatprep.subr.mxu0 0.0
      %4079 = vmatpush1.msra.mxu0 0.0
      %4080 = vmatprep.subr.mxu0 0.0
      %4081 = vmatpush1.msra.mxu0 0.0
      %4082 = vmatprep.subr.mxu0 0.0
      %4083 = vmatpush1.msra.mxu0 0.0
      %4084 = vmatprep.subr.mxu0 0.0
      %4085 = vmatpush1.msra.mxu0 0.0
      %4086 = vmatprep.subr.mxu0 0.0
      %4087 = vmatpush1.msra.mxu0 0.0
      %4088 = vmatprep.subr.mxu0 0.0
      %4089 = vmatpush1.msra.mxu0 0.0
      %4090 = vmatprep.subr.mxu0 0.0
      %4091 = vmatpush1.msra.mxu0 0.0
      %4092 = vmatprep.subr.mxu0 0.0
      %4093 = vmatpush1.msra.mxu0 0.0
      %4094 = vmatprep.subr.mxu0 0.0
      %4095 = vmatpush1.msra.mxu0 0.0
      %4096 = vmatprep.subr.mxu0 0.0
      %4097 = vmatpush1.msra.mxu0 0.0
      %4098 = vmatprep.subr.mxu0 0.0
      %4099 = vmatpush1.msra.mxu0 0.0
      %4100 = vmatprep.subr.mxu0 0.0
      %4101 = vmatpush1.msra.mxu0 0.0
      %4102 = vmatprep.subr.mxu0 0.0
      %4103 = vmatpush1.msra.mxu0 0.0
      %4104 = vmatprep.subr.mxu0 0.0
      %4105 = vmatpush1.msra.mxu0 0.0
      %4106 = vmatprep.subr.mxu0 0.0
      %4107 = vmatpush1.msra.mxu0 0.0
      %4108 = vmatprep.subr.mxu0 0.0
      %4109 = vmatpush1.msra.mxu0 0.0
      %4110 = vmatprep.subr.mxu0 0.0
      %4111 = vmatpush1.msra.mxu0 0.0
      %4112 = vmatprep.subr.mxu0 0.0
      %4113 = vmatpush1.msra.mxu0 0.0
      %4114 = vmatprep.subr.mxu0 0.0
      %4115 = vmatpush1.msra.mxu0 0.0
      %4116 = vmatprep.subr.mxu0 0.0
      %4117 = vmatpush1.msra.mxu0 0.0
      %4118 = vmatprep.subr.mxu0 0.0
      %4119 = vmatpush1.msra.mxu0 0.0
      %4120 = vmatprep.subr.mxu0 0.0
      %4121 = vmatpush1.msra.mxu0 0.0
      %4122 = vmatprep.subr.mxu0 0.0
      %4123 = vmatpush1.msra.mxu0 0.0
      %4124 = vmatprep.subr.mxu0 0.0
      %4125 = vmatpush1.msra.mxu0 0.0
      %4126 = vmatprep.subr.mxu0 0.0
      %4127 = vmatpush1.msra.mxu0 0.0
      %4128 = vmatprep.subr.mxu0 0.0
      %4129 = vmatpush1.msra.mxu0 0.0
      %4130 = vmatprep.subr.mxu0 0.0
      %4131 = vmatpush1.msra.mxu0 0.0
      %4132 = vmatprep.subr.mxu0 0.0
      %4133 = vmatpush1.msra.mxu0 0.0
      %4134 = vmatprep.mubr.f32.mxu0 0.0
      %4135 = vmatmul.mubr.f32.gmra.mrb[0].mxu0 %v4068
      %v4136 = vpop.f32.mrb[0].mxu0
      %v4137 = vadd.f32 0.0, %v4136
      %v4138 = vpop.f32.mrb[0].mxu0
      %4139 = vdwg.mxu0
      %4140 = vrot.lane.b32.xlu0 %v2889, 48
      %v4141 = vpop.permute.xlu0 %4140
      %v4144 = vsel %vm1176, %v3911, 0
      %4146 = vmatprep.subr.mxu0 0.0
      %4147 = vmatpush1.msra.mxu0 %v4141
      %4148 = vmatprep.subr.mxu0 0.0
      %4149 = vmatpush1.msra.mxu0 0.0
      %4150 = vmatprep.subr.mxu0 0.0
      %4151 = vmatpush1.msra.mxu0 0.0
      %4152 = vmatprep.subr.mxu0 0.0
      %4153 = vmatpush1.msra.mxu0 0.0
      %4154 = vmatprep.subr.mxu0 0.0
      %4155 = vmatpush1.msra.mxu0 0.0
      %4156 = vmatprep.subr.mxu0 0.0
      %4157 = vmatpush1.msra.mxu0 0.0
      %4158 = vmatprep.subr.mxu0 0.0
      %4159 = vmatpush1.msra.mxu0 0.0
      %4160 = vmatprep.subr.mxu0 0.0
      %4161 = vmatpush1.msra.mxu0 0.0
      %4162 = vmatprep.subr.mxu0 0.0
      %4163 = vmatpush1.msra.mxu0 0.0
      %4164 = vmatprep.subr.mxu0 0.0
      %4165 = vmatpush1.msra.mxu0 0.0
      %4166 = vmatprep.subr.mxu0 0.0
      %4167 = vmatpush1.msra.mxu0 0.0
      %4168 = vmatprep.subr.mxu0 0.0
      %4169 = vmatpush1.msra.mxu0 0.0
      %4170 = vmatprep.subr.mxu0 0.0
      %4171 = vmatpush1.msra.mxu0 0.0
      %4172 = vmatprep.subr.mxu0 0.0
      %4173 = vmatpush1.msra.mxu0 0.0
      %4174 = vmatprep.subr.mxu0 0.0
      %4175 = vmatpush1.msra.mxu0 0.0
      %4176 = vmatprep.subr.mxu0 0.0
      %4177 = vmatpush1.msra.mxu0 0.0
      %4178 = vmatprep.subr.mxu0 0.0
      %4179 = vmatpush1.msra.mxu0 0.0
      %4180 = vmatprep.subr.mxu0 0.0
      %4181 = vmatpush1.msra.mxu0 0.0
      %4182 = vmatprep.subr.mxu0 0.0
      %4183 = vmatpush1.msra.mxu0 0.0
      %4184 = vmatprep.subr.mxu0 0.0
      %4185 = vmatpush1.msra.mxu0 0.0
      %4186 = vmatprep.subr.mxu0 0.0
      %4187 = vmatpush1.msra.mxu0 0.0
      %4188 = vmatprep.subr.mxu0 0.0
      %4189 = vmatpush1.msra.mxu0 0.0
      %4190 = vmatprep.subr.mxu0 0.0
      %4191 = vmatpush1.msra.mxu0 0.0
      %4192 = vmatprep.subr.mxu0 0.0
      %4193 = vmatpush1.msra.mxu0 0.0
      %4194 = vmatprep.subr.mxu0 0.0
      %4195 = vmatpush1.msra.mxu0 0.0
      %4196 = vmatprep.subr.mxu0 0.0
      %4197 = vmatpush1.msra.mxu0 0.0
      %4198 = vmatprep.subr.mxu0 0.0
      %4199 = vmatpush1.msra.mxu0 0.0
      %4200 = vmatprep.subr.mxu0 0.0
      %4201 = vmatpush1.msra.mxu0 0.0
      %4202 = vmatprep.subr.mxu0 0.0
      %4203 = vmatpush1.msra.mxu0 0.0
      %4204 = vmatprep.subr.mxu0 0.0
      %4205 = vmatpush1.msra.mxu0 0.0
      %4206 = vmatprep.subr.mxu0 0.0
      %4207 = vmatpush1.msra.mxu0 0.0
      %4208 = vmatprep.subr.mxu0 0.0
      %4209 = vmatpush1.msra.mxu0 0.0
      %4210 = vmatprep.mubr.f32.mxu0 0.0
      %4211 = vmatmul.mubr.f32.gmra.mrb[0].mxu0 %v4144
      %v4212 = vpop.f32.mrb[0].mxu0
      %v4213 = vadd.f32 0.0, %v4212
      %v4214 = vpop.f32.mrb[0].mxu0
      %4215 = vdwg.mxu0
      %v4217 = vsel %vm866, %v3985, 0
      %v4220 = vsel %vm866, %v4061, 0
      %v4223 = vsel %vm866, %v4137, 0
      %v4226 = vsel %vm866, %v4213, 0
      %4228 = vmatprep.subr.mxu0 0.0
      %4229 = vmatpush1.msra.mxu0 %v2785
      %4230 = vmatprep.subr.mxu0 0.0
      %4231 = vmatpush1.msra.mxu0 %v2786
      %4232 = vmatprep.subr.mxu0 0.0
      %4233 = vmatpush1.msra.mxu0 0.0
      %4234 = vmatprep.subr.mxu0 0.0
      %4235 = vmatpush1.msra.mxu0 0.0
      %4236 = vmatprep.subr.mxu0 0.0
      %4237 = vmatpush1.msra.mxu0 0.0
      %4238 = vmatprep.subr.mxu0 0.0
      %4239 = vmatpush1.msra.mxu0 0.0
      %4240 = vmatprep.subr.mxu0 0.0
      %4241 = vmatpush1.msra.mxu0 0.0
      %4242 = vmatprep.subr.mxu0 0.0
      %4243 = vmatpush1.msra.mxu0 0.0
      %4244 = vmatprep.subr.mxu0 0.0
      %4245 = vmatpush1.msra.mxu0 0.0
      %4246 = vmatprep.subr.mxu0 0.0
      %4247 = vmatpush1.msra.mxu0 0.0
      %4248 = vmatprep.subr.mxu0 0.0
      %4249 = vmatpush1.msra.mxu0 0.0
      %4250 = vmatprep.subr.mxu0 0.0
      %4251 = vmatpush1.msra.mxu0 0.0
      %4252 = vmatprep.subr.mxu0 0.0
      %4253 = vmatpush1.msra.mxu0 0.0
      %4254 = vmatprep.subr.mxu0 0.0
      %4255 = vmatpush1.msra.mxu0 0.0
      %4256 = vmatprep.subr.mxu0 0.0
      %4257 = vmatpush1.msra.mxu0 0.0
      %4258 = vmatprep.subr.mxu0 0.0
      %4259 = vmatpush1.msra.mxu0 0.0
      %4260 = vmatprep.subr.mxu0 0.0
      %4261 = vmatpush1.msra.mxu0 0.0
      %4262 = vmatprep.subr.mxu0 0.0
      %4263 = vmatpush1.msra.mxu0 0.0
      %4264 = vmatprep.subr.mxu0 0.0
      %4265 = vmatpush1.msra.mxu0 0.0
      %4266 = vmatprep.subr.mxu0 0.0
      %4267 = vmatpush1.msra.mxu0 0.0
      %4268 = vmatprep.subr.mxu0 0.0
      %4269 = vmatpush1.msra.mxu0 0.0
      %4270 = vmatprep.subr.mxu0 0.0
      %4271 = vmatpush1.msra.mxu0 0.0
      %4272 = vmatprep.subr.mxu0 0.0
      %4273 = vmatpush1.msra.mxu0 0.0
      %4274 = vmatprep.subr.mxu0 0.0
      %4275 = vmatpush1.msra.mxu0 0.0
      %4276 = vmatprep.subr.mxu0 0.0
      %4277 = vmatpush1.msra.mxu0 0.0
      %4278 = vmatprep.subr.mxu0 0.0
      %4279 = vmatpush1.msra.mxu0 0.0
      %4280 = vmatprep.subr.mxu0 0.0
      %4281 = vmatpush1.msra.mxu0 0.0
      %4282 = vmatprep.subr.mxu0 0.0
      %4283 = vmatpush1.msra.mxu0 0.0
      %4284 = vmatprep.subr.mxu0 0.0
      %4285 = vmatpush1.msra.mxu0 0.0
      %4286 = vmatprep.subr.mxu0 0.0
      %4287 = vmatpush1.msra.mxu0 0.0
      %4288 = vmatprep.subr.mxu0 0.0
      %4289 = vmatpush1.msra.mxu0 0.0
      %4290 = vmatprep.subr.mxu0 0.0
      %4291 = vmatpush1.msra.mxu0 0.0
      %4292 = vmatprep.mubr.f32.mxu0 0.0
      %4293 = vmatmul.mubr.f32.gmra.mrb[0].mxu0 %v4217
      %v4294 = vpop.f32.mrb[0].mxu0
      %v4295 = vadd.f32 0.0, %v4294
      %v4296 = vpop.f32.mrb[0].mxu0
      %4297 = vmatprep.mubr.f32.mxu0 0.0
      %4298 = vmatmul.mubr.f32.gmra.mrb[0].mxu0 %v4220
      %v4299 = vpop.f32.mrb[0].mxu0
      %v4300 = vadd.f32 0.0, %v4299
      %v4301 = vpop.f32.mrb[0].mxu0
      %4302 = vmatprep.mubr.f32.mxu0 0.0
      %4303 = vmatmul.mubr.f32.gmra.mrb[0].mxu0 %v4223
      %v4304 = vpop.f32.mrb[0].mxu0
      %v4305 = vadd.f32 0.0, %v4304
      %v4306 = vpop.f32.mrb[0].mxu0
      %4307 = vmatprep.mubr.f32.mxu0 0.0
      %4308 = vmatmul.mubr.f32.gmra.mrb[0].mxu0 %v4226
      %v4309 = vpop.f32.mrb[0].mxu0
      %v4310 = vadd.f32 0.0, %v4309
      %v4311 = vpop.f32.mrb[0].mxu0
      %4312 = vdwg.mxu0
      %v4314 = vsel %vm866, %v3321, 0
      %v4317 = vsel %vm866, %v3397, 0
      %v4320 = vsel %vm866, %v3473, 0
      %v4323 = vsel %vm866, %v3549, 0
      %4325 = vmatprep.subr.mxu0 0.0
      %4326 = vmatpush1.msra.mxu0 %v2783
      %4327 = vmatprep.subr.mxu0 0.0
      %4328 = vmatpush1.msra.mxu0 %v2784
      %4329 = vmatprep.subr.mxu0 0.0
      %4330 = vmatpush1.msra.mxu0 0.0
      %4331 = vmatprep.subr.mxu0 0.0
      %4332 = vmatpush1.msra.mxu0 0.0
      %4333 = vmatprep.subr.mxu0 0.0
      %4334 = vmatpush1.msra.mxu0 0.0
      %4335 = vmatprep.subr.mxu0 0.0
      %4336 = vmatpush1.msra.mxu0 0.0
      %4337 = vmatprep.subr.mxu0 0.0
      %4338 = vmatpush1.msra.mxu0 0.0
      %4339 = vmatprep.subr.mxu0 0.0
      %4340 = vmatpush1.msra.mxu0 0.0
      %4341 = vmatprep.subr.mxu0 0.0
      %4342 = vmatpush1.msra.mxu0 0.0
      %4343 = vmatprep.subr.mxu0 0.0
      %4344 = vmatpush1.msra.mxu0 0.0
      %4345 = vmatprep.subr.mxu0 0.0
      %4346 = vmatpush1.msra.mxu0 0.0
      %4347 = vmatprep.subr.mxu0 0.0
      %4348 = vmatpush1.msra.mxu0 0.0
      %4349 = vmatprep.subr.mxu0 0.0
      %4350 = vmatpush1.msra.mxu0 0.0
      %4351 = vmatprep.subr.mxu0 0.0
      %4352 = vmatpush1.msra.mxu0 0.0
      %4353 = vmatprep.subr.mxu0 0.0
      %4354 = vmatpush1.msra.mxu0 0.0
      %4355 = vmatprep.subr.mxu0 0.0
      %4356 = vmatpush1.msra.mxu0 0.0
      %4357 = vmatprep.subr.mxu0 0.0
      %4358 = vmatpush1.msra.mxu0 0.0
      %4359 = vmatprep.subr.mxu0 0.0
      %4360 = vmatpush1.msra.mxu0 0.0
      %4361 = vmatprep.subr.mxu0 0.0
      %4362 = vmatpush1.msra.mxu0 0.0
      %4363 = vmatprep.subr.mxu0 0.0
      %4364 = vmatpush1.msra.mxu0 0.0
      %4365 = vmatprep.subr.mxu0 0.0
      %4366 = vmatpush1.msra.mxu0 0.0
      %4367 = vmatprep.subr.mxu0 0.0
      %4368 = vmatpush1.msra.mxu0 0.0
      %4369 = vmatprep.subr.mxu0 0.0
      %4370 = vmatpush1.msra.mxu0 0.0
      %4371 = vmatprep.subr.mxu0 0.0
      %4372 = vmatpush1.msra.mxu0 0.0
      %4373 = vmatprep.subr.mxu0 0.0
      %4374 = vmatpush1.msra.mxu0 0.0
      %4375 = vmatprep.subr.mxu0 0.0
      %4376 = vmatpush1.msra.mxu0 0.0
      %4377 = vmatprep.subr.mxu0 0.0
      %4378 = vmatpush1.msra.mxu0 0.0
      %4379 = vmatprep.subr.mxu0 0.0
      %4380 = vmatpush1.msra.mxu0 0.0
      %4381 = vmatprep.subr.mxu0 0.0
      %4382 = vmatpush1.msra.mxu0 0.0
      %4383 = vmatprep.subr.mxu0 0.0
      %4384 = vmatpush1.msra.mxu0 0.0
      %4385 = vmatprep.subr.mxu0 0.0
      %4386 = vmatpush1.msra.mxu0 0.0
      %4387 = vmatprep.subr.mxu0 0.0
      %4388 = vmatpush1.msra.mxu0 0.0
      %4389 = vmatprep.mubr.f32.mxu0 0.0
      %4390 = vmatmul.mubr.f32.gmra.mrb[0].mxu0 %v4314
      %v4391 = vpop.f32.mrb[0].mxu0
      %v4392 = vadd.f32 %v4295, %v4391
      %v4393 = vpop.f32.mrb[0].mxu0
      %4394 = vmatprep.mubr.f32.mxu0 0.0
      %4395 = vmatmul.mubr.f32.gmra.mrb[0].mxu0 %v4317
      %v4396 = vpop.f32.mrb[0].mxu0
      %v4397 = vadd.f32 %v4300, %v4396
      %v4398 = vpop.f32.mrb[0].mxu0
      %4399 = vmatprep.mubr.f32.mxu0 0.0
      %4400 = vmatmul.mubr.f32.gmra.mrb[0].mxu0 %v4320
      %v4401 = vpop.f32.mrb[0].mxu0
      %v4402 = vadd.f32 %v4305, %v4401
      %v4403 = vpop.f32.mrb[0].mxu0
      %4404 = vmatprep.mubr.f32.mxu0 0.0
      %4405 = vmatmul.mubr.f32.gmra.mrb[0].mxu0 %v4323
      %v4406 = vpop.f32.mrb[0].mxu0
      %v4407 = vadd.f32 %v4310, %v4406
      %v4408 = vpop.f32.mrb[0].mxu0
      %4409 = vdwg.mxu0
      %v4411 = vlaneseq
      %v4412 = vshrl.u32 %v4411, 7
      %v4413 = vsub.s32 0, %v4412
      %v4414 = vrot.slane %v2788, %v4413
      %v4416 = vadd.f32 %v4392, %v4414
      %v4417 = vadd.f32 %v4397, %v4414
      %v4418 = vadd.f32 %v4402, %v4414
      %v4419 = vadd.f32 %v4407, %v4414
      %v4420 = vadd.f32 %v2771, %v4416
      %v4421 = vadd.f32 %v2772, %v4417
      %v4422 = vadd.f32 %v2773, %v4418
      %v4423 = vadd.f32 %v2774, %v4419
      %s4424 = scalar_lea.vmem %s8, 1
      %v4425 = vld [vmem:[%s4424] sm:$0x1]
      %s4426 = scalar_lea.vmem %s9, 1
      %v4427 = vld [vmem:[%s4426] sm:$0x1]
      %v4428 = vsel %vm765, %v4420, 0.0
      %4429 = vadd.xlane.f32.xlu0 %v4428
      %v4430 = vpop.xlane.xlu0 %4429
      %v4431 = vsel %vm765, %v4421, 0.0
      %4432 = vadd.xlane.f32.xlu0 %v4431
      %v4433 = vpop.xlane.xlu0 %4432
      %v4434 = vsel %vm765, %v4422, 0.0
      %4435 = vadd.xlane.f32.xlu0 %v4434
      %v4436 = vpop.xlane.xlu0 %4435
      %v4437 = vsel %vm765, %v4423, 0.0
      %4438 = vadd.xlane.f32.xlu0 %v4437
      %v4439 = vpop.xlane.xlu0 %4438
      %v4440 = vmul.f32 %v4430, %v2411
      %v4441 = vmul.f32 %v4433, %v2411
      %v4442 = vmul.f32 %v4436, %v2411
      %v4443 = vmul.f32 %v4439, %v2411
      %v4444 = vsub.f32 %v4420, %v4440
      %v4445 = vsub.f32 %v4421, %v4441
      %v4446 = vsub.f32 %v4422, %v4442
      %v4447 = vsub.f32 %v4423, %v4443
      %v4448 = vmul.f32 %v4444, %v4444
      %v4449 = vmul.f32 %v4445, %v4445
      %v4450 = vmul.f32 %v4446, %v4446
      %v4451 = vmul.f32 %v4447, %v4447
      %v4452 = vsel %vm765, %v4448, 0.0
      %4453 = vadd.xlane.f32.xlu0 %v4452
      %v4454 = vpop.xlane.xlu0 %4453
      %v4455 = vsel %vm765, %v4449, 0.0
      %4456 = vadd.xlane.f32.xlu0 %v4455
      %v4457 = vpop.xlane.xlu0 %4456
      %v4458 = vsel %vm765, %v4450, 0.0
      %4459 = vadd.xlane.f32.xlu0 %v4458
      %v4460 = vpop.xlane.xlu0 %4459
      %v4461 = vsel %vm765, %v4451, 0.0
      %4462 = vadd.xlane.f32.xlu0 %v4461
      %v4463 = vpop.xlane.xlu0 %4462
      %v4464 = vmul.f32 %v4454, %v2411
      %v4465 = vmul.f32 %v4457, %v2411
      %v4466 = vmul.f32 %v4460, %v2411
      %v4467 = vmul.f32 %v4463, %v2411
      %v4468 = vadd.f32 %v4464, 1e-05
      %v4469 = vadd.f32 %v4465, 1e-05
      %v4470 = vadd.f32 %v4466, 1e-05
      %v4471 = vadd.f32 %v4467, 1e-05
      %v4472 = vrsqrt.pop %v4468
      %v4473 = vrsqrt.pop %v4469
      %v4474 = vrsqrt.pop %v4470
      %v4475 = vrsqrt.pop %v4471
      %v4476 = vmul.f32 %v4444, %v4472
      %v4477 = vmul.f32 %v4445, %v4473
      %v4478 = vmul.f32 %v4446, %v4474
      %v4479 = vmul.f32 %v4447, %v4475
      %v4481 = vlaneseq
      %v4482 = vshrl.u32 %v4481, 7
      %v4483 = vsub.s32 0, %v4482
      %v4484 = vrot.slane %v4425, %v4483
      %v4486 = vmul.f32 %v4476, %v4484
      %v4487 = vmul.f32 %v4477, %v4484
      %v4488 = vmul.f32 %v4478, %v4484
      %v4489 = vmul.f32 %v4479, %v4484
      %v4491 = vlaneseq
      %v4492 = vshrl.u32 %v4491, 7
      %v4493 = vsub.s32 0, %v4492
      %v4494 = vrot.slane %v4427, %v4493
      %v4496 = vadd.f32 %v4486, %v4494
      %v4497 = vadd.f32 %v4487, %v4494
      %v4498 = vadd.f32 %v4488, %v4494
      %v4499 = vadd.f32 %v4489, %v4494
      %s4500 = scalar_lea.vmem %s10, 32
      %v4501 = vld [vmem:[%s4500] sm:$0xff]
      %v4502 = vld [vmem:[%s4500 + $0x8] sm:$0xff]
      %v4503 = vld [vmem:[%s4500 + $0x10] sm:$0xff]
      %v4504 = vld [vmem:[%s4500 + $0x18] sm:$0xff]
      %s4505 = scalar_lea.vmem %s11, 1
      %v4506 = vld [vmem:[%s4505] sm:$0x1]
      %v4508 = vlaneseq
      %v4509 = vshrl.u32 %v4508, 7
      %v4510 = vsub.s32 0, %v4509
      %v4511 = vrot.slane %v4506, %v4510
      %v4514 = vsel %vm765, %v4496, 0
      %v4517 = vsel %vm765, %v4497, 0
      %v4520 = vsel %vm765, %v4498, 0
      %v4523 = vsel %vm765, %v4499, 0
      %4525 = vmatprep.subr.mxu0 0.0
      %4526 = vmatpush1.msra.mxu0 %v4501
      %4527 = vmatprep.subr.mxu0 0.0
      %4528 = vmatpush1.msra.mxu0 %v4502
      %4529 = vmatprep.subr.mxu0 0.0
      %4530 = vmatpush1.msra.mxu0 %v4503
      %4531 = vmatprep.subr.mxu0 0.0
      %4532 = vmatpush1.msra.mxu0 %v4504
      %4533 = vmatprep.subr.mxu0 0.0
      %4534 = vmatpush1.msra.mxu0 0.0
      %4535 = vmatprep.subr.mxu0 0.0
      %4536 = vmatpush1.msra.mxu0 0.0
      %4537 = vmatprep.subr.mxu0 0.0
      %4538 = vmatpush1.msra.mxu0 0.0
      %4539 = vmatprep.subr.mxu0 0.0
      %4540 = vmatpush1.msra.mxu0 0.0
      %4541 = vmatprep.subr.mxu0 0.0
      %4542 = vmatpush1.msra.mxu0 0.0
      %4543 = vmatprep.subr.mxu0 0.0
      %4544 = vmatpush1.msra.mxu0 0.0
      %4545 = vmatprep.subr.mxu0 0.0
      %4546 = vmatpush1.msra.mxu0 0.0
      %4547 = vmatprep.subr.mxu0 0.0
      %4548 = vmatpush1.msra.mxu0 0.0
      %4549 = vmatprep.subr.mxu0 0.0
      %4550 = vmatpush1.msra.mxu0 0.0
      %4551 = vmatprep.subr.mxu0 0.0
      %4552 = vmatpush1.msra.mxu0 0.0
      %4553 = vmatprep.subr.mxu0 0.0
      %4554 = vmatpush1.msra.mxu0 0.0
      %4555 = vmatprep.subr.mxu0 0.0
      %4556 = vmatpush1.msra.mxu0 0.0
      %4557 = vmatprep.subr.mxu0 0.0
      %4558 = vmatpush1.msra.mxu0 0.0
      %4559 = vmatprep.subr.mxu0 0.0
      %4560 = vmatpush1.msra.mxu0 0.0
      %4561 = vmatprep.subr.mxu0 0.0
      %4562 = vmatpush1.msra.mxu0 0.0
      %4563 = vmatprep.subr.mxu0 0.0
      %4564 = vmatpush1.msra.mxu0 0.0
      %4565 = vmatprep.subr.mxu0 0.0
      %4566 = vmatpush1.msra.mxu0 0.0
      %4567 = vmatprep.subr.mxu0 0.0
      %4568 = vmatpush1.msra.mxu0 0.0
      %4569 = vmatprep.subr.mxu0 0.0
      %4570 = vmatpush1.msra.mxu0 0.0
      %4571 = vmatprep.subr.mxu0 0.0
      %4572 = vmatpush1.msra.mxu0 0.0
      %4573 = vmatprep.subr.mxu0 0.0
      %4574 = vmatpush1.msra.mxu0 0.0
      %4575 = vmatprep.subr.mxu0 0.0
      %4576 = vmatpush1.msra.mxu0 0.0
      %4577 = vmatprep.subr.mxu0 0.0
      %4578 = vmatpush1.msra.mxu0 0.0
      %4579 = vmatprep.subr.mxu0 0.0
      %4580 = vmatpush1.msra.mxu0 0.0
      %4581 = vmatprep.subr.mxu0 0.0
      %4582 = vmatpush1.msra.mxu0 0.0
      %4583 = vmatprep.subr.mxu0 0.0
      %4584 = vmatpush1.msra.mxu0 0.0
      %4585 = vmatprep.subr.mxu0 0.0
      %4586 = vmatpush1.msra.mxu0 0.0
      %4587 = vmatprep.subr.mxu0 0.0
      %4588 = vmatpush1.msra.mxu0 0.0
      %4589 = vmatprep.mubr.f32.mxu0 0.0
      %4590 = vmatmul.mubr.f32.gmra.mrb[0].mxu0 %v4514
      %v4591 = vpop.f32.mrb[0].mxu0
      %v4592 = vadd.f32 %v4511, %v4591
      %v4593 = vpop.f32.mrb[0].mxu0
      %4594 = vmatprep.mubr.f32.mxu0 0.0
      %4595 = vmatmul.mubr.f32.gmra.mrb[0].mxu0 %v4517
      %v4596 = vpop.f32.mrb[0].mxu0
      %v4597 = vadd.f32 %v4511, %v4596
      %v4598 = vpop.f32.mrb[0].mxu0
      %4599 = vmatprep.mubr.f32.mxu0 0.0
      %4600 = vmatmul.mubr.f32.gmra.mrb[0].mxu0 %v4520
      %v4601 = vpop.f32.mrb[0].mxu0
      %v4602 = vadd.f32 %v4511, %v4601
      %v4603 = vpop.f32.mrb[0].mxu0
      %4604 = vmatprep.mubr.f32.mxu0 0.0
      %4605 = vmatmul.mubr.f32.gmra.mrb[0].mxu0 %v4523
      %v4606 = vpop.f32.mrb[0].mxu0
      %v4607 = vadd.f32 %v4511, %v4606
      %v4608 = vpop.f32.mrb[0].mxu0
      %4609 = vdwg.mxu0
      %v4610 = vmax.f32 %v4592, 0.0
      %v4611 = vmax.f32 %v4597, 0.0
      %v4612 = vmax.f32 %v4602, 0.0
      %v4613 = vmax.f32 %v4607, 0.0
      %s4614 = scalar_lea.vmem %s12, 64
      %v4615 = vld [vmem:[%s4614] sm:$0xff]
      %v4616 = vld [vmem:[%s4614 + $0x8] sm:$0xff]
      %v4617 = vld [vmem:[%s4614 + $0x10] sm:$0xff]
      %v4618 = vld [vmem:[%s4614 + $0x18] sm:$0xff]
      %v4619 = vld [vmem:[%s4614 + $0x20] sm:$0xff]
      %v4620 = vld [vmem:[%s4614 + $0x28] sm:$0xff]
      %v4621 = vld [vmem:[%s4614 + $0x30] sm:$0xff]
      %v4622 = vld [vmem:[%s4614 + $0x38] sm:$0xff]
      %s4623 = scalar_lea.vmem %s13, 1
      %v4624 = vld [vmem:[%s4623] sm:$0x1]
      %v4626 = vlaneseq
      %v4627 = vshrl.u32 %v4626, 7
      %v4628 = vsub.s32 0, %v4627
      %v4629 = vrot.slane %v4624, %v4628
      %v4632 = vsel %vm2599, %v4610, 0
      %v4635 = vsel %vm2599, %v4611, 0
      %v4638 = vsel %vm2599, %v4612, 0
      %v4641 = vsel %vm2599, %v4613, 0
      %4643 = vmatprep.subr.mxu0 0.0
      %4644 = vmatpush1.msra.mxu0 %v4615
      %4645 = vmatprep.subr.mxu0 0.0
      %4646 = vmatpush1.msra.mxu0 %v4616
      %4647 = vmatprep.subr.mxu0 0.0
      %4648 = vmatpush1.msra.mxu0 %v4617
      %4649 = vmatprep.subr.mxu0 0.0
      %4650 = vmatpush1.msra.mxu0 %v4618
      %4651 = vmatprep.subr.mxu0 0.0
      %4652 = vmatpush1.msra.mxu0 %v4619
      %4653 = vmatprep.subr.mxu0 0.0
      %4654 = vmatpush1.msra.mxu0 %v4620
      %4655 = vmatprep.subr.mxu0 0.0
      %4656 = vmatpush1.msra.mxu0 %v4621
      %4657 = vmatprep.subr.mxu0 0.0
      %4658 = vmatpush1.msra.mxu0 %v4622
      %4659 = vmatprep.subr.mxu0 0.0
      %4660 = vmatpush1.msra.mxu0 0.0
      %4661 = vmatprep.subr.mxu0 0.0
      %4662 = vmatpush1.msra.mxu0 0.0
      %4663 = vmatprep.subr.mxu0 0.0
      %4664 = vmatpush1.msra.mxu0 0.0
      %4665 = vmatprep.subr.mxu0 0.0
      %4666 = vmatpush1.msra.mxu0 0.0
      %4667 = vmatprep.subr.mxu0 0.0
      %4668 = vmatpush1.msra.mxu0 0.0
      %4669 = vmatprep.subr.mxu0 0.0
      %4670 = vmatpush1.msra.mxu0 0.0
      %4671 = vmatprep.subr.mxu0 0.0
      %4672 = vmatpush1.msra.mxu0 0.0
      %4673 = vmatprep.subr.mxu0 0.0
      %4674 = vmatpush1.msra.mxu0 0.0
      %4675 = vmatprep.subr.mxu0 0.0
      %4676 = vmatpush1.msra.mxu0 0.0
      %4677 = vmatprep.subr.mxu0 0.0
      %4678 = vmatpush1.msra.mxu0 0.0
      %4679 = vmatprep.subr.mxu0 0.0
      %4680 = vmatpush1.msra.mxu0 0.0
      %4681 = vmatprep.subr.mxu0 0.0
      %4682 = vmatpush1.msra.mxu0 0.0
      %4683 = vmatprep.subr.mxu0 0.0
      %4684 = vmatpush1.msra.mxu0 0.0
      %4685 = vmatprep.subr.mxu0 0.0
      %4686 = vmatpush1.msra.mxu0 0.0
      %4687 = vmatprep.subr.mxu0 0.0
      %4688 = vmatpush1.msra.mxu0 0.0
      %4689 = vmatprep.subr.mxu0 0.0
      %4690 = vmatpush1.msra.mxu0 0.0
      %4691 = vmatprep.subr.mxu0 0.0
      %4692 = vmatpush1.msra.mxu0 0.0
      %4693 = vmatprep.subr.mxu0 0.0
      %4694 = vmatpush1.msra.mxu0 0.0
      %4695 = vmatprep.subr.mxu0 0.0
      %4696 = vmatpush1.msra.mxu0 0.0
      %4697 = vmatprep.subr.mxu0 0.0
      %4698 = vmatpush1.msra.mxu0 0.0
      %4699 = vmatprep.subr.mxu0 0.0
      %4700 = vmatpush1.msra.mxu0 0.0
      %4701 = vmatprep.subr.mxu0 0.0
      %4702 = vmatpush1.msra.mxu0 0.0
      %4703 = vmatprep.subr.mxu0 0.0
      %4704 = vmatpush1.msra.mxu0 0.0
      %4705 = vmatprep.subr.mxu0 0.0
      %4706 = vmatpush1.msra.mxu0 0.0
      %4707 = vmatprep.mubr.f32.mxu0 0.0
      %4708 = vmatmul.mubr.f32.gmra.mrb[0].mxu0 %v4632
      %v4709 = vpop.f32.mrb[0].mxu0
      %v4710 = vadd.f32 %v4629, %v4709
      %v4711 = vpop.f32.mrb[0].mxu0
      %4712 = vmatprep.mubr.f32.mxu0 0.0
      %4713 = vmatmul.mubr.f32.gmra.mrb[0].mxu0 %v4635
      %v4714 = vpop.f32.mrb[0].mxu0
      %v4715 = vadd.f32 %v4629, %v4714
      %v4716 = vpop.f32.mrb[0].mxu0
      %4717 = vmatprep.mubr.f32.mxu0 0.0
      %4718 = vmatmul.mubr.f32.gmra.mrb[0].mxu0 %v4638
      %v4719 = vpop.f32.mrb[0].mxu0
      %v4720 = vadd.f32 %v4629, %v4719
      %v4721 = vpop.f32.mrb[0].mxu0
      %4722 = vmatprep.mubr.f32.mxu0 0.0
      %4723 = vmatmul.mubr.f32.gmra.mrb[0].mxu0 %v4641
      %v4724 = vpop.f32.mrb[0].mxu0
      %v4725 = vadd.f32 %v4629, %v4724
      %v4726 = vpop.f32.mrb[0].mxu0
      %4727 = vdwg.mxu0
      %v4728 = vadd.f32 %v4496, %v4710
      %v4729 = vadd.f32 %v4497, %v4715
      %v4730 = vadd.f32 %v4498, %v4720
      %v4731 = vadd.f32 %v4499, %v4725
      %s4732 = scalar_lea.vmem %s14, 1
      %v4733 = vld [vmem:[%s4732] sm:$0x1]
      %s4734 = scalar_lea.vmem %s15, 1
      %v4735 = vld [vmem:[%s4734] sm:$0x1]
      %v4736 = vsel %vm765, %v4728, 0.0
      %4737 = vadd.xlane.f32.xlu0 %v4736
      %v4738 = vpop.xlane.xlu0 %4737
      %v4739 = vsel %vm765, %v4729, 0.0
      %4740 = vadd.xlane.f32.xlu0 %v4739
      %v4741 = vpop.xlane.xlu0 %4740
      %v4742 = vsel %vm765, %v4730, 0.0
      %4743 = vadd.xlane.f32.xlu0 %v4742
      %v4744 = vpop.xlane.xlu0 %4743
      %v4745 = vsel %vm765, %v4731, 0.0
      %4746 = vadd.xlane.f32.xlu0 %v4745
      %v4747 = vpop.xlane.xlu0 %4746
      %v4748 = vmul.f32 %v4738, %v2411
      %v4749 = vmul.f32 %v4741, %v2411
      %v4750 = vmul.f32 %v4744, %v2411
      %v4751 = vmul.f32 %v4747, %v2411
      %v4752 = vsub.f32 %v4728, %v4748
      %v4753 = vsub.f32 %v4729, %v4749
      %v4754 = vsub.f32 %v4730, %v4750
      %v4755 = vsub.f32 %v4731, %v4751
      %v4756 = vmul.f32 %v4752, %v4752
      %v4757 = vmul.f32 %v4753, %v4753
      %v4758 = vmul.f32 %v4754, %v4754
      %v4759 = vmul.f32 %v4755, %v4755
      %v4760 = vsel %vm765, %v4756, 0.0
      %4761 = vadd.xlane.f32.xlu0 %v4760
      %v4762 = vpop.xlane.xlu0 %4761
      %v4763 = vsel %vm765, %v4757, 0.0
      %4764 = vadd.xlane.f32.xlu0 %v4763
      %v4765 = vpop.xlane.xlu0 %4764
      %v4766 = vsel %vm765, %v4758, 0.0
      %4767 = vadd.xlane.f32.xlu0 %v4766
      %v4768 = vpop.xlane.xlu0 %4767
      %v4769 = vsel %vm765, %v4759, 0.0
      %4770 = vadd.xlane.f32.xlu0 %v4769
      %v4771 = vpop.xlane.xlu0 %4770
      %v4772 = vmul.f32 %v4762, %v2411
      %v4773 = vmul.f32 %v4765, %v2411
      %v4774 = vmul.f32 %v4768, %v2411
      %v4775 = vmul.f32 %v4771, %v2411
      %v4776 = vadd.f32 %v4772, 1e-05
      %v4777 = vadd.f32 %v4773, 1e-05
      %v4778 = vadd.f32 %v4774, 1e-05
      %v4779 = vadd.f32 %v4775, 1e-05
      %v4780 = vrsqrt.pop %v4776
      %v4781 = vrsqrt.pop %v4777
      %v4782 = vrsqrt.pop %v4778
      %v4783 = vrsqrt.pop %v4779
      %v4784 = vmul.f32 %v4752, %v4780
      %v4785 = vmul.f32 %v4753, %v4781
      %v4786 = vmul.f32 %v4754, %v4782
      %v4787 = vmul.f32 %v4755, %v4783
      %v4789 = vlaneseq
      %v4790 = vshrl.u32 %v4789, 7
      %v4791 = vsub.s32 0, %v4790
      %v4792 = vrot.slane %v4733, %v4791
      %v4794 = vmul.f32 %v4784, %v4792
      %v4795 = vmul.f32 %v4785, %v4792
      %v4796 = vmul.f32 %v4786, %v4792
      %v4797 = vmul.f32 %v4787, %v4792
      %v4799 = vlaneseq
      %v4800 = vshrl.u32 %v4799, 7
      %v4801 = vsub.s32 0, %v4800
      %v4802 = vrot.slane %v4735, %v4801
      %v4804 = vadd.f32 %v4794, %v4802
      %v4805 = vadd.f32 %v4795, %v4802
      %v4806 = vadd.f32 %v4796, %v4802
      %v4807 = vadd.f32 %v4797, %v4802
      %v4808 = vsel %vm765, %v4804, 0.0
      %v4809 = vrot.slane %v4808, 4
      %v4810 = vadd.f32 %v4808, %v4809
      %v4811 = vrot.slane %v4810, 2
      %v4812 = vadd.f32 %v4810, %v4811
      %v4813 = vrot.slane %v4812, 1
      %v4814 = vadd.f32 %v4812, %v4813
      %v4815 = vsel %vm765, %v4805, 0.0
      %v4816 = vrot.slane %v4815, 4
      %v4817 = vadd.f32 %v4815, %v4816
      %v4818 = vrot.slane %v4817, 2
      %v4819 = vadd.f32 %v4817, %v4818
      %v4820 = vrot.slane %v4819, 1
      %v4821 = vadd.f32 %v4819, %v4820
      %v4822 = vsel %vm765, %v4806, 0.0
      %v4823 = vrot.slane %v4822, 4
      %v4824 = vadd.f32 %v4822, %v4823
      %v4825 = vrot.slane %v4824, 2
      %v4826 = vadd.f32 %v4824, %v4825
      %v4827 = vrot.slane %v4826, 1
      %v4828 = vadd.f32 %v4826, %v4827
      %v4829 = vsel %vm765, %v4807, 0.0
      %v4830 = vrot.slane %v4829, 4
      %v4831 = vadd.f32 %v4829, %v4830
      %v4832 = vrot.slane %v4831, 2
      %v4833 = vadd.f32 %v4831, %v4832
      %v4834 = vrot.slane %v4833, 1
      %v4835 = vadd.f32 %v4833, %v4834
      %v4836 = vrcp.pop 8.0
      %v4837 = vmul.f32 %v4814, %v4836
      %v4838 = vmul.f32 %v4821, %v4836
      %v4839 = vmul.f32 %v4828, %v4836
      %v4840 = vmul.f32 %v4835, %v4836
      %v4841 = vld [vmem:[%s16] sm:$0xff]
      %v4842 = vld [vmem:[%s16 + $0x8] sm:$0xff]
      %v4843 = vld [vmem:[%s16 + $0x10] sm:$0xff]
      %v4844 = vld [vmem:[%s16 + $0x18] sm:$0xff]
      %v4845 = vld [vmem:[%s17] sm:$0x1]
      %v4847 = vlaneseq
      %v4848 = vshrl.u32 %v4847, 7
      %v4849 = vsub.s32 0, %v4848
      %v4850 = vrot.slane %v4845, %v4849
      %vm4856 = vcmask 1041409
      %v4857 = vsel %vm4856, %v4838, %v4837
      %vm4858 = vcmask 1042434
      %v4859 = vsel %vm4858, %v4839, %v4857
      %vm4860 = vcmask 1043459
      %v4861 = vsel %vm4860, %v4840, %v4859
      %v4862 = vsel %vm765, %v4861, 0
      %4864 = vmatprep.subr.mxu0 0.0
      %4865 = vmatpush1.msra.mxu0 %v4841
      %4866 = vmatprep.subr.mxu0 0.0
      %4867 = vmatpush1.msra.mxu0 %v4842
      %4868 = vmatprep.subr.mxu0 0.0
      %4869 = vmatpush1.msra.mxu0 %v4843
      %4870 = vmatprep.subr.mxu0 0.0
      %4871 = vmatpush1.msra.mxu0 %v4844
      %4872 = vmatprep.subr.mxu0 0.0
      %4873 = vmatpush1.msra.mxu0 0.0
      %4874 = vmatprep.subr.mxu0 0.0
      %4875 = vmatpush1.msra.mxu0 0.0
      %4876 = vmatprep.subr.mxu0 0.0
      %4877 = vmatpush1.msra.mxu0 0.0
      %4878 = vmatprep.subr.mxu0 0.0
      %4879 = vmatpush1.msra.mxu0 0.0
      %4880 = vmatprep.subr.mxu0 0.0
      %4881 = vmatpush1.msra.mxu0 0.0
      %4882 = vmatprep.subr.mxu0 0.0
      %4883 = vmatpush1.msra.mxu0 0.0
      %4884 = vmatprep.subr.mxu0 0.0
      %4885 = vmatpush1.msra.mxu0 0.0
      %4886 = vmatprep.subr.mxu0 0.0
      %4887 = vmatpush1.msra.mxu0 0.0
      %4888 = vmatprep.subr.mxu0 0.0
      %4889 = vmatpush1.msra.mxu0 0.0
      %4890 = vmatprep.subr.mxu0 0.0
      %4891 = vmatpush1.msra.mxu0 0.0
      %4892 = vmatprep.subr.mxu0 0.0
      %4893 = vmatpush1.msra.mxu0 0.0
      %4894 = vmatprep.subr.mxu0 0.0
      %4895 = vmatpush1.msra.mxu0 0.0
      %4896 = vmatprep.subr.mxu0 0.0
      %4897 = vmatpush1.msra.mxu0 0.0
      %4898 = vmatprep.subr.mxu0 0.0
      %4899 = vmatpush1.msra.mxu0 0.0
      %4900 = vmatprep.subr.mxu0 0.0
      %4901 = vmatpush1.msra.mxu0 0.0
      %4902 = vmatprep.subr.mxu0 0.0
      %4903 = vmatpush1.msra.mxu0 0.0
      %4904 = vmatprep.subr.mxu0 0.0
      %4905 = vmatpush1.msra.mxu0 0.0
      %4906 = vmatprep.subr.mxu0 0.0
      %4907 = vmatpush1.msra.mxu0 0.0
      %4908 = vmatprep.subr.mxu0 0.0
      %4909 = vmatpush1.msra.mxu0 0.0
      %4910 = vmatprep.subr.mxu0 0.0
      %4911 = vmatpush1.msra.mxu0 0.0
      %4912 = vmatprep.subr.mxu0 0.0
      %4913 = vmatpush1.msra.mxu0 0.0
      %4914 = vmatprep.subr.mxu0 0.0
      %4915 = vmatpush1.msra.mxu0 0.0
      %4916 = vmatprep.subr.mxu0 0.0
      %4917 = vmatpush1.msra.mxu0 0.0
      %4918 = vmatprep.subr.mxu0 0.0
      %4919 = vmatpush1.msra.mxu0 0.0
      %4920 = vmatprep.subr.mxu0 0.0
      %4921 = vmatpush1.msra.mxu0 0.0
      %4922 = vmatprep.subr.mxu0 0.0
      %4923 = vmatpush1.msra.mxu0 0.0
      %4924 = vmatprep.subr.mxu0 0.0
      %4925 = vmatpush1.msra.mxu0 0.0
      %4926 = vmatprep.subr.mxu0 0.0
      %4927 = vmatpush1.msra.mxu0 0.0
      %4928 = vmatprep.mubr.f32.mxu0 0.0
      %4929 = vmatmul.mubr.f32.gmra.mrb[0].mxu0 %v4862
      %v4930 = vpop.f32.mrb[0].mxu0
      %v4931 = vadd.f32 %v4850, %v4930
      %v4932 = vpop.f32.mrb[0].mxu0
      %4933 = vdwg.mxu0
      %4935 = vrot.lane.b32.xlu0 %v4931, 96
      %v4936 = vpop.permute.xlu0 %4935
      %v4937 = vsel %vm765, %v4931, 0
      %v4939 = vsel %vm765, %v4936, 0
      %4941 = vmatprep.subr.mxu0 0.0
      %4942 = vmatpush1.xpose.msra.mxu0 %v4939
      %4943 = vmatprep.subr.mxu0 0.0
      %4944 = vmatpush1.xpose.msra.mxu0 0.0
      %4945 = vmatprep.subr.mxu0 0.0
      %4946 = vmatpush1.xpose.msra.mxu0 0.0
      %4947 = vmatprep.subr.mxu0 0.0
      %4948 = vmatpush1.xpose.msra.mxu0 0.0
      %4949 = vmatprep.subr.mxu0 0.0
      %4950 = vmatpush1.xpose.msra.mxu0 0.0
      %4951 = vmatprep.subr.mxu0 0.0
      %4952 = vmatpush1.xpose.msra.mxu0 0.0
      %4953 = vmatprep.subr.mxu0 0.0
      %4954 = vmatpush1.xpose.msra.mxu0 0.0
      %4955 = vmatprep.subr.mxu0 0.0
      %4956 = vmatpush1.xpose.msra.mxu0 0.0
      %4957 = vmatprep.subr.mxu0 0.0
      %4958 = vmatpush1.xpose.msra.mxu0 0.0
      %4959 = vmatprep.subr.mxu0 0.0
      %4960 = vmatpush1.xpose.msra.mxu0 0.0
      %4961 = vmatprep.subr.mxu0 0.0
      %4962 = vmatpush1.xpose.msra.mxu0 0.0
      %4963 = vmatprep.subr.mxu0 0.0
      %4964 = vmatpush1.xpose.msra.mxu0 0.0
      %4965 = vmatprep.subr.mxu0 0.0
      %4966 = vmatpush1.xpose.msra.mxu0 0.0
      %4967 = vmatprep.subr.mxu0 0.0
      %4968 = vmatpush1.xpose.msra.mxu0 0.0
      %4969 = vmatprep.subr.mxu0 0.0
      %4970 = vmatpush1.xpose.msra.mxu0 0.0
      %4971 = vmatprep.subr.mxu0 0.0
      %4972 = vmatpush1.xpose.msra.mxu0 0.0
      %4973 = vmatprep.subr.mxu0 0.0
      %4974 = vmatpush1.xpose.msra.mxu0 0.0
      %4975 = vmatprep.subr.mxu0 0.0
      %4976 = vmatpush1.xpose.msra.mxu0 0.0
      %4977 = vmatprep.subr.mxu0 0.0
      %4978 = vmatpush1.xpose.msra.mxu0 0.0
      %4979 = vmatprep.subr.mxu0 0.0
      %4980 = vmatpush1.xpose.msra.mxu0 0.0
      %4981 = vmatprep.subr.mxu0 0.0
      %4982 = vmatpush1.xpose.msra.mxu0 0.0
      %4983 = vmatprep.subr.mxu0 0.0
      %4984 = vmatpush1.xpose.msra.mxu0 0.0
      %4985 = vmatprep.subr.mxu0 0.0
      %4986 = vmatpush1.xpose.msra.mxu0 0.0
      %4987 = vmatprep.subr.mxu0 0.0
      %4988 = vmatpush1.xpose.msra.mxu0 0.0
      %4989 = vmatprep.subr.mxu0 0.0
      %4990 = vmatpush1.xpose.msra.mxu0 0.0
      %4991 = vmatprep.subr.mxu0 0.0
      %4992 = vmatpush1.xpose.msra.mxu0 0.0
      %4993 = vmatprep.subr.mxu0 0.0
      %4994 = vmatpush1.xpose.msra.mxu0 0.0
      %4995 = vmatprep.subr.mxu0 0.0
      %4996 = vmatpush1.xpose.msra.mxu0 0.0
      %4997 = vmatprep.subr.mxu0 0.0
      %4998 = vmatpush1.xpose.msra.mxu0 0.0
      %4999 = vmatprep.subr.mxu0 0.0
      %5000 = vmatpush1.xpose.msra.mxu0 0.0
      %5001 = vmatprep.subr.mxu0 0.0
      %5002 = vmatpush1.xpose.msra.mxu0 0.0
      %5003 = vmatprep.subr.mxu0 0.0
      %5004 = vmatpush1.xpose.msra.mxu0 0.0
      %5005 = vmatprep.mubr.f32.mxu0 0.0
      %5006 = vmatmul.mubr.f32.gmra.mrb[0].mxu0 %v4937
      %v5007 = vpop.f32.mrb[0].mxu0
      %v5008 = vadd.f32 0.0, %v5007
      %v5009 = vpop.f32.mrb[0].mxu0
      %5010 = vdwg.mxu0
      %v5011 = vrcp.pop 5.656854
      %v5012 = vmul.f32 %v5008, %v5011
      %vm5013 = vcmask 27648
      %v5014 = vsel %vm5013, %v5012, -inf
      %5015 = vmax.xlane.f32.xlu0 %v5014
      %v5016 = vpop.xlane.xlu0 %5015
      %v5017 = vsub.f32 %v5012, %v5016
      %v5018 = vmul.f32 %v5017, 1.442695
      %v5019 = vpow.pop %v5018
      %v5020 = vsel %vm5013, %v5019, 0.0
      %5021 = vadd.xlane.f32.xlu0 %v5020
      %v5022 = vpop.xlane.xlu0 %5021
      %v5023 = vrcp.pop %v5022
      %v5024 = vmul.f32 %v5019, %v5023
      %5025 = vrot.lane.b32.xlu0 %v4931, 64
      %v5026 = vpop.permute.xlu0 %5025
      %v5028 = vsel %vm642, %v5024, 0
      %v5030 = vsel %vm655, %v5026, 0
      %5032 = vmatprep.subr.mxu0 0.0
      %5033 = vmatpush1.msra.mxu0 %v5030
      %5034 = vmatprep.subr.mxu0 0.0
      %5035 = vmatpush1.msra.mxu0 0.0
      %5036 = vmatprep.subr.mxu0 0.0
      %5037 = vmatpush1.msra.mxu0 0.0
      %5038 = vmatprep.subr.mxu0 0.0
      %5039 = vmatpush1.msra.mxu0 0.0
      %5040 = vmatprep.subr.mxu0 0.0
      %5041 = vmatpush1.msra.mxu0 0.0
      %5042 = vmatprep.subr.mxu0 0.0
      %5043 = vmatpush1.msra.mxu0 0.0
      %5044 = vmatprep.subr.mxu0 0.0
      %5045 = vmatpush1.msra.mxu0 0.0
      %5046 = vmatprep.subr.mxu0 0.0
      %5047 = vmatpush1.msra.mxu0 0.0
      %5048 = vmatprep.subr.mxu0 0.0
      %5049 = vmatpush1.msra.mxu0 0.0
      %5050 = vmatprep.subr.mxu0 0.0
      %5051 = vmatpush1.msra.mxu0 0.0
      %5052 = vmatprep.subr.mxu0 0.0
      %5053 = vmatpush1.msra.mxu0 0.0
      %5054 = vmatprep.subr.mxu0 0.0
      %5055 = vmatpush1.msra.mxu0 0.0
      %5056 = vmatprep.subr.mxu0 0.0
      %5057 = vmatpush1.msra.mxu0 0.0
      %5058 = vmatprep.subr.mxu0 0.0
      %5059 = vmatpush1.msra.mxu0 0.0
      %5060 = vmatprep.subr.mxu0 0.0
      %5061 = vmatpush1.msra.mxu0 0.0
      %5062 = vmatprep.subr.mxu0 0.0
      %5063 = vmatpush1.msra.mxu0 0.0
      %5064 = vmatprep.subr.mxu0 0.0
      %5065 = vmatpush1.msra.mxu0 0.0
      %5066 = vmatprep.subr.mxu0 0.0
      %5067 = vmatpush1.msra.mxu0 0.0
      %5068 = vmatprep.subr.mxu0 0.0
      %5069 = vmatpush1.msra.mxu0 0.0
      %5070 = vmatprep.subr.mxu0 0.0
      %5071 = vmatpush1.msra.mxu0 0.0
      %5072 = vmatprep.subr.mxu0 0.0
      %5073 = vmatpush1.msra.mxu0 0.0
      %5074 = vmatprep.subr.mxu0 0.0
      %5075 = vmatpush1.msra.mxu0 0.0
      %5076 = vmatprep.subr.mxu0 0.0
      %5077 = vmatpush1.msra.mxu0 0.0
      %5078 = vmatprep.subr.mxu0 0.0
      %5079 = vmatpush1.msra.mxu0 0.0
      %5080 = vmatprep.subr.mxu0 0.0
      %5081 = vmatpush1.msra.mxu0 0.0
      %5082 = vmatprep.subr.mxu0 0.0
      %5083 = vmatpush1.msra.mxu0 0.0
      %5084 = vmatprep.subr.mxu0 0.0
      %5085 = vmatpush1.msra.mxu0 0.0
      %5086 = vmatprep.subr.mxu0 0.0
      %5087 = vmatpush1.msra.mxu0 0.0
      %5088 = vmatprep.subr.mxu0 0.0
      %5089 = vmatpush1.msra.mxu0 0.0
      %5090 = vmatprep.subr.mxu0 0.0
      %5091 = vmatpush1.msra.mxu0 0.0
      %5092 = vmatprep.subr.mxu0 0.0
      %5093 = vmatpush1.msra.mxu0 0.0
      %5094 = vmatprep.subr.mxu0 0.0
      %5095 = vmatpush1.msra.mxu0 0.0
      %5096 = vmatprep.mubr.f32.mxu0 0.0
      %5097 = vmatmul.mubr.f32.gmra.mrb[0].mxu0 %v5028
      %v5098 = vpop.f32.mrb[0].mxu0
      %v5099 = vadd.f32 0.0, %v5098
      %v5100 = vpop.f32.mrb[0].mxu0
      %5101 = vdwg.mxu0
      %v5102 = vld [vmem:[%s18] sm:$0x1]
      %v5104 = vlaneseq
      %v5105 = vshrl.u32 %v5104, 7
      %v5106 = vsub.s32 0, %v5105
      %v5107 = vrot.slane %v5102, %v5106
      %v5109 = vmul.f32 %v5099, %v5107
      %vm5110 = vcmask 257024
      %v5111 = vsel %vm5110, %v5109, 0.0
      %5112 = vadd.xlane.f32.xlu0 %v5111
      %v5113 = vpop.xlane.xlu0 %5112
      %v5114 = vld [vmem:[#allocation2] sm:$0x1]
      %v5116 = vlaneseq
      %v5117 = vshrl.u32 %v5116, 7
      %v5118 = vsub.s32 0, %v5117
      %v5119 = vrot.slane %v5114, %v5118
      %v5121 = vadd.f32 %v5113, %v5119
      %vm5122 = vcmask 3072
      %5123 = vst.msk [vmem:[%s629] sm:$0xf] %vm5122, %v5121
      %p5124 = scmp.lt.s32.totalorder %s33, 1
      %s5125 = scalar_select %p5124, %s33, 1
      %s5126 = smul.addr %s5125, 4
      %s5127 = scalar_lea.vmem %s20, %s5126
      // Predicated region
      $region101: #{alpha_portfolio_forward.1} parent=99 // pred_check
        %p5128 = pneg %p476
      $region102: #{alpha_portfolio_forward.1} parent=99 // pred_check_branch
        %5130 = sbr.rel (%p5128) target = $region104
      $region103: #{alpha_portfolio_forward.1} parent=99 // pred_region
        _
      $region104: #{alpha_portfolio_forward.1} parent=99 // pred_fallthru
        _
    $region100: #{alpha_portfolio_forward.1} parent=5 // pred_fallthru
      _
    %p5131 = scmp.le.s32.totalorder 2, %s28
    // Predicated region
    $region105: #{alpha_portfolio_forward.1} parent=5 // pred_check
      %p5132 = pneg %p5131
    $region106: #{alpha_portfolio_forward.1} parent=5 // pred_check_branch
      %5134 = sbr.rel (%p5132) target = $region108
    $region107: #{alpha_portfolio_forward.1} parent=5 // pred_region
      %s5135 = ssub.s32 %s28, 2
      // Predicated region
      $region109: #{alpha_portfolio_forward.1} parent=107 // pred_check
        %p5136 = pneg %p482
      $region110: #{alpha_portfolio_forward.1} parent=107 // pred_check_branch
        %5138 = sbr.rel (%p5136) target = $region112
      $region111: #{alpha_portfolio_forward.1} parent=107 // pred_region
        %p5139 = scmp.lt.s32.totalorder %s34, 1
        %s5140 = scalar_select %p5139, %s34, 1
        %s5141 = smul.addr %s5140, 4
        %s5142 = scalar_lea.vmem %s20, %s5141
      $region112: #{alpha_portfolio_forward.1} parent=107 // pred_fallthru
        _
    $region108: #{alpha_portfolio_forward.1} parent=5 // pred_fallthru
      _
  $region6: #{alpha_portfolio_forward.1} parent=0 // loop_footer
    %s32 = sadd.s32 1, %s28
  $region7: #{alpha_portfolio_forward.1} parent=0 // loop_footer_branch
    %27 = sbr.rel target = $region3
  $region8: #{alpha_portfolio_forward.1} parent=0 // loop_exit
    _

</llo_original>
